<compile_context>
chip_gen: v7x
topology: tpu7x:2x2x1
jax: 0.10.0
libtpu: 0.0.40
codegen_flags: <defaults>
</compile_context>

<pallas_src>
import jax
import jax.numpy as jnp
from jax.experimental import pallas as pl
from jax.experimental.pallas import tpu as pltpu

# ---- model hyper-parameters (consistent with the module __init__) ----
DINO_DIM    = 1024    # DINOv2-L feature dim (fixed by nn.Linear(1024, fc_units))
FC_UNITS    = 128     # fc_units   (Optuna-tuned in the original; fixed here)
FC_UNITS_2  = 64      # fc_units_2
NUM_CLASSES = 3
OUT_PAD     = 128     # lane-dense padded logits width (zeros beyond NUM_CLASSES)
LN_EPS      = 1e-5    # PyTorch nn.LayerNorm default eps
assert FC_UNITS == OUT_PAD  # lets b1/gamma/beta/b3_padded pack into one (4,128) operand


# ----------------------------- Pallas kernel --------------------------------
# Fused per batch tile:
#   [stand-in backbone]  feats = x_flat @ W_embed + b_embed           (bf16 in, f32 acc)
#   Linear(1024, 128) -> LayerNorm(128) -> Linear(128, 64) -> ReLU -> Linear(64, 3)
#   (3 padded to 128 lanes, stored as bf16; wrapper slices/casts)
def fused_head_kernel(x_ref, we_ref, be_ref, w1_ref, cst_ref, w2_ref, b2_ref, w3_ref,
                      o_ref):
    # Stand-in backbone projection on the MXU (bf16 inputs, f32 accumulation).
    feats = jnp.dot(x_ref[...].astype(jnp.bfloat16), we_ref[...],
                    preferred_element_type=jnp.float32) + be_ref[...]      # (TB, 1024) f32

    cst = cst_ref[...]                       # (4, 128): [b1; gamma; beta; b3_padded]

    # Linear(1024, 128): bf16 inputs, f32 accumulation.
    h1 = jnp.dot(feats.astype(jnp.bfloat16), w1_ref[...],
                 preferred_element_type=jnp.float32) + cst[0:1, :]         # (TB, 128) f32

    # LayerNorm over last dim (biased variance, like torch.nn.LayerNorm) — f32 math.
    mu  = jnp.mean(h1, axis=-1, keepdims=True)
    var = jnp.mean(jnp.square(h1 - mu), axis=-1, keepdims=True)
    h1  = (h1 - mu) * jax.lax.rsqrt(var + LN_EPS)
    h1  = h1 * cst[1:2, :] + cst[2:3, :]

    # Linear(128, 64) + ReLU (f32: tiny GEMM, and v5e VPU has no bf16 elementwise).
    h2 = jnp.dot(h1, w2_ref[...], preferred_element_type=jnp.float32) + b2_ref[...]
    h2 = jnp.maximum(h2, 0.0)

    # Linear(64, 3) padded to 128 output columns (cols >= 3 are zero) -> dense vst.
    logits = jnp.dot(h2, w3_ref[...], preferred_element_type=jnp.float32) + cst[3:4, :]
    o_ref[...] = logits.astype(o_ref.dtype)   # bf16 lane-dense writeback


def _round_up(n, m):
    return ((n + m - 1) // m) * m


# ------------------------------- wrapper -------------------------------------
def custom_dino_norm_forward(x_nchw, params, tile_b=512):
    """x_nchw: (B, C, H, W) float32 -> logits (B, NUM_CLASSES) float32."""
    B = x_nchw.shape[0]
    x_flat = x_nchw.reshape(B, -1)            # contiguous collapse, no HBM copy
    flat_dim = x_flat.shape[1]

    # Batch tile: multiple of 16 (bf16 sublane packing of the output block).  For big
    # batches cap at ceil(B/2) so the "parallel" grid has >=2 steps (v7x megacore);
    # no jnp.pad and no wrapper-side activation cast -> no extra HBM passes.
    if B >= 32:
        tile = min(tile_b, _round_up(pl.cdiv(B, 2), 16))
    else:
        tile = _round_up(max(B, 1), 16)
    tile = max(16, min(tile, tile_b))
    grid = pl.cdiv(B, tile)

    # One-time weight prep (tiny tensors): bf16 weights for the two big GEMMs; final
    # linear zero-padded to 128 output columns; the four (1,128) vectors packed into
    # one (4,128) operand to trim per-step bookkeeping.
    # NOTE: w_embed (flat_dim x 1024 bf16) must fit resident in VMEM — true for the
    # small stand-in spatial sizes used here.
    we_bf = params["w_embed"].astype(jnp.bfloat16)
    w1_bf = params["w1"].astype(jnp.bfloat16)
    be_2d = params["b_embed"].reshape(1, DINO_DIM)
    w3_p = jnp.zeros((FC_UNITS_2, OUT_PAD), jnp.float32).at[:, :NUM_CLASSES].set(params["w3"])
    b3_p = jnp.zeros((1, OUT_PAD), jnp.float32).at[:, :NUM_CLASSES].set(params["b3"])
    consts = jnp.concatenate(
        [params["b1"], params["gamma"], params["beta"], b3_p], axis=0)      # (4, 128)

    out = pl.pallas_call(
        fused_head_kernel,
        out_shape=jax.ShapeDtypeStruct((B, OUT_PAD), jnp.bfloat16),
        grid=(grid,),
        in_specs=[
            pl.BlockSpec((tile, flat_dim),        lambda i: (i, 0)),  # image rows (streamed)
            pl.BlockSpec((flat_dim, DINO_DIM),    lambda i: (0, 0)),  # W_embed (resident bf16)
            pl.BlockSpec((1, DINO_DIM),           lambda i: (0, 0)),  # b_embed
            pl.BlockSpec((DINO_DIM, FC_UNITS),    lambda i: (0, 0)),  # W1 (resident bf16)
            pl.BlockSpec((4, FC_UNITS),           lambda i: (0, 0)),  # [b1; gamma; beta; b3]
            pl.BlockSpec((FC_UNITS, FC_UNITS_2),  lambda i: (0, 0)),  # W2
            pl.BlockSpec((1, FC_UNITS_2),         lambda i: (0, 0)),  # b2
            pl.BlockSpec((FC_UNITS_2, OUT_PAD),   lambda i: (0, 0)),  # W3 (padded to 128)
        ],
        out_specs=pl.BlockSpec((tile, OUT_PAD), lambda i: (i, 0)),
        # batch axis is independent -> shards across the two TensorCores on v7x
        compiler_params=pltpu.CompilerParams(dimension_semantics=("parallel",)),
    )(x_flat, we_bf, be_2d, w1_bf, consts, params["w2"], params["b2"], w3_p)

    return out[:, :NUM_CLASSES].astype(jnp.float32)


# ------------------------------- parameters ----------------------------------
# TODO(synk): the real DINOv2-L ViT backbone (patch embed + 24 transformer blocks) has
# no clean single-kernel Pallas equivalent; it is replaced by a deterministic linear
# projection to 1024-d features, which is fused into the head kernel above.
def init_params(key, in_flat_dim):
    ks = jax.random.split(key, 8)

    def lin(k, fan_in, fan_out):
        return jax.random.normal(k, (fan_in, fan_out), jnp.float32) * (1.0 / jnp.sqrt(fan_in))

    return {
        # stand-in backbone embed
        "w_embed": lin(ks[0], in_flat_dim, DINO_DIM),
        "b_embed": jnp.zeros((DINO_DIM,), jnp.float32),
        # classifier head
        "w1":    lin(ks[1], DINO_DIM, FC_UNITS),
        "b1":    jax.random.normal(ks[2], (1, FC_UNITS), jnp.float32) * 0.01,
        "gamma": jnp.ones((1, FC_UNITS), jnp.float32),
        "beta":  jnp.zeros((1, FC_UNITS), jnp.float32),
        "w2":    lin(ks[3], FC_UNITS, FC_UNITS_2),
        "b2":    jax.random.normal(ks[4], (1, FC_UNITS_2), jnp.float32) * 0.01,
        "w3":    lin(ks[5], FC_UNITS_2, NUM_CLASSES),
        "b3":    jax.random.normal(ks[6], (1, NUM_CLASSES), jnp.float32) * 0.01,
    }


def custom_dino_norm_model(x_nchw, params):
    return custom_dino_norm_forward(x_nchw, params)


# ----------------------------------- main ------------------------------------
if __name__ == "__main__":
    key = jax.random.PRNGKey(0)
    k_x, k_p = jax.random.split(key)

    B, C, H, W = 2, 3, 16, 16
    x = jax.random.normal(k_x, (B, C, H, W), jnp.float32)             # NCHW image input
    params = init_params(k_p, C * H * W)

    logits = custom_dino_norm_model(x, params)
    logits = jax.block_until_ready(logits)
    assert logits.shape == (B, NUM_CLASSES)

    # --- matched-precision reference: bf16 inputs on the two big GEMMs with f32
    #     accumulation, f32 LayerNorm/ReLU/small GEMMs, bf16 final cast (same as kernel)
    x_flat = x.reshape(B, -1)
    feats = jnp.dot(x_flat.astype(jnp.bfloat16),
                    params["w_embed"].astype(jnp.bfloat16),
                    preferred_element_type=jnp.float32) + params["b_embed"].reshape(1, -1)
    h1 = jnp.dot(feats.astype(jnp.bfloat16), params["w1"].astype(jnp.bfloat16),
                 preferred_element_type=jnp.float32) + params["b1"]
    mu = h1.mean(-1, keepdims=True)
    var = ((h1 - mu) ** 2).mean(-1, keepdims=True)
    h1 = (h1 - mu) / jnp.sqrt(var + LN_EPS) * params["gamma"] + params["beta"]
    h2 = jnp.maximum(h1 @ params["w2"] + params["b2"], 0.0)
    ref = (h2 @ params["w3"] + params["b3"]).astype(jnp.bfloat16).astype(jnp.float32)
    assert jnp.allclose(logits, ref, atol=3e-2, rtol=3e-2), (
        jnp.max(jnp.abs(logits - ref)))

    # --- loose sanity check vs pure-f32 (PyTorch) semantics (bf16 drift only) ---
    featsf = x_flat @ params["w_embed"] + params["b_embed"].reshape(1, -1)
    h1f = featsf @ params["w1"] + params["b1"]
    muf = h1f.mean(-1, keepdims=True)
    varf = ((h1f - muf) ** 2).mean(-1, keepdims=True)
    h1f = (h1f - muf) / jnp.sqrt(varf + LN_EPS) * params["gamma"] + params["beta"]
    h2f = jnp.maximum(h1f @ params["w2"] + params["b2"], 0.0)
    ref_f32 = h2f @ params["w3"] + params["b3"]
    assert jnp.allclose(logits, ref_f32, atol=1e-1, rtol=1e-1), (
        jnp.max(jnp.abs(logits - ref_f32)))

    print("KERNEL_OK")
</pallas_src>

<mosaic_0001>
module attributes {stable_mosaic.version = 11 : i64} {
  func.func @fused_head_kernel(%arg0: i32, %arg1: memref<16x768xf32, #tpu.memory_space<vmem>>, %arg2: memref<768x1024xbf16, #tpu.memory_space<vmem>>, %arg3: memref<1x1024xf32, #tpu.memory_space<vmem>>, %arg4: memref<1024x128xbf16, #tpu.memory_space<vmem>>, %arg5: memref<4x128xf32, #tpu.memory_space<vmem>>, %arg6: memref<128x64xf32, #tpu.memory_space<vmem>>, %arg7: memref<1x64xf32, #tpu.memory_space<vmem>>, %arg8: memref<64x128xf32, #tpu.memory_space<vmem>>, %arg9: memref<16x128xbf16, #tpu.memory_space<vmem>>) attributes {dimension_semantics = [#tpu.dimension_semantics<parallel>], iteration_bounds = array<i64: 1>, scalar_prefetch = 0 : i64, scratch_operands = 0 : i64, tpu.core_type = #tpu.core_type<tc>, window_params = [{transform_indices = @transform_0, window_bounds = array<i64: 16, 768>}, {pipeline_mode = #tpu.pipeline_mode<synchronous>, transform_indices = @transform_1, window_bounds = array<i64: 768, 1024>}, {pipeline_mode = #tpu.pipeline_mode<synchronous>, transform_indices = @transform_2, window_bounds = array<i64: 1, 1024>}, {pipeline_mode = #tpu.pipeline_mode<synchronous>, transform_indices = @transform_3, window_bounds = array<i64: 1024, 128>}, {pipeline_mode = #tpu.pipeline_mode<synchronous>, transform_indices = @transform_4, window_bounds = array<i64: 4, 128>}, {pipeline_mode = #tpu.pipeline_mode<synchronous>, transform_indices = @transform_5, window_bounds = array<i64: 128, 64>}, {pipeline_mode = #tpu.pipeline_mode<synchronous>, transform_indices = @transform_6, window_bounds = array<i64: 1, 64>}, {pipeline_mode = #tpu.pipeline_mode<synchronous>, transform_indices = @transform_7, window_bounds = array<i64: 64, 128>}, {transform_indices = @transform_8, window_bounds = array<i64: 16, 128>}]} {
    %c0 = arith.constant 0 : index
    %c0_0 = arith.constant 0 : index
    %0 = vector.load %arg1[%c0, %c0_0] : memref<16x768xf32, #tpu.memory_space<vmem>>, vector<16x768xf32>
    %1 = arith.truncf %0 : vector<16x768xf32> to vector<16x768xbf16>
    %c0_1 = arith.constant 0 : index
    %c0_2 = arith.constant 0 : index
    %2 = vector.load %arg2[%c0_1, %c0_2] : memref<768x1024xbf16, #tpu.memory_space<vmem>>, vector<768x1024xbf16>
    %cst = arith.constant dense<0.000000e+00> : vector<16x1024xf32>
    %3 = tpu.matmul %1, %2, %cst {dimension_numbers = #tpu.dot_dimension_numbers<[1], [0], [0], [1], [0, 0, 1, 1], [], []>} : vector<16x768xbf16>, vector<768x1024xbf16>, vector<16x1024xf32> -> vector<16x1024xf32>
    %c0_3 = arith.constant 0 : index
    %c0_4 = arith.constant 0 : index
    %4 = vector.load %arg3[%c0_3, %c0_4] : memref<1x1024xf32, #tpu.memory_space<vmem>>, vector<1x1024xf32>
    %5 = vector.broadcast %4 : vector<1x1024xf32> to vector<16x1024xf32>
    %6 = arith.addf %3, %5 : vector<16x1024xf32>
    %c0_5 = arith.constant 0 : index
    %c0_6 = arith.constant 0 : index
    %7 = vector.load %arg5[%c0_5, %c0_6] : memref<4x128xf32, #tpu.memory_space<vmem>>, vector<4x128xf32>
    %8 = arith.truncf %6 : vector<16x1024xf32> to vector<16x1024xbf16>
    %c0_7 = arith.constant 0 : index
    %c0_8 = arith.constant 0 : index
    %9 = vector.load %arg4[%c0_7, %c0_8] : memref<1024x128xbf16, #tpu.memory_space<vmem>>, vector<1024x128xbf16>
    %cst_9 = arith.constant dense<0.000000e+00> : vector<16x128xf32>
    %10 = tpu.matmul %8, %9, %cst_9 {dimension_numbers = #tpu.dot_dimension_numbers<[1], [0], [0], [1], [0, 0, 1, 1], [], []>} : vector<16x1024xbf16>, vector<1024x128xbf16>, vector<16x128xf32> -> vector<16x128xf32>
    %11 = vector.extract_strided_slice %7 {offsets = [0, 0], sizes = [1, 128], strides = [1, 1]} : vector<4x128xf32> to vector<1x128xf32>
    %12 = vector.broadcast %11 : vector<1x128xf32> to vector<16x128xf32>
    %13 = arith.addf %10, %12 : vector<16x128xf32>
    %cst_10 = arith.constant dense<0.000000e+00> : vector<16xf32>
    %14 = vector.multi_reduction <add>, %13, %cst_10 [1] : vector<16x128xf32> to vector<16xf32>
    %15 = vector.shape_cast %14 : vector<16xf32> to vector<16x1xf32>
    %cst_11 = arith.constant 1.280000e+02 : f32
    %16 = vector.broadcast %cst_11 : f32 to vector<16x1xf32>
    %17 = arith.divf %15, %16 : vector<16x1xf32>
    %18 = vector.broadcast %17 : vector<16x1xf32> to vector<16x128xf32>
    %19 = arith.subf %13, %18 : vector<16x128xf32>
    %20 = arith.mulf %19, %19 : vector<16x128xf32>
    %cst_12 = arith.constant dense<0.000000e+00> : vector<16xf32>
    %21 = vector.multi_reduction <add>, %20, %cst_12 [1] : vector<16x128xf32> to vector<16xf32>
    %22 = vector.shape_cast %21 : vector<16xf32> to vector<16x1xf32>
    %cst_13 = arith.constant 1.280000e+02 : f32
    %23 = vector.broadcast %cst_13 : f32 to vector<16x1xf32>
    %24 = arith.divf %22, %23 : vector<16x1xf32>
    %25 = vector.broadcast %17 : vector<16x1xf32> to vector<16x128xf32>
    %26 = arith.subf %13, %25 : vector<16x128xf32>
    %cst_14 = arith.constant 9.99999974E-6 : f32
    %27 = vector.broadcast %cst_14 : f32 to vector<16x1xf32>
    %28 = arith.addf %24, %27 : vector<16x1xf32>
    %29 = math.rsqrt %28 : vector<16x1xf32>
    %30 = vector.broadcast %29 : vector<16x1xf32> to vector<16x128xf32>
    %31 = arith.mulf %26, %30 : vector<16x128xf32>
    %32 = vector.extract_strided_slice %7 {offsets = [1, 0], sizes = [1, 128], strides = [1, 1]} : vector<4x128xf32> to vector<1x128xf32>
    %33 = vector.broadcast %32 : vector<1x128xf32> to vector<16x128xf32>
    %34 = arith.mulf %31, %33 : vector<16x128xf32>
    %35 = vector.extract_strided_slice %7 {offsets = [2, 0], sizes = [1, 128], strides = [1, 1]} : vector<4x128xf32> to vector<1x128xf32>
    %36 = vector.broadcast %35 : vector<1x128xf32> to vector<16x128xf32>
    %37 = arith.addf %34, %36 : vector<16x128xf32>
    %c0_15 = arith.constant 0 : index
    %c0_16 = arith.constant 0 : index
    %38 = vector.load %arg6[%c0_15, %c0_16] : memref<128x64xf32, #tpu.memory_space<vmem>>, vector<128x64xf32>
    %cst_17 = arith.constant dense<0.000000e+00> : vector<16x64xf32>
    %39 = tpu.matmul %37, %38, %cst_17 {dimension_numbers = #tpu.dot_dimension_numbers<[1], [0], [0], [1], [0, 0, 1, 1], [], []>} : vector<16x128xf32>, vector<128x64xf32>, vector<16x64xf32> -> vector<16x64xf32>
    %c0_18 = arith.constant 0 : index
    %c0_19 = arith.constant 0 : index
    %40 = vector.load %arg7[%c0_18, %c0_19] : memref<1x64xf32, #tpu.memory_space<vmem>>, vector<1x64xf32>
    %41 = vector.broadcast %40 : vector<1x64xf32> to vector<16x64xf32>
    %42 = arith.addf %39, %41 : vector<16x64xf32>
    %cst_20 = arith.constant 0.000000e+00 : f32
    %43 = vector.broadcast %cst_20 : f32 to vector<16x64xf32>
    %44 = arith.maximumf %42, %43 : vector<16x64xf32>
    %c0_21 = arith.constant 0 : index
    %c0_22 = arith.constant 0 : index
    %45 = vector.load %arg8[%c0_21, %c0_22] : memref<64x128xf32, #tpu.memory_space<vmem>>, vector<64x128xf32>
    %cst_23 = arith.constant dense<0.000000e+00> : vector<16x128xf32>
    %46 = tpu.matmul %44, %45, %cst_23 {dimension_numbers = #tpu.dot_dimension_numbers<[1], [0], [0], [1], [0, 0, 1, 1], [], []>} : vector<16x64xf32>, vector<64x128xf32>, vector<16x128xf32> -> vector<16x128xf32>
    %47 = vector.extract_strided_slice %7 {offsets = [3, 0], sizes = [1, 128], strides = [1, 1]} : vector<4x128xf32> to vector<1x128xf32>
    %48 = vector.broadcast %47 : vector<1x128xf32> to vector<16x128xf32>
    %49 = arith.addf %46, %48 : vector<16x128xf32>
    %50 = arith.truncf %49 : vector<16x128xf32> to vector<16x128xbf16>
    %c0_24 = arith.constant 0 : index
    %c0_25 = arith.constant 0 : index
    %51 = vector.load %arg9[%c0_24, %c0_25] : memref<16x128xbf16, #tpu.memory_space<vmem>>, vector<16x128xbf16>
    tpu.vector_store %arg9[%c0_24, %c0_25], %50 {strides = array<i32>} : memref<16x128xbf16, #tpu.memory_space<vmem>>, vector<16x128xbf16>,
    return
  }
  func.func @transform_0(%arg0: i32) -> (i32, i32) {
    %c0_i32 = arith.constant 0 : i32
    %c0_i32_0 = arith.constant 0 : i32
    return %arg0, %c0_i32 : i32, i32
  }
  func.func @transform_1(%arg0: i32) -> (i32, i32) {
    %c0_i32 = arith.constant 0 : i32
    %c0_i32_0 = arith.constant 0 : i32
    %c0_i32_1 = arith.constant 0 : i32
    return %c0_i32, %c0_i32_0 : i32, i32
  }
  func.func @transform_2(%arg0: i32) -> (i32, i32) {
    %c0_i32 = arith.constant 0 : i32
    %c0_i32_0 = arith.constant 0 : i32
    %c0_i32_1 = arith.constant 0 : i32
    return %c0_i32, %c0_i32_0 : i32, i32
  }
  func.func @transform_3(%arg0: i32) -> (i32, i32) {
    %c0_i32 = arith.constant 0 : i32
    %c0_i32_0 = arith.constant 0 : i32
    %c0_i32_1 = arith.constant 0 : i32
    return %c0_i32, %c0_i32_0 : i32, i32
  }
  func.func @transform_4(%arg0: i32) -> (i32, i32) {
    %c0_i32 = arith.constant 0 : i32
    %c0_i32_0 = arith.constant 0 : i32
    %c0_i32_1 = arith.constant 0 : i32
    return %c0_i32, %c0_i32_0 : i32, i32
  }
  func.func @transform_5(%arg0: i32) -> (i32, i32) {
    %c0_i32 = arith.constant 0 : i32
    %c0_i32_0 = arith.constant 0 : i32
    %c0_i32_1 = arith.constant 0 : i32
    return %c0_i32, %c0_i32_0 : i32, i32
  }
  func.func @transform_6(%arg0: i32) -> (i32, i32) {
    %c0_i32 = arith.constant 0 : i32
    %c0_i32_0 = arith.constant 0 : i32
    %c0_i32_1 = arith.constant 0 : i32
    return %c0_i32, %c0_i32_0 : i32, i32
  }
  func.func @transform_7(%arg0: i32) -> (i32, i32) {
    %c0_i32 = arith.constant 0 : i32
    %c0_i32_0 = arith.constant 0 : i32
    %c0_i32_1 = arith.constant 0 : i32
    return %c0_i32, %c0_i32_0 : i32, i32
  }
  func.func @transform_8(%arg0: i32) -> (i32, i32) {
    %c0_i32 = arith.constant 0 : i32
    %c0_i32_0 = arith.constant 0 : i32
    return %arg0, %c0_i32 : i32, i32
  }
}

</mosaic_0001>

<llo_original>
// kernel: tpu_custom_call.1
$region0: #{tpu_custom_call.1}
  #allocation0 [shape = 'u32[]', space=smem, size = 0x4, offset = 0x4, fixed_abs, tag = 'smem constant byte address 0x4 - core index']
  #allocation1 [shape = 'u32[144,128]{1,0:T(1,128)}', space=vmem, size = 0x12000, scoped, tag = 'internal scratch']
  %s0 = inlined_call_operand.hbm [shape: f32[2,768], index: 0, kind: input, shape index: {}]
  %s1 = inlined_call_operand.hbm [shape: bf16[768,1024], index: 1, kind: input, shape index: {}]
  %s2 = inlined_call_operand.hbm [shape: f32[1,1024], index: 2, kind: input, shape index: {}]
  %s3 = inlined_call_operand.hbm [shape: bf16[1024,128], index: 3, kind: input, shape index: {}]
  %s4 = inlined_call_operand.hbm [shape: f32[4,128], index: 4, kind: input, shape index: {}]
  %s5 = inlined_call_operand.vmem [shape: f32[128,64], index: 5, kind: input, shape index: {}]
  %s6 = inlined_call_operand.hbm [shape: f32[1,64], index: 6, kind: input, shape index: {}]
  %s7 = inlined_call_operand.hbm [shape: f32[64,128], index: 7, kind: input, shape index: {}]
  %s8 = inlined_call_operand.hbm [shape: bf16[2,128], index: 8, kind: output, shape index: {}]
  %s9 = sld [smem:[#allocation0]]
  $region70: #{tpu_custom_call.1} parent=0
    _
  %s11 = ssub.s32 1, %s9
  %s12 = scalar_select 0, %s11, %s9
  $region1: #{tpu_custom_call.1} parent=0
    #allocation2 [shape = 'u8[49152]{0}', space=vmem, size = 0xc000, scoped, tag = 'input window, operand 0, single buffered']
    #allocation3 [shape = 's32[1]{0}', space=sflag, size = 0x4, scoped, tag = 'scoped memory for tpu_custom_call.1']
    #allocation4 [shape = 's32[1]{0}', space=sflag, size = 0x4, scoped, tag = 'scoped memory for tpu_custom_call.1']
    #allocation5 [shape = 'u8[1572864]{0}', space=vmem, size = 0x180000, scoped, tag = 'input window, operand 1, single buffered']
    #allocation6 [shape = 's32[1]{0}', space=sflag, size = 0x4, scoped, tag = 'scoped memory for tpu_custom_call.1']
    #allocation7 [shape = 'u8[4096]{0}', space=vmem, size = 0x1000, scoped, tag = 'input window, operand 2, single buffered']
    #allocation8 [shape = 'u8[262144]{0}', space=vmem, size = 0x40000, scoped, tag = 'input window, operand 3, single buffered']
    #allocation9 [shape = 's32[1]{0}', space=sflag, size = 0x4, scoped, tag = 'scoped memory for tpu_custom_call.1']
    #allocation10 [shape = 'u8[2048]{0}', space=vmem, size = 0x800, scoped, tag = 'input window, operand 4, single buffered']
    #allocation11 [shape = 'u8[512]{0}', space=vmem, size = 0x400, scoped, tag = 'input window, operand 6, single buffered']
    #allocation12 [shape = 's32[1]{0}', space=sflag, size = 0x4, scoped, tag = 'scoped memory for tpu_custom_call.1']
    #allocation13 [shape = 'u8[32768]{0}', space=vmem, size = 0x8000, scoped, tag = 'input window, operand 7, single buffered']
    #allocation14 [shape = 'u8[4096]{0}', space=vmem, size = 0x1000, scoped, tag = 'output window, operand 0, single buffered']
    %13 = vsyncpa [#allocation3], 0
    %14 = vsyncpa [#allocation6], 0
    %15 = vsyncpa [#allocation9], 0
    %16 = vsyncpa [#allocation12], 0
    %17 = vsyncpa [#allocation4], 0
    // Predicated region
    $region2: #{tpu_custom_call.1} parent=1 // pred_check
      _
    $region3: #{tpu_custom_call.1} parent=1 // pred_check_branch
      %19 = sbr.rel (0) target = $region5
    $region4: #{tpu_custom_call.1} parent=1 // pred_region
      %s21 = ssub.s32 1536, 192
      %22 = vsyncadd [#allocation3], %s21
      %s23 = sshll.u32 [#allocation2], 4
      %s24 = int_to_ptr.vmem [resolvable:$true] %s23
      %29 = dma.hbm_to_vmem [thread:$0]  %s0, 192, %s24, [#allocation3], 192, 192, 12
    $region5: #{tpu_custom_call.1} parent=1 // pred_fallthru
      _
    // Predicated region
    $region6: #{tpu_custom_call.1} parent=1 // pred_check
      _
    $region7: #{tpu_custom_call.1} parent=1 // pred_check_branch
      %31 = sbr.rel (0) target = $region9
    $region8: #{tpu_custom_call.1} parent=1 // pred_region
      %s33 = ssub.s32 49152, 49152
      %34 = vsyncadd [#allocation6], %s33
      %s35 = sshll.u32 [#allocation5], 4
      %s36 = int_to_ptr.vmem [resolvable:$true] %s35
      %41 = dma.hbm_to_vmem [thread:$0]  %s1, 49152, %s36, [#allocation6], 512, 512, 32
    $region9: #{tpu_custom_call.1} parent=1 // pred_fallthru
      _
    // Predicated region
    $region10: #{tpu_custom_call.1} parent=1 // pred_check
      _
    $region11: #{tpu_custom_call.1} parent=1 // pred_check_branch
      %43 = sbr.rel (0) target = $region13
    $region12: #{tpu_custom_call.1} parent=1 // pred_region
      %s45 = ssub.s32 128, 128
      %46 = vsyncadd [#allocation6], %s45
      %s48 = sshll.u32 [#allocation7], 4
      %s49 = int_to_ptr.vmem [resolvable:$true] %s48
      %51 = dma.hbm_to_vmem [thread:$0]  %s2, 128, %s49, [#allocation6]
    $region13: #{tpu_custom_call.1} parent=1 // pred_fallthru
      _
    // Predicated region
    $region14: #{tpu_custom_call.1} parent=1 // pred_check
      _
    $region15: #{tpu_custom_call.1} parent=1 // pred_check_branch
      %53 = sbr.rel (0) target = $region17
    $region16: #{tpu_custom_call.1} parent=1 // pred_region
      %s55 = ssub.s32 8192, 8192
      %56 = vsyncadd [#allocation9], %s55
      %s57 = sshll.u32 [#allocation8], 4
      %s58 = int_to_ptr.vmem [resolvable:$true] %s57
      %63 = dma.hbm_to_vmem [thread:$0]  %s3, 8192, %s58, [#allocation9], 64, 64, 4
    $region17: #{tpu_custom_call.1} parent=1 // pred_fallthru
      _
    // Predicated region
    $region18: #{tpu_custom_call.1} parent=1 // pred_check
      _
    $region19: #{tpu_custom_call.1} parent=1 // pred_check_branch
      %65 = sbr.rel (0) target = $region21
    $region20: #{tpu_custom_call.1} parent=1 // pred_region
      %s67 = ssub.s32 64, 64
      %68 = vsyncadd [#allocation9], %s67
      %s70 = sshll.u32 [#allocation10], 4
      %s71 = int_to_ptr.vmem [resolvable:$true] %s70
      %73 = dma.hbm_to_vmem [thread:$0]  %s4, 64, %s71, [#allocation9]
    $region21: #{tpu_custom_call.1} parent=1 // pred_fallthru
      _
    // Predicated region
    $region22: #{tpu_custom_call.1} parent=1 // pred_check
      _
    $region23: #{tpu_custom_call.1} parent=1 // pred_check_branch
      %75 = sbr.rel (0) target = $region25
    $region24: #{tpu_custom_call.1} parent=1 // pred_region
      _
    $region25: #{tpu_custom_call.1} parent=1 // pred_fallthru
      _
    // Predicated region
    $region26: #{tpu_custom_call.1} parent=1 // pred_check
      _
    $region27: #{tpu_custom_call.1} parent=1 // pred_check_branch
      %77 = sbr.rel (0) target = $region29
    $region28: #{tpu_custom_call.1} parent=1 // pred_region
      %s79 = ssub.s32 16, 16
      %80 = vsyncadd [#allocation12], %s79
      %s82 = sshll.u32 [#allocation11], 4
      %s83 = int_to_ptr.vmem [resolvable:$true] %s82
      %85 = dma.hbm_to_vmem [thread:$0]  %s6, 16, %s83, [#allocation12]
    $region29: #{tpu_custom_call.1} parent=1 // pred_fallthru
      _
    // Predicated region
    $region30: #{tpu_custom_call.1} parent=1 // pred_check
      _
    $region31: #{tpu_custom_call.1} parent=1 // pred_check_branch
      %87 = sbr.rel (0) target = $region33
    $region32: #{tpu_custom_call.1} parent=1 // pred_region
      %s89 = ssub.s32 1024, 1024
      %90 = vsyncadd [#allocation12], %s89
      %s91 = sshll.u32 [#allocation13], 4
      %s92 = int_to_ptr.vmem [resolvable:$true] %s91
      %97 = dma.hbm_to_vmem [thread:$0]  %s7, 1024, %s92, [#allocation12], 128, 128, 8
    $region33: #{tpu_custom_call.1} parent=1 // pred_fallthru
      _
    // Predicated region
    $region34: #{tpu_custom_call.1} parent=1 // pred_check
      _
    $region35: #{tpu_custom_call.1} parent=1 // pred_check_branch
      %99 = sbr.rel (0) target = $region37
    $region36: #{tpu_custom_call.1} parent=1 // pred_region
      %100 = dma.done [#allocation3], 1536
    $region37: #{tpu_custom_call.1} parent=1 // pred_fallthru
      _
    // Predicated region
    $region38: #{tpu_custom_call.1} parent=1 // pred_check
      _
    $region39: #{tpu_custom_call.1} parent=1 // pred_check_branch
      %102 = sbr.rel (0) target = $region41
    $region40: #{tpu_custom_call.1} parent=1 // pred_region
      %103 = dma.done [#allocation6], 49152
    $region41: #{tpu_custom_call.1} parent=1 // pred_fallthru
      _
    // Predicated region
    $region42: #{tpu_custom_call.1} parent=1 // pred_check
      _
    $region43: #{tpu_custom_call.1} parent=1 // pred_check_branch
      %105 = sbr.rel (0) target = $region45
    $region44: #{tpu_custom_call.1} parent=1 // pred_region
      %106 = dma.done [#allocation6], 128
    $region45: #{tpu_custom_call.1} parent=1 // pred_fallthru
      _
    // Predicated region
    $region46: #{tpu_custom_call.1} parent=1 // pred_check
      _
    $region47: #{tpu_custom_call.1} parent=1 // pred_check_branch
      %108 = sbr.rel (0) target = $region49
    $region48: #{tpu_custom_call.1} parent=1 // pred_region
      %109 = dma.done [#allocation9], 8192
    $region49: #{tpu_custom_call.1} parent=1 // pred_fallthru
      _
    // Predicated region
    $region50: #{tpu_custom_call.1} parent=1 // pred_check
      _
    $region51: #{tpu_custom_call.1} parent=1 // pred_check_branch
      %111 = sbr.rel (0) target = $region53
    $region52: #{tpu_custom_call.1} parent=1 // pred_region
      %112 = dma.done [#allocation9], 64
    $region53: #{tpu_custom_call.1} parent=1 // pred_fallthru
      _
    // Predicated region
    $region54: #{tpu_custom_call.1} parent=1 // pred_check
      _
    $region55: #{tpu_custom_call.1} parent=1 // pred_check_branch
      %114 = sbr.rel (0) target = $region57
    $region56: #{tpu_custom_call.1} parent=1 // pred_region
      %115 = dma.done [#allocation12], 16
    $region57: #{tpu_custom_call.1} parent=1 // pred_fallthru
      _
    // Predicated region
    $region58: #{tpu_custom_call.1} parent=1 // pred_check
      _
    $region59: #{tpu_custom_call.1} parent=1 // pred_check_branch
      %117 = sbr.rel (0) target = $region61
    $region60: #{tpu_custom_call.1} parent=1 // pred_region
      %118 = dma.done [#allocation12], 1024
    $region61: #{tpu_custom_call.1} parent=1 // pred_fallthru
      _
    %v120 = vld [vmem:[#allocation2] sm:$0xff]
    %v121 = vld [vmem:[#allocation2 + $0x8] sm:$0xf]
    %v122 = vld [vmem:[#allocation2 + $0xc] sm:$0xff]
    %v123 = vld [vmem:[#allocation2 + $0x14] sm:$0xf]
    %v124 = vld [vmem:[#allocation2 + $0x18] sm:$0xff]
    %v125 = vld [vmem:[#allocation2 + $0x20] sm:$0xf]
    %v126 = vld [vmem:[#allocation2 + $0x24] sm:$0xff]
    %v127 = vld [vmem:[#allocation2 + $0x2c] sm:$0xf]
    %v128 = vld [vmem:[#allocation2 + $0x30] sm:$0xff]
    %v129 = vld [vmem:[#allocation2 + $0x38] sm:$0xf]
    %v130 = vld [vmem:[#allocation2 + $0x3c] sm:$0xff]
    %v131 = vld [vmem:[#allocation2 + $0x44] sm:$0xf]
    %v132 = vld [vmem:[#allocation2 + $0x48] sm:$0xff]
    %v133 = vld [vmem:[#allocation2 + $0x50] sm:$0xf]
    %v134 = vld [vmem:[#allocation2 + $0x54] sm:$0xff]
    %v135 = vld [vmem:[#allocation2 + $0x5c] sm:$0xf]
    %v152 = vcombine.low %v120, %v122
    %v153 = vcombine.high %v120, %v122
    %v154 = vcombine.low %v124, %v126
    %v155 = vcombine.high %v124, %v126
    %v157 = vunpack.c.l.s4 1983009808
    %v158 = vunpack.c.0.s8 %v157
    %v159 = vlaneseq
    %v160 = vshrl.u32 %v159, 7
    %v161 = vsub.s32 %v158, %v160
    %v162 = vrot.slane %v152, %v161
    %v164 = vunpack.c.l.s4 1983009808
    %v165 = vunpack.c.0.s8 %v164
    %v166 = vlaneseq
    %v167 = vshrl.u32 %v166, 7
    %v168 = vsub.s32 %v165, %v167
    %v169 = vrot.slane %v153, %v168
    %v171 = vunpack.c.l.s4 1983009808
    %v172 = vunpack.c.0.s8 %v171
    %v173 = vlaneseq
    %v174 = vshrl.u32 %v173, 7
    %v175 = vsub.s32 %v172, %v174
    %v176 = vrot.slane %v154, %v175
    %v178 = vunpack.c.l.s4 1983009808
    %v179 = vunpack.c.0.s8 %v178
    %v180 = vlaneseq
    %v181 = vshrl.u32 %v180, 7
    %v182 = vsub.s32 %v179, %v181
    %v183 = vrot.slane %v155, %v182
    %v184 = vcombine.low %v162, %v176
    %v185 = vcombine.high %v162, %v176
    %v186 = vcombine.low %v169, %v183
    %v187 = vcombine.high %v169, %v183
    %v188 = vcombine.low %v121, %v123
    %v189 = vcombine.low %v125, %v127
    %v191 = vunpack.c.l.s4 1983009808
    %v192 = vunpack.c.0.s8 %v191
    %v193 = vlaneseq
    %v194 = vshrl.u32 %v193, 7
    %v195 = vsub.s32 %v192, %v194
    %v196 = vrot.slane %v188, %v195
    %v198 = vunpack.c.l.s4 1983009808
    %v199 = vunpack.c.0.s8 %v198
    %v200 = vlaneseq
    %v201 = vshrl.u32 %v200, 7
    %v202 = vsub.s32 %v199, %v201
    %v203 = vrot.slane %v189, %v202
    %v204 = vcombine.low %v196, %v203
    %v205 = vcombine.high %v196, %v203
    %v206 = vcombine.low %v128, %v130
    %v207 = vcombine.high %v128, %v130
    %v208 = vcombine.low %v132, %v134
    %v209 = vcombine.high %v132, %v134
    %v211 = vunpack.c.l.s4 1983009808
    %v212 = vunpack.c.0.s8 %v211
    %v213 = vlaneseq
    %v214 = vshrl.u32 %v213, 7
    %v215 = vsub.s32 %v212, %v214
    %v216 = vrot.slane %v206, %v215
    %v218 = vunpack.c.l.s4 1983009808
    %v219 = vunpack.c.0.s8 %v218
    %v220 = vlaneseq
    %v221 = vshrl.u32 %v220, 7
    %v222 = vsub.s32 %v219, %v221
    %v223 = vrot.slane %v207, %v222
    %v225 = vunpack.c.l.s4 1983009808
    %v226 = vunpack.c.0.s8 %v225
    %v227 = vlaneseq
    %v228 = vshrl.u32 %v227, 7
    %v229 = vsub.s32 %v226, %v228
    %v230 = vrot.slane %v208, %v229
    %v232 = vunpack.c.l.s4 1983009808
    %v233 = vunpack.c.0.s8 %v232
    %v234 = vlaneseq
    %v235 = vshrl.u32 %v234, 7
    %v236 = vsub.s32 %v233, %v235
    %v237 = vrot.slane %v209, %v236
    %v238 = vcombine.low %v216, %v230
    %v239 = vcombine.high %v216, %v230
    %v240 = vcombine.low %v223, %v237
    %v241 = vcombine.high %v223, %v237
    %v242 = vcombine.low %v129, %v131
    %v243 = vcombine.low %v133, %v135
    %v245 = vunpack.c.l.s4 1983009808
    %v246 = vunpack.c.0.s8 %v245
    %v247 = vlaneseq
    %v248 = vshrl.u32 %v247, 7
    %v249 = vsub.s32 %v246, %v248
    %v250 = vrot.slane %v242, %v249
    %v252 = vunpack.c.l.s4 1983009808
    %v253 = vunpack.c.0.s8 %v252
    %v254 = vlaneseq
    %v255 = vshrl.u32 %v254, 7
    %v256 = vsub.s32 %v253, %v255
    %v257 = vrot.slane %v243, %v256
    %v258 = vcombine.low %v250, %v257
    %v259 = vcombine.high %v250, %v257
    %v272 = vpack.c.bf16 %v238, %v184
    %v273 = vpack.c.bf16 %v239, %v185
    %v274 = vpack.c.bf16 %v240, %v186
    %v275 = vpack.c.bf16 %v241, %v187
    %v276 = vpack.c.bf16 %v258, %v204
    %v277 = vpack.c.bf16 %v259, %v205
    %v278 = vld [vmem:[#allocation5] sm:$0xff]
    %v279 = vld [vmem:[#allocation5 + $0x8] sm:$0xff]
    %v280 = vld [vmem:[#allocation5 + $0x10] sm:$0xff]
    %v281 = vld [vmem:[#allocation5 + $0x18] sm:$0xff]
    %v282 = vld [vmem:[#allocation5 + $0x20] sm:$0xff]
    %v283 = vld [vmem:[#allocation5 + $0x28] sm:$0xff]
    %v284 = vld [vmem:[#allocation5 + $0x30] sm:$0xff]
    %v285 = vld [vmem:[#allocation5 + $0x38] sm:$0xff]
    %v286 = vld [vmem:[#allocation5 + $0x40] sm:$0xff]
    %v287 = vld [vmem:[#allocation5 + $0x48] sm:$0xff]
    %v288 = vld [vmem:[#allocation5 + $0x50] sm:$0xff]
    %v289 = vld [vmem:[#allocation5 + $0x58] sm:$0xff]
    %v290 = vld [vmem:[#allocation5 + $0x60] sm:$0xff]
    %v291 = vld [vmem:[#allocation5 + $0x68] sm:$0xff]
    %v292 = vld [vmem:[#allocation5 + $0x70] sm:$0xff]
    %v293 = vld [vmem:[#allocation5 + $0x78] sm:$0xff]
    %v294 = vld [vmem:[#allocation5 + $0x80] sm:$0xff]
    %v295 = vld [vmem:[#allocation5 + $0x88] sm:$0xff]
    %v296 = vld [vmem:[#allocation5 + $0x90] sm:$0xff]
    %v297 = vld [vmem:[#allocation5 + $0x98] sm:$0xff]
    %v298 = vld [vmem:[#allocation5 + $0xa0] sm:$0xff]
    %v299 = vld [vmem:[#allocation5 + $0xa8] sm:$0xff]
    %v300 = vld [vmem:[#allocation5 + $0xb0] sm:$0xff]
    %v301 = vld [vmem:[#allocation5 + $0xb8] sm:$0xff]
    %v302 = vld [vmem:[#allocation5 + $0xc0] sm:$0xff]
    %v303 = vld [vmem:[#allocation5 + $0xc8] sm:$0xff]
    %v304 = vld [vmem:[#allocation5 + $0xd0] sm:$0xff]
    %v305 = vld [vmem:[#allocation5 + $0xd8] sm:$0xff]
    %v306 = vld [vmem:[#allocation5 + $0xe0] sm:$0xff]
    %v307 = vld [vmem:[#allocation5 + $0xe8] sm:$0xff]
    %v308 = vld [vmem:[#allocation5 + $0xf0] sm:$0xff]
    %v309 = vld [vmem:[#allocation5 + $0xf8] sm:$0xff]
    %v310 = vld [vmem:[#allocation5 + $0x100] sm:$0xff]
    %v311 = vld [vmem:[#allocation5 + $0x108] sm:$0xff]
    %v312 = vld [vmem:[#allocation5 + $0x110] sm:$0xff]
    %v313 = vld [vmem:[#allocation5 + $0x118] sm:$0xff]
    %v314 = vld [vmem:[#allocation5 + $0x120] sm:$0xff]
    %v315 = vld [vmem:[#allocation5 + $0x128] sm:$0xff]
    %v316 = vld [vmem:[#allocation5 + $0x130] sm:$0xff]
    %v317 = vld [vmem:[#allocation5 + $0x138] sm:$0xff]
    %v318 = vld [vmem:[#allocation5 + $0x140] sm:$0xff]
    %v319 = vld [vmem:[#allocation5 + $0x148] sm:$0xff]
    %v320 = vld [vmem:[#allocation5 + $0x150] sm:$0xff]
    %v321 = vld [vmem:[#allocation5 + $0x158] sm:$0xff]
    %v322 = vld [vmem:[#allocation5 + $0x160] sm:$0xff]
    %v323 = vld [vmem:[#allocation5 + $0x168] sm:$0xff]
    %v324 = vld [vmem:[#allocation5 + $0x170] sm:$0xff]
    %v325 = vld [vmem:[#allocation5 + $0x178] sm:$0xff]
    %v326 = vld [vmem:[#allocation5 + $0x180] sm:$0xff]
    %v327 = vld [vmem:[#allocation5 + $0x188] sm:$0xff]
    %v328 = vld [vmem:[#allocation5 + $0x190] sm:$0xff]
    %v329 = vld [vmem:[#allocation5 + $0x198] sm:$0xff]
    %v330 = vld [vmem:[#allocation5 + $0x1a0] sm:$0xff]
    %v331 = vld [vmem:[#allocation5 + $0x1a8] sm:$0xff]
    %v332 = vld [vmem:[#allocation5 + $0x1b0] sm:$0xff]
    %v333 = vld [vmem:[#allocation5 + $0x1b8] sm:$0xff]
    %v334 = vld [vmem:[#allocation5 + $0x1c0] sm:$0xff]
    %v335 = vld [vmem:[#allocation5 + $0x1c8] sm:$0xff]
    %v336 = vld [vmem:[#allocation5 + $0x1d0] sm:$0xff]
    %v337 = vld [vmem:[#allocation5 + $0x1d8] sm:$0xff]
    %v338 = vld [vmem:[#allocation5 + $0x1e0] sm:$0xff]
    %v339 = vld [vmem:[#allocation5 + $0x1e8] sm:$0xff]
    %v340 = vld [vmem:[#allocation5 + $0x1f0] sm:$0xff]
    %v341 = vld [vmem:[#allocation5 + $0x1f8] sm:$0xff]
    %v342 = vld [vmem:[#allocation5 + $0x200] sm:$0xff]
    %v343 = vld [vmem:[#allocation5 + $0x208] sm:$0xff]
    %v344 = vld [vmem:[#allocation5 + $0x210] sm:$0xff]
    %v345 = vld [vmem:[#allocation5 + $0x218] sm:$0xff]
    %v346 = vld [vmem:[#allocation5 + $0x220] sm:$0xff]
    %v347 = vld [vmem:[#allocation5 + $0x228] sm:$0xff]
    %v348 = vld [vmem:[#allocation5 + $0x230] sm:$0xff]
    %v349 = vld [vmem:[#allocation5 + $0x238] sm:$0xff]
    %v350 = vld [vmem:[#allocation5 + $0x240] sm:$0xff]
    %v351 = vld [vmem:[#allocation5 + $0x248] sm:$0xff]
    %v352 = vld [vmem:[#allocation5 + $0x250] sm:$0xff]
    %v353 = vld [vmem:[#allocation5 + $0x258] sm:$0xff]
    %v354 = vld [vmem:[#allocation5 + $0x260] sm:$0xff]
    %v355 = vld [vmem:[#allocation5 + $0x268] sm:$0xff]
    %v356 = vld [vmem:[#allocation5 + $0x270] sm:$0xff]
    %v357 = vld [vmem:[#allocation5 + $0x278] sm:$0xff]
    %v358 = vld [vmem:[#allocation5 + $0x280] sm:$0xff]
    %v359 = vld [vmem:[#allocation5 + $0x288] sm:$0xff]
    %v360 = vld [vmem:[#allocation5 + $0x290] sm:$0xff]
    %v361 = vld [vmem:[#allocation5 + $0x298] sm:$0xff]
    %v362 = vld [vmem:[#allocation5 + $0x2a0] sm:$0xff]
    %v363 = vld [vmem:[#allocation5 + $0x2a8] sm:$0xff]
    %v364 = vld [vmem:[#allocation5 + $0x2b0] sm:$0xff]
    %v365 = vld [vmem:[#allocation5 + $0x2b8] sm:$0xff]
    %v366 = vld [vmem:[#allocation5 + $0x2c0] sm:$0xff]
    %v367 = vld [vmem:[#allocation5 + $0x2c8] sm:$0xff]
    %v368 = vld [vmem:[#allocation5 + $0x2d0] sm:$0xff]
    %v369 = vld [vmem:[#allocation5 + $0x2d8] sm:$0xff]
    %v370 = vld [vmem:[#allocation5 + $0x2e0] sm:$0xff]
    %v371 = vld [vmem:[#allocation5 + $0x2e8] sm:$0xff]
    %v372 = vld [vmem:[#allocation5 + $0x2f0] sm:$0xff]
    %v373 = vld [vmem:[#allocation5 + $0x2f8] sm:$0xff]
    %v374 = vld [vmem:[#allocation5 + $0x300] sm:$0xff]
    %v375 = vld [vmem:[#allocation5 + $0x308] sm:$0xff]
    %v376 = vld [vmem:[#allocation5 + $0x310] sm:$0xff]
    %v377 = vld [vmem:[#allocation5 + $0x318] sm:$0xff]
    %v378 = vld [vmem:[#allocation5 + $0x320] sm:$0xff]
    %v379 = vld [vmem:[#allocation5 + $0x328] sm:$0xff]
    %v380 = vld [vmem:[#allocation5 + $0x330] sm:$0xff]
    %v381 = vld [vmem:[#allocation5 + $0x338] sm:$0xff]
    %v382 = vld [vmem:[#allocation5 + $0x340] sm:$0xff]
    %v383 = vld [vmem:[#allocation5 + $0x348] sm:$0xff]
    %v384 = vld [vmem:[#allocation5 + $0x350] sm:$0xff]
    %v385 = vld [vmem:[#allocation5 + $0x358] sm:$0xff]
    %v386 = vld [vmem:[#allocation5 + $0x360] sm:$0xff]
    %v387 = vld [vmem:[#allocation5 + $0x368] sm:$0xff]
    %v388 = vld [vmem:[#allocation5 + $0x370] sm:$0xff]
    %v389 = vld [vmem:[#allocation5 + $0x378] sm:$0xff]
    %v390 = vld [vmem:[#allocation5 + $0x380] sm:$0xff]
    %v391 = vld [vmem:[#allocation5 + $0x388] sm:$0xff]
    %v392 = vld [vmem:[#allocation5 + $0x390] sm:$0xff]
    %v393 = vld [vmem:[#allocation5 + $0x398] sm:$0xff]
    %v394 = vld [vmem:[#allocation5 + $0x3a0] sm:$0xff]
    %v395 = vld [vmem:[#allocation5 + $0x3a8] sm:$0xff]
    %v396 = vld [vmem:[#allocation5 + $0x3b0] sm:$0xff]
    %v397 = vld [vmem:[#allocation5 + $0x3b8] sm:$0xff]
    %v398 = vld [vmem:[#allocation5 + $0x3c0] sm:$0xff]
    %v399 = vld [vmem:[#allocation5 + $0x3c8] sm:$0xff]
    %v400 = vld [vmem:[#allocation5 + $0x3d0] sm:$0xff]
    %v401 = vld [vmem:[#allocation5 + $0x3d8] sm:$0xff]
    %v402 = vld [vmem:[#allocation5 + $0x3e0] sm:$0xff]
    %v403 = vld [vmem:[#allocation5 + $0x3e8] sm:$0xff]
    %v404 = vld [vmem:[#allocation5 + $0x3f0] sm:$0xff]
    %v405 = vld [vmem:[#allocation5 + $0x3f8] sm:$0xff]
    %v406 = vld [vmem:[#allocation5 + $0x400] sm:$0xff]
    %v407 = vld [vmem:[#allocation5 + $0x408] sm:$0xff]
    %v408 = vld [vmem:[#allocation5 + $0x410] sm:$0xff]
    %v409 = vld [vmem:[#allocation5 + $0x418] sm:$0xff]
    %v410 = vld [vmem:[#allocation5 + $0x420] sm:$0xff]
    %v411 = vld [vmem:[#allocation5 + $0x428] sm:$0xff]
    %v412 = vld [vmem:[#allocation5 + $0x430] sm:$0xff]
    %v413 = vld [vmem:[#allocation5 + $0x438] sm:$0xff]
    %v414 = vld [vmem:[#allocation5 + $0x440] sm:$0xff]
    %v415 = vld [vmem:[#allocation5 + $0x448] sm:$0xff]
    %v416 = vld [vmem:[#allocation5 + $0x450] sm:$0xff]
    %v417 = vld [vmem:[#allocation5 + $0x458] sm:$0xff]
    %v418 = vld [vmem:[#allocation5 + $0x460] sm:$0xff]
    %v419 = vld [vmem:[#allocation5 + $0x468] sm:$0xff]
    %v420 = vld [vmem:[#allocation5 + $0x470] sm:$0xff]
    %v421 = vld [vmem:[#allocation5 + $0x478] sm:$0xff]
    %v422 = vld [vmem:[#allocation5 + $0x480] sm:$0xff]
    %v423 = vld [vmem:[#allocation5 + $0x488] sm:$0xff]
    %v424 = vld [vmem:[#allocation5 + $0x490] sm:$0xff]
    %v425 = vld [vmem:[#allocation5 + $0x498] sm:$0xff]
    %v426 = vld [vmem:[#allocation5 + $0x4a0] sm:$0xff]
    %v427 = vld [vmem:[#allocation5 + $0x4a8] sm:$0xff]
    %v428 = vld [vmem:[#allocation5 + $0x4b0] sm:$0xff]
    %v429 = vld [vmem:[#allocation5 + $0x4b8] sm:$0xff]
    %v430 = vld [vmem:[#allocation5 + $0x4c0] sm:$0xff]
    %v431 = vld [vmem:[#allocation5 + $0x4c8] sm:$0xff]
    %v432 = vld [vmem:[#allocation5 + $0x4d0] sm:$0xff]
    %v433 = vld [vmem:[#allocation5 + $0x4d8] sm:$0xff]
    %v434 = vld [vmem:[#allocation5 + $0x4e0] sm:$0xff]
    %v435 = vld [vmem:[#allocation5 + $0x4e8] sm:$0xff]
    %v436 = vld [vmem:[#allocation5 + $0x4f0] sm:$0xff]
    %v437 = vld [vmem:[#allocation5 + $0x4f8] sm:$0xff]
    %v438 = vld [vmem:[#allocation5 + $0x500] sm:$0xff]
    %v439 = vld [vmem:[#allocation5 + $0x508] sm:$0xff]
    %v440 = vld [vmem:[#allocation5 + $0x510] sm:$0xff]
    %v441 = vld [vmem:[#allocation5 + $0x518] sm:$0xff]
    %v442 = vld [vmem:[#allocation5 + $0x520] sm:$0xff]
    %v443 = vld [vmem:[#allocation5 + $0x528] sm:$0xff]
    %v444 = vld [vmem:[#allocation5 + $0x530] sm:$0xff]
    %v445 = vld [vmem:[#allocation5 + $0x538] sm:$0xff]
    %v446 = vld [vmem:[#allocation5 + $0x540] sm:$0xff]
    %v447 = vld [vmem:[#allocation5 + $0x548] sm:$0xff]
    %v448 = vld [vmem:[#allocation5 + $0x550] sm:$0xff]
    %v449 = vld [vmem:[#allocation5 + $0x558] sm:$0xff]
    %v450 = vld [vmem:[#allocation5 + $0x560] sm:$0xff]
    %v451 = vld [vmem:[#allocation5 + $0x568] sm:$0xff]
    %v452 = vld [vmem:[#allocation5 + $0x570] sm:$0xff]
    %v453 = vld [vmem:[#allocation5 + $0x578] sm:$0xff]
    %v454 = vld [vmem:[#allocation5 + $0x580] sm:$0xff]
    %v455 = vld [vmem:[#allocation5 + $0x588] sm:$0xff]
    %v456 = vld [vmem:[#allocation5 + $0x590] sm:$0xff]
    %v457 = vld [vmem:[#allocation5 + $0x598] sm:$0xff]
    %v458 = vld [vmem:[#allocation5 + $0x5a0] sm:$0xff]
    %v459 = vld [vmem:[#allocation5 + $0x5a8] sm:$0xff]
    %v460 = vld [vmem:[#allocation5 + $0x5b0] sm:$0xff]
    %v461 = vld [vmem:[#allocation5 + $0x5b8] sm:$0xff]
    %v462 = vld [vmem:[#allocation5 + $0x5c0] sm:$0xff]
    %v463 = vld [vmem:[#allocation5 + $0x5c8] sm:$0xff]
    %v464 = vld [vmem:[#allocation5 + $0x5d0] sm:$0xff]
    %v465 = vld [vmem:[#allocation5 + $0x5d8] sm:$0xff]
    %v466 = vld [vmem:[#allocation5 + $0x5e0] sm:$0xff]
    %v467 = vld [vmem:[#allocation5 + $0x5e8] sm:$0xff]
    %v468 = vld [vmem:[#allocation5 + $0x5f0] sm:$0xff]
    %v469 = vld [vmem:[#allocation5 + $0x5f8] sm:$0xff]
    %v470 = vld [vmem:[#allocation5 + $0x600] sm:$0xff]
    %v471 = vld [vmem:[#allocation5 + $0x608] sm:$0xff]
    %v472 = vld [vmem:[#allocation5 + $0x610] sm:$0xff]
    %v473 = vld [vmem:[#allocation5 + $0x618] sm:$0xff]
    %v474 = vld [vmem:[#allocation5 + $0x620] sm:$0xff]
    %v475 = vld [vmem:[#allocation5 + $0x628] sm:$0xff]
    %v476 = vld [vmem:[#allocation5 + $0x630] sm:$0xff]
    %v477 = vld [vmem:[#allocation5 + $0x638] sm:$0xff]
    %v478 = vld [vmem:[#allocation5 + $0x640] sm:$0xff]
    %v479 = vld [vmem:[#allocation5 + $0x648] sm:$0xff]
    %v480 = vld [vmem:[#allocation5 + $0x650] sm:$0xff]
    %v481 = vld [vmem:[#allocation5 + $0x658] sm:$0xff]
    %v482 = vld [vmem:[#allocation5 + $0x660] sm:$0xff]
    %v483 = vld [vmem:[#allocation5 + $0x668] sm:$0xff]
    %v484 = vld [vmem:[#allocation5 + $0x670] sm:$0xff]
    %v485 = vld [vmem:[#allocation5 + $0x678] sm:$0xff]
    %v486 = vld [vmem:[#allocation5 + $0x680] sm:$0xff]
    %v487 = vld [vmem:[#allocation5 + $0x688] sm:$0xff]
    %v488 = vld [vmem:[#allocation5 + $0x690] sm:$0xff]
    %v489 = vld [vmem:[#allocation5 + $0x698] sm:$0xff]
    %v490 = vld [vmem:[#allocation5 + $0x6a0] sm:$0xff]
    %v491 = vld [vmem:[#allocation5 + $0x6a8] sm:$0xff]
    %v492 = vld [vmem:[#allocation5 + $0x6b0] sm:$0xff]
    %v493 = vld [vmem:[#allocation5 + $0x6b8] sm:$0xff]
    %v494 = vld [vmem:[#allocation5 + $0x6c0] sm:$0xff]
    %v495 = vld [vmem:[#allocation5 + $0x6c8] sm:$0xff]
    %v496 = vld [vmem:[#allocation5 + $0x6d0] sm:$0xff]
    %v497 = vld [vmem:[#allocation5 + $0x6d8] sm:$0xff]
    %v498 = vld [vmem:[#allocation5 + $0x6e0] sm:$0xff]
    %v499 = vld [vmem:[#allocation5 + $0x6e8] sm:$0xff]
    %v500 = vld [vmem:[#allocation5 + $0x6f0] sm:$0xff]
    %v501 = vld [vmem:[#allocation5 + $0x6f8] sm:$0xff]
    %v502 = vld [vmem:[#allocation5 + $0x700] sm:$0xff]
    %v503 = vld [vmem:[#allocation5 + $0x708] sm:$0xff]
    %v504 = vld [vmem:[#allocation5 + $0x710] sm:$0xff]
    %v505 = vld [vmem:[#allocation5 + $0x718] sm:$0xff]
    %v506 = vld [vmem:[#allocation5 + $0x720] sm:$0xff]
    %v507 = vld [vmem:[#allocation5 + $0x728] sm:$0xff]
    %v508 = vld [vmem:[#allocation5 + $0x730] sm:$0xff]
    %v509 = vld [vmem:[#allocation5 + $0x738] sm:$0xff]
    %v510 = vld [vmem:[#allocation5 + $0x740] sm:$0xff]
    %v511 = vld [vmem:[#allocation5 + $0x748] sm:$0xff]
    %v512 = vld [vmem:[#allocation5 + $0x750] sm:$0xff]
    %v513 = vld [vmem:[#allocation5 + $0x758] sm:$0xff]
    %v514 = vld [vmem:[#allocation5 + $0x760] sm:$0xff]
    %v515 = vld [vmem:[#allocation5 + $0x768] sm:$0xff]
    %v516 = vld [vmem:[#allocation5 + $0x770] sm:$0xff]
    %v517 = vld [vmem:[#allocation5 + $0x778] sm:$0xff]
    %v518 = vld [vmem:[#allocation5 + $0x780] sm:$0xff]
    %v519 = vld [vmem:[#allocation5 + $0x788] sm:$0xff]
    %v520 = vld [vmem:[#allocation5 + $0x790] sm:$0xff]
    %v521 = vld [vmem:[#allocation5 + $0x798] sm:$0xff]
    %v522 = vld [vmem:[#allocation5 + $0x7a0] sm:$0xff]
    %v523 = vld [vmem:[#allocation5 + $0x7a8] sm:$0xff]
    %v524 = vld [vmem:[#allocation5 + $0x7b0] sm:$0xff]
    %v525 = vld [vmem:[#allocation5 + $0x7b8] sm:$0xff]
    %v526 = vld [vmem:[#allocation5 + $0x7c0] sm:$0xff]
    %v527 = vld [vmem:[#allocation5 + $0x7c8] sm:$0xff]
    %v528 = vld [vmem:[#allocation5 + $0x7d0] sm:$0xff]
    %v529 = vld [vmem:[#allocation5 + $0x7d8] sm:$0xff]
    %v530 = vld [vmem:[#allocation5 + $0x7e0] sm:$0xff]
    %v531 = vld [vmem:[#allocation5 + $0x7e8] sm:$0xff]
    %v532 = vld [vmem:[#allocation5 + $0x7f0] sm:$0xff]
    %v533 = vld [vmem:[#allocation5 + $0x7f8] sm:$0xff]
    %v534 = vld [vmem:[#allocation5 + $0x800] sm:$0xff]
    %v535 = vld [vmem:[#allocation5 + $0x808] sm:$0xff]
    %v536 = vld [vmem:[#allocation5 + $0x810] sm:$0xff]
    %v537 = vld [vmem:[#allocation5 + $0x818] sm:$0xff]
    %v538 = vld [vmem:[#allocation5 + $0x820] sm:$0xff]
    %v539 = vld [vmem:[#allocation5 + $0x828] sm:$0xff]
    %v540 = vld [vmem:[#allocation5 + $0x830] sm:$0xff]
    %v541 = vld [vmem:[#allocation5 + $0x838] sm:$0xff]
    %v542 = vld [vmem:[#allocation5 + $0x840] sm:$0xff]
    %v543 = vld [vmem:[#allocation5 + $0x848] sm:$0xff]
    %v544 = vld [vmem:[#allocation5 + $0x850] sm:$0xff]
    %v545 = vld [vmem:[#allocation5 + $0x858] sm:$0xff]
    %v546 = vld [vmem:[#allocation5 + $0x860] sm:$0xff]
    %v547 = vld [vmem:[#allocation5 + $0x868] sm:$0xff]
    %v548 = vld [vmem:[#allocation5 + $0x870] sm:$0xff]
    %v549 = vld [vmem:[#allocation5 + $0x878] sm:$0xff]
    %v550 = vld [vmem:[#allocation5 + $0x880] sm:$0xff]
    %v551 = vld [vmem:[#allocation5 + $0x888] sm:$0xff]
    %v552 = vld [vmem:[#allocation5 + $0x890] sm:$0xff]
    %v553 = vld [vmem:[#allocation5 + $0x898] sm:$0xff]
    %v554 = vld [vmem:[#allocation5 + $0x8a0] sm:$0xff]
    %v555 = vld [vmem:[#allocation5 + $0x8a8] sm:$0xff]
    %v556 = vld [vmem:[#allocation5 + $0x8b0] sm:$0xff]
    %v557 = vld [vmem:[#allocation5 + $0x8b8] sm:$0xff]
    %v558 = vld [vmem:[#allocation5 + $0x8c0] sm:$0xff]
    %v559 = vld [vmem:[#allocation5 + $0x8c8] sm:$0xff]
    %v560 = vld [vmem:[#allocation5 + $0x8d0] sm:$0xff]
    %v561 = vld [vmem:[#allocation5 + $0x8d8] sm:$0xff]
    %v562 = vld [vmem:[#allocation5 + $0x8e0] sm:$0xff]
    %v563 = vld [vmem:[#allocation5 + $0x8e8] sm:$0xff]
    %v564 = vld [vmem:[#allocation5 + $0x8f0] sm:$0xff]
    %v565 = vld [vmem:[#allocation5 + $0x8f8] sm:$0xff]
    %v566 = vld [vmem:[#allocation5 + $0x900] sm:$0xff]
    %v567 = vld [vmem:[#allocation5 + $0x908] sm:$0xff]
    %v568 = vld [vmem:[#allocation5 + $0x910] sm:$0xff]
    %v569 = vld [vmem:[#allocation5 + $0x918] sm:$0xff]
    %v570 = vld [vmem:[#allocation5 + $0x920] sm:$0xff]
    %v571 = vld [vmem:[#allocation5 + $0x928] sm:$0xff]
    %v572 = vld [vmem:[#allocation5 + $0x930] sm:$0xff]
    %v573 = vld [vmem:[#allocation5 + $0x938] sm:$0xff]
    %v574 = vld [vmem:[#allocation5 + $0x940] sm:$0xff]
    %v575 = vld [vmem:[#allocation5 + $0x948] sm:$0xff]
    %v576 = vld [vmem:[#allocation5 + $0x950] sm:$0xff]
    %v577 = vld [vmem:[#allocation5 + $0x958] sm:$0xff]
    %v578 = vld [vmem:[#allocation5 + $0x960] sm:$0xff]
    %v579 = vld [vmem:[#allocation5 + $0x968] sm:$0xff]
    %v580 = vld [vmem:[#allocation5 + $0x970] sm:$0xff]
    %v581 = vld [vmem:[#allocation5 + $0x978] sm:$0xff]
    %v582 = vld [vmem:[#allocation5 + $0x980] sm:$0xff]
    %v583 = vld [vmem:[#allocation5 + $0x988] sm:$0xff]
    %v584 = vld [vmem:[#allocation5 + $0x990] sm:$0xff]
    %v585 = vld [vmem:[#allocation5 + $0x998] sm:$0xff]
    %v586 = vld [vmem:[#allocation5 + $0x9a0] sm:$0xff]
    %v587 = vld [vmem:[#allocation5 + $0x9a8] sm:$0xff]
    %v588 = vld [vmem:[#allocation5 + $0x9b0] sm:$0xff]
    %v589 = vld [vmem:[#allocation5 + $0x9b8] sm:$0xff]
    %v590 = vld [vmem:[#allocation5 + $0x9c0] sm:$0xff]
    %v591 = vld [vmem:[#allocation5 + $0x9c8] sm:$0xff]
    %v592 = vld [vmem:[#allocation5 + $0x9d0] sm:$0xff]
    %v593 = vld [vmem:[#allocation5 + $0x9d8] sm:$0xff]
    %v594 = vld [vmem:[#allocation5 + $0x9e0] sm:$0xff]
    %v595 = vld [vmem:[#allocation5 + $0x9e8] sm:$0xff]
    %v596 = vld [vmem:[#allocation5 + $0x9f0] sm:$0xff]
    %v597 = vld [vmem:[#allocation5 + $0x9f8] sm:$0xff]
    %v598 = vld [vmem:[#allocation5 + $0xa00] sm:$0xff]
    %v599 = vld [vmem:[#allocation5 + $0xa08] sm:$0xff]
    %v600 = vld [vmem:[#allocation5 + $0xa10] sm:$0xff]
    %v601 = vld [vmem:[#allocation5 + $0xa18] sm:$0xff]
    %v602 = vld [vmem:[#allocation5 + $0xa20] sm:$0xff]
    %v603 = vld [vmem:[#allocation5 + $0xa28] sm:$0xff]
    %v604 = vld [vmem:[#allocation5 + $0xa30] sm:$0xff]
    %v605 = vld [vmem:[#allocation5 + $0xa38] sm:$0xff]
    %v606 = vld [vmem:[#allocation5 + $0xa40] sm:$0xff]
    %v607 = vld [vmem:[#allocation5 + $0xa48] sm:$0xff]
    %v608 = vld [vmem:[#allocation5 + $0xa50] sm:$0xff]
    %v609 = vld [vmem:[#allocation5 + $0xa58] sm:$0xff]
    %v610 = vld [vmem:[#allocation5 + $0xa60] sm:$0xff]
    %v611 = vld [vmem:[#allocation5 + $0xa68] sm:$0xff]
    %v612 = vld [vmem:[#allocation5 + $0xa70] sm:$0xff]
    %v613 = vld [vmem:[#allocation5 + $0xa78] sm:$0xff]
    %v614 = vld [vmem:[#allocation5 + $0xa80] sm:$0xff]
    %v615 = vld [vmem:[#allocation5 + $0xa88] sm:$0xff]
    %v616 = vld [vmem:[#allocation5 + $0xa90] sm:$0xff]
    %v617 = vld [vmem:[#allocation5 + $0xa98] sm:$0xff]
    %v618 = vld [vmem:[#allocation5 + $0xaa0] sm:$0xff]
    %v619 = vld [vmem:[#allocation5 + $0xaa8] sm:$0xff]
    %v620 = vld [vmem:[#allocation5 + $0xab0] sm:$0xff]
    %v621 = vld [vmem:[#allocation5 + $0xab8] sm:$0xff]
    %v622 = vld [vmem:[#allocation5 + $0xac0] sm:$0xff]
    %v623 = vld [vmem:[#allocation5 + $0xac8] sm:$0xff]
    %v624 = vld [vmem:[#allocation5 + $0xad0] sm:$0xff]
    %v625 = vld [vmem:[#allocation5 + $0xad8] sm:$0xff]
    %v626 = vld [vmem:[#allocation5 + $0xae0] sm:$0xff]
    %v627 = vld [vmem:[#allocation5 + $0xae8] sm:$0xff]
    %v628 = vld [vmem:[#allocation5 + $0xaf0] sm:$0xff]
    %v629 = vld [vmem:[#allocation5 + $0xaf8] sm:$0xff]
    %v630 = vld [vmem:[#allocation5 + $0xb00] sm:$0xff]
    %v631 = vld [vmem:[#allocation5 + $0xb08] sm:$0xff]
    %v632 = vld [vmem:[#allocation5 + $0xb10] sm:$0xff]
    %v633 = vld [vmem:[#allocation5 + $0xb18] sm:$0xff]
    %v634 = vld [vmem:[#allocation5 + $0xb20] sm:$0xff]
    %v635 = vld [vmem:[#allocation5 + $0xb28] sm:$0xff]
    %v636 = vld [vmem:[#allocation5 + $0xb30] sm:$0xff]
    %v637 = vld [vmem:[#allocation5 + $0xb38] sm:$0xff]
    %v638 = vld [vmem:[#allocation5 + $0xb40] sm:$0xff]
    %v639 = vld [vmem:[#allocation5 + $0xb48] sm:$0xff]
    %v640 = vld [vmem:[#allocation5 + $0xb50] sm:$0xff]
    %v641 = vld [vmem:[#allocation5 + $0xb58] sm:$0xff]
    %v642 = vld [vmem:[#allocation5 + $0xb60] sm:$0xff]
    %v643 = vld [vmem:[#allocation5 + $0xb68] sm:$0xff]
    %v644 = vld [vmem:[#allocation5 + $0xb70] sm:$0xff]
    %v645 = vld [vmem:[#allocation5 + $0xb78] sm:$0xff]
    %v646 = vld [vmem:[#allocation5 + $0xb80] sm:$0xff]
    %v647 = vld [vmem:[#allocation5 + $0xb88] sm:$0xff]
    %v648 = vld [vmem:[#allocation5 + $0xb90] sm:$0xff]
    %v649 = vld [vmem:[#allocation5 + $0xb98] sm:$0xff]
    %v650 = vld [vmem:[#allocation5 + $0xba0] sm:$0xff]
    %v651 = vld [vmem:[#allocation5 + $0xba8] sm:$0xff]
    %v652 = vld [vmem:[#allocation5 + $0xbb0] sm:$0xff]
    %v653 = vld [vmem:[#allocation5 + $0xbb8] sm:$0xff]
    %v654 = vld [vmem:[#allocation5 + $0xbc0] sm:$0xff]
    %v655 = vld [vmem:[#allocation5 + $0xbc8] sm:$0xff]
    %v656 = vld [vmem:[#allocation5 + $0xbd0] sm:$0xff]
    %v657 = vld [vmem:[#allocation5 + $0xbd8] sm:$0xff]
    %v658 = vld [vmem:[#allocation5 + $0xbe0] sm:$0xff]
    %v659 = vld [vmem:[#allocation5 + $0xbe8] sm:$0xff]
    %v660 = vld [vmem:[#allocation5 + $0xbf0] sm:$0xff]
    %v661 = vld [vmem:[#allocation5 + $0xbf8] sm:$0xff]
    %v662 = vld [vmem:[#allocation7] sm:$0xff]
    %v664 = vlaneseq
    %v665 = vshrl.u32 %v664, 7
    %v666 = vsub.s32 0, %v665
    %v667 = vrot.slane %v662, %v666
    %v668 = vlaneseq
    %v669 = vshrl.u32 %v668, 7
    %v670 = vsub.s32 1, %v669
    %v671 = vrot.slane %v662, %v670
    %v672 = vlaneseq
    %v673 = vshrl.u32 %v672, 7
    %v674 = vsub.s32 2, %v673
    %v675 = vrot.slane %v662, %v674
    %v676 = vlaneseq
    %v677 = vshrl.u32 %v676, 7
    %v678 = vsub.s32 3, %v677
    %v679 = vrot.slane %v662, %v678
    %v680 = vlaneseq
    %v681 = vshrl.u32 %v680, 7
    %v682 = vsub.s32 4, %v681
    %v683 = vrot.slane %v662, %v682
    %v684 = vlaneseq
    %v685 = vshrl.u32 %v684, 7
    %v686 = vsub.s32 5, %v685
    %v687 = vrot.slane %v662, %v686
    %v688 = vlaneseq
    %v689 = vshrl.u32 %v688, 7
    %v690 = vsub.s32 6, %v689
    %v691 = vrot.slane %v662, %v690
    %v692 = vlaneseq
    %v693 = vshrl.u32 %v692, 7
    %v694 = vsub.s32 7, %v693
    %v695 = vrot.slane %v662, %v694
    %v1088 = vunpack.c.l.b16 %v278
    %v1089 = vunpack.c.h.b16 %v278
    %v1090 = vunpack.c.l.b16 %v279
    %v1091 = vunpack.c.h.b16 %v279
    %v1092 = vunpack.c.l.b16 %v280
    %v1093 = vunpack.c.h.b16 %v280
    %v1094 = vunpack.c.l.b16 %v281
    %v1095 = vunpack.c.h.b16 %v281
    %v1096 = vunpack.c.l.b16 %v282
    %v1097 = vunpack.c.h.b16 %v282
    %v1098 = vunpack.c.l.b16 %v283
    %v1099 = vunpack.c.h.b16 %v283
    %v1100 = vunpack.c.l.b16 %v284
    %v1101 = vunpack.c.h.b16 %v284
    %v1102 = vunpack.c.l.b16 %v285
    %v1103 = vunpack.c.h.b16 %v285
    %v1104 = vunpack.c.l.b16 %v286
    %v1105 = vunpack.c.h.b16 %v286
    %v1106 = vunpack.c.l.b16 %v287
    %v1107 = vunpack.c.h.b16 %v287
    %v1108 = vunpack.c.l.b16 %v288
    %v1109 = vunpack.c.h.b16 %v288
    %v1110 = vunpack.c.l.b16 %v289
    %v1111 = vunpack.c.h.b16 %v289
    %v1112 = vunpack.c.l.b16 %v290
    %v1113 = vunpack.c.h.b16 %v290
    %v1114 = vunpack.c.l.b16 %v291
    %v1115 = vunpack.c.h.b16 %v291
    %v1116 = vunpack.c.l.b16 %v292
    %v1117 = vunpack.c.h.b16 %v292
    %v1118 = vunpack.c.l.b16 %v293
    %v1119 = vunpack.c.h.b16 %v293
    %v1120 = vunpack.c.l.b16 %v294
    %v1121 = vunpack.c.h.b16 %v294
    %v1122 = vunpack.c.l.b16 %v295
    %v1123 = vunpack.c.h.b16 %v295
    %v1124 = vunpack.c.l.b16 %v296
    %v1125 = vunpack.c.h.b16 %v296
    %v1126 = vunpack.c.l.b16 %v297
    %v1127 = vunpack.c.h.b16 %v297
    %v1128 = vunpack.c.l.b16 %v298
    %v1129 = vunpack.c.h.b16 %v298
    %v1130 = vunpack.c.l.b16 %v299
    %v1131 = vunpack.c.h.b16 %v299
    %v1132 = vunpack.c.l.b16 %v300
    %v1133 = vunpack.c.h.b16 %v300
    %v1134 = vunpack.c.l.b16 %v301
    %v1135 = vunpack.c.h.b16 %v301
    %v1136 = vunpack.c.l.b16 %v302
    %v1137 = vunpack.c.h.b16 %v302
    %v1138 = vunpack.c.l.b16 %v303
    %v1139 = vunpack.c.h.b16 %v303
    %v1140 = vunpack.c.l.b16 %v304
    %v1141 = vunpack.c.h.b16 %v304
    %v1142 = vunpack.c.l.b16 %v305
    %v1143 = vunpack.c.h.b16 %v305
    %v1144 = vunpack.c.l.b16 %v306
    %v1145 = vunpack.c.h.b16 %v306
    %v1146 = vunpack.c.l.b16 %v307
    %v1147 = vunpack.c.h.b16 %v307
    %v1148 = vunpack.c.l.b16 %v308
    %v1149 = vunpack.c.h.b16 %v308
    %v1150 = vunpack.c.l.b16 %v309
    %v1151 = vunpack.c.h.b16 %v309
    %v1152 = vunpack.c.l.b16 %v310
    %v1153 = vunpack.c.h.b16 %v310
    %v1154 = vunpack.c.l.b16 %v311
    %v1155 = vunpack.c.h.b16 %v311
    %v1156 = vunpack.c.l.b16 %v312
    %v1157 = vunpack.c.h.b16 %v312
    %v1158 = vunpack.c.l.b16 %v313
    %v1159 = vunpack.c.h.b16 %v313
    %v1160 = vunpack.c.l.b16 %v314
    %v1161 = vunpack.c.h.b16 %v314
    %v1162 = vunpack.c.l.b16 %v315
    %v1163 = vunpack.c.h.b16 %v315
    %v1164 = vunpack.c.l.b16 %v316
    %v1165 = vunpack.c.h.b16 %v316
    %v1166 = vunpack.c.l.b16 %v317
    %v1167 = vunpack.c.h.b16 %v317
    %v1168 = vunpack.c.l.b16 %v318
    %v1169 = vunpack.c.h.b16 %v318
    %v1170 = vunpack.c.l.b16 %v319
    %v1171 = vunpack.c.h.b16 %v319
    %v1172 = vunpack.c.l.b16 %v320
    %v1173 = vunpack.c.h.b16 %v320
    %v1174 = vunpack.c.l.b16 %v321
    %v1175 = vunpack.c.h.b16 %v321
    %v1176 = vunpack.c.l.b16 %v322
    %v1177 = vunpack.c.h.b16 %v322
    %v1178 = vunpack.c.l.b16 %v323
    %v1179 = vunpack.c.h.b16 %v323
    %v1180 = vunpack.c.l.b16 %v324
    %v1181 = vunpack.c.h.b16 %v324
    %v1182 = vunpack.c.l.b16 %v325
    %v1183 = vunpack.c.h.b16 %v325
    %v1184 = vunpack.c.l.b16 %v326
    %v1185 = vunpack.c.h.b16 %v326
    %v1186 = vunpack.c.l.b16 %v327
    %v1187 = vunpack.c.h.b16 %v327
    %v1188 = vunpack.c.l.b16 %v328
    %v1189 = vunpack.c.h.b16 %v328
    %v1190 = vunpack.c.l.b16 %v329
    %v1191 = vunpack.c.h.b16 %v329
    %v1192 = vunpack.c.l.b16 %v330
    %v1193 = vunpack.c.h.b16 %v330
    %v1194 = vunpack.c.l.b16 %v331
    %v1195 = vunpack.c.h.b16 %v331
    %v1196 = vunpack.c.l.b16 %v332
    %v1197 = vunpack.c.h.b16 %v332
    %v1198 = vunpack.c.l.b16 %v333
    %v1199 = vunpack.c.h.b16 %v333
    %v1200 = vunpack.c.l.b16 %v334
    %v1201 = vunpack.c.h.b16 %v334
    %v1202 = vunpack.c.l.b16 %v335
    %v1203 = vunpack.c.h.b16 %v335
    %v1204 = vunpack.c.l.b16 %v336
    %v1205 = vunpack.c.h.b16 %v336
    %v1206 = vunpack.c.l.b16 %v337
    %v1207 = vunpack.c.h.b16 %v337
    %v1208 = vunpack.c.l.b16 %v338
    %v1209 = vunpack.c.h.b16 %v338
    %v1210 = vunpack.c.l.b16 %v339
    %v1211 = vunpack.c.h.b16 %v339
    %v1212 = vunpack.c.l.b16 %v340
    %v1213 = vunpack.c.h.b16 %v340
    %v1214 = vunpack.c.l.b16 %v341
    %v1215 = vunpack.c.h.b16 %v341
    %v1216 = vunpack.c.l.b16 %v342
    %v1217 = vunpack.c.h.b16 %v342
    %v1218 = vunpack.c.l.b16 %v343
    %v1219 = vunpack.c.h.b16 %v343
    %v1220 = vunpack.c.l.b16 %v344
    %v1221 = vunpack.c.h.b16 %v344
    %v1222 = vunpack.c.l.b16 %v345
    %v1223 = vunpack.c.h.b16 %v345
    %v1224 = vunpack.c.l.b16 %v346
    %v1225 = vunpack.c.h.b16 %v346
    %v1226 = vunpack.c.l.b16 %v347
    %v1227 = vunpack.c.h.b16 %v347
    %v1228 = vunpack.c.l.b16 %v348
    %v1229 = vunpack.c.h.b16 %v348
    %v1230 = vunpack.c.l.b16 %v349
    %v1231 = vunpack.c.h.b16 %v349
    %v1232 = vunpack.c.l.b16 %v350
    %v1233 = vunpack.c.h.b16 %v350
    %v1234 = vunpack.c.l.b16 %v351
    %v1235 = vunpack.c.h.b16 %v351
    %v1236 = vunpack.c.l.b16 %v352
    %v1237 = vunpack.c.h.b16 %v352
    %v1238 = vunpack.c.l.b16 %v353
    %v1239 = vunpack.c.h.b16 %v353
    %v1240 = vunpack.c.l.b16 %v354
    %v1241 = vunpack.c.h.b16 %v354
    %v1242 = vunpack.c.l.b16 %v355
    %v1243 = vunpack.c.h.b16 %v355
    %v1244 = vunpack.c.l.b16 %v356
    %v1245 = vunpack.c.h.b16 %v356
    %v1246 = vunpack.c.l.b16 %v357
    %v1247 = vunpack.c.h.b16 %v357
    %v1248 = vunpack.c.l.b16 %v358
    %v1249 = vunpack.c.h.b16 %v358
    %v1250 = vunpack.c.l.b16 %v359
    %v1251 = vunpack.c.h.b16 %v359
    %v1252 = vunpack.c.l.b16 %v360
    %v1253 = vunpack.c.h.b16 %v360
    %v1254 = vunpack.c.l.b16 %v361
    %v1255 = vunpack.c.h.b16 %v361
    %v1256 = vunpack.c.l.b16 %v362
    %v1257 = vunpack.c.h.b16 %v362
    %v1258 = vunpack.c.l.b16 %v363
    %v1259 = vunpack.c.h.b16 %v363
    %v1260 = vunpack.c.l.b16 %v364
    %v1261 = vunpack.c.h.b16 %v364
    %v1262 = vunpack.c.l.b16 %v365
    %v1263 = vunpack.c.h.b16 %v365
    %v1264 = vunpack.c.l.b16 %v366
    %v1265 = vunpack.c.h.b16 %v366
    %v1266 = vunpack.c.l.b16 %v367
    %v1267 = vunpack.c.h.b16 %v367
    %v1268 = vunpack.c.l.b16 %v368
    %v1269 = vunpack.c.h.b16 %v368
    %v1270 = vunpack.c.l.b16 %v369
    %v1271 = vunpack.c.h.b16 %v369
    %v1272 = vunpack.c.l.b16 %v370
    %v1273 = vunpack.c.h.b16 %v370
    %v1274 = vunpack.c.l.b16 %v371
    %v1275 = vunpack.c.h.b16 %v371
    %v1276 = vunpack.c.l.b16 %v372
    %v1277 = vunpack.c.h.b16 %v372
    %v1278 = vunpack.c.l.b16 %v373
    %v1279 = vunpack.c.h.b16 %v373
    %v1280 = vunpack.c.l.b16 %v374
    %v1281 = vunpack.c.h.b16 %v374
    %v1282 = vunpack.c.l.b16 %v375
    %v1283 = vunpack.c.h.b16 %v375
    %v1284 = vunpack.c.l.b16 %v376
    %v1285 = vunpack.c.h.b16 %v376
    %v1286 = vunpack.c.l.b16 %v377
    %v1287 = vunpack.c.h.b16 %v377
    %v1288 = vunpack.c.l.b16 %v378
    %v1289 = vunpack.c.h.b16 %v378
    %v1290 = vunpack.c.l.b16 %v379
    %v1291 = vunpack.c.h.b16 %v379
    %v1292 = vunpack.c.l.b16 %v380
    %v1293 = vunpack.c.h.b16 %v380
    %v1294 = vunpack.c.l.b16 %v381
    %v1295 = vunpack.c.h.b16 %v381
    %v1296 = vunpack.c.l.b16 %v382
    %v1297 = vunpack.c.h.b16 %v382
    %v1298 = vunpack.c.l.b16 %v383
    %v1299 = vunpack.c.h.b16 %v383
    %v1300 = vunpack.c.l.b16 %v384
    %v1301 = vunpack.c.h.b16 %v384
    %v1302 = vunpack.c.l.b16 %v385
    %v1303 = vunpack.c.h.b16 %v385
    %v1304 = vunpack.c.l.b16 %v386
    %v1305 = vunpack.c.h.b16 %v386
    %v1306 = vunpack.c.l.b16 %v387
    %v1307 = vunpack.c.h.b16 %v387
    %v1308 = vunpack.c.l.b16 %v388
    %v1309 = vunpack.c.h.b16 %v388
    %v1310 = vunpack.c.l.b16 %v389
    %v1311 = vunpack.c.h.b16 %v389
    %v1312 = vunpack.c.l.b16 %v390
    %v1313 = vunpack.c.h.b16 %v390
    %v1314 = vunpack.c.l.b16 %v391
    %v1315 = vunpack.c.h.b16 %v391
    %v1316 = vunpack.c.l.b16 %v392
    %v1317 = vunpack.c.h.b16 %v392
    %v1318 = vunpack.c.l.b16 %v393
    %v1319 = vunpack.c.h.b16 %v393
    %v1320 = vunpack.c.l.b16 %v394
    %v1321 = vunpack.c.h.b16 %v394
    %v1322 = vunpack.c.l.b16 %v395
    %v1323 = vunpack.c.h.b16 %v395
    %v1324 = vunpack.c.l.b16 %v396
    %v1325 = vunpack.c.h.b16 %v396
    %v1326 = vunpack.c.l.b16 %v397
    %v1327 = vunpack.c.h.b16 %v397
    %v1328 = vunpack.c.l.b16 %v398
    %v1329 = vunpack.c.h.b16 %v398
    %v1330 = vunpack.c.l.b16 %v399
    %v1331 = vunpack.c.h.b16 %v399
    %v1332 = vunpack.c.l.b16 %v400
    %v1333 = vunpack.c.h.b16 %v400
    %v1334 = vunpack.c.l.b16 %v401
    %v1335 = vunpack.c.h.b16 %v401
    %v1336 = vunpack.c.l.b16 %v402
    %v1337 = vunpack.c.h.b16 %v402
    %v1338 = vunpack.c.l.b16 %v403
    %v1339 = vunpack.c.h.b16 %v403
    %v1340 = vunpack.c.l.b16 %v404
    %v1341 = vunpack.c.h.b16 %v404
    %v1342 = vunpack.c.l.b16 %v405
    %v1343 = vunpack.c.h.b16 %v405
    %v1344 = vunpack.c.l.b16 %v406
    %v1345 = vunpack.c.h.b16 %v406
    %v1346 = vunpack.c.l.b16 %v407
    %v1347 = vunpack.c.h.b16 %v407
    %v1348 = vunpack.c.l.b16 %v408
    %v1349 = vunpack.c.h.b16 %v408
    %v1350 = vunpack.c.l.b16 %v409
    %v1351 = vunpack.c.h.b16 %v409
    %v1352 = vunpack.c.l.b16 %v410
    %v1353 = vunpack.c.h.b16 %v410
    %v1354 = vunpack.c.l.b16 %v411
    %v1355 = vunpack.c.h.b16 %v411
    %v1356 = vunpack.c.l.b16 %v412
    %v1357 = vunpack.c.h.b16 %v412
    %v1358 = vunpack.c.l.b16 %v413
    %v1359 = vunpack.c.h.b16 %v413
    %v1360 = vunpack.c.l.b16 %v414
    %v1361 = vunpack.c.h.b16 %v414
    %v1362 = vunpack.c.l.b16 %v415
    %v1363 = vunpack.c.h.b16 %v415
    %v1364 = vunpack.c.l.b16 %v416
    %v1365 = vunpack.c.h.b16 %v416
    %v1366 = vunpack.c.l.b16 %v417
    %v1367 = vunpack.c.h.b16 %v417
    %v1368 = vunpack.c.l.b16 %v418
    %v1369 = vunpack.c.h.b16 %v418
    %v1370 = vunpack.c.l.b16 %v419
    %v1371 = vunpack.c.h.b16 %v419
    %v1372 = vunpack.c.l.b16 %v420
    %v1373 = vunpack.c.h.b16 %v420
    %v1374 = vunpack.c.l.b16 %v421
    %v1375 = vunpack.c.h.b16 %v421
    %v1376 = vunpack.c.l.b16 %v422
    %v1377 = vunpack.c.h.b16 %v422
    %v1378 = vunpack.c.l.b16 %v423
    %v1379 = vunpack.c.h.b16 %v423
    %v1380 = vunpack.c.l.b16 %v424
    %v1381 = vunpack.c.h.b16 %v424
    %v1382 = vunpack.c.l.b16 %v425
    %v1383 = vunpack.c.h.b16 %v425
    %v1384 = vunpack.c.l.b16 %v426
    %v1385 = vunpack.c.h.b16 %v426
    %v1386 = vunpack.c.l.b16 %v427
    %v1387 = vunpack.c.h.b16 %v427
    %v1388 = vunpack.c.l.b16 %v428
    %v1389 = vunpack.c.h.b16 %v428
    %v1390 = vunpack.c.l.b16 %v429
    %v1391 = vunpack.c.h.b16 %v429
    %v1392 = vunpack.c.l.b16 %v430
    %v1393 = vunpack.c.h.b16 %v430
    %v1394 = vunpack.c.l.b16 %v431
    %v1395 = vunpack.c.h.b16 %v431
    %v1396 = vunpack.c.l.b16 %v432
    %v1397 = vunpack.c.h.b16 %v432
    %v1398 = vunpack.c.l.b16 %v433
    %v1399 = vunpack.c.h.b16 %v433
    %v1400 = vunpack.c.l.b16 %v434
    %v1401 = vunpack.c.h.b16 %v434
    %v1402 = vunpack.c.l.b16 %v435
    %v1403 = vunpack.c.h.b16 %v435
    %v1404 = vunpack.c.l.b16 %v436
    %v1405 = vunpack.c.h.b16 %v436
    %v1406 = vunpack.c.l.b16 %v437
    %v1407 = vunpack.c.h.b16 %v437
    %v1408 = vunpack.c.l.b16 %v438
    %v1409 = vunpack.c.h.b16 %v438
    %v1410 = vunpack.c.l.b16 %v439
    %v1411 = vunpack.c.h.b16 %v439
    %v1412 = vunpack.c.l.b16 %v440
    %v1413 = vunpack.c.h.b16 %v440
    %v1414 = vunpack.c.l.b16 %v441
    %v1415 = vunpack.c.h.b16 %v441
    %v1416 = vunpack.c.l.b16 %v442
    %v1417 = vunpack.c.h.b16 %v442
    %v1418 = vunpack.c.l.b16 %v443
    %v1419 = vunpack.c.h.b16 %v443
    %v1420 = vunpack.c.l.b16 %v444
    %v1421 = vunpack.c.h.b16 %v444
    %v1422 = vunpack.c.l.b16 %v445
    %v1423 = vunpack.c.h.b16 %v445
    %v1424 = vunpack.c.l.b16 %v446
    %v1425 = vunpack.c.h.b16 %v446
    %v1426 = vunpack.c.l.b16 %v447
    %v1427 = vunpack.c.h.b16 %v447
    %v1428 = vunpack.c.l.b16 %v448
    %v1429 = vunpack.c.h.b16 %v448
    %v1430 = vunpack.c.l.b16 %v449
    %v1431 = vunpack.c.h.b16 %v449
    %v1432 = vunpack.c.l.b16 %v450
    %v1433 = vunpack.c.h.b16 %v450
    %v1434 = vunpack.c.l.b16 %v451
    %v1435 = vunpack.c.h.b16 %v451
    %v1436 = vunpack.c.l.b16 %v452
    %v1437 = vunpack.c.h.b16 %v452
    %v1438 = vunpack.c.l.b16 %v453
    %v1439 = vunpack.c.h.b16 %v453
    %v1440 = vunpack.c.l.b16 %v454
    %v1441 = vunpack.c.h.b16 %v454
    %v1442 = vunpack.c.l.b16 %v455
    %v1443 = vunpack.c.h.b16 %v455
    %v1444 = vunpack.c.l.b16 %v456
    %v1445 = vunpack.c.h.b16 %v456
    %v1446 = vunpack.c.l.b16 %v457
    %v1447 = vunpack.c.h.b16 %v457
    %v1448 = vunpack.c.l.b16 %v458
    %v1449 = vunpack.c.h.b16 %v458
    %v1450 = vunpack.c.l.b16 %v459
    %v1451 = vunpack.c.h.b16 %v459
    %v1452 = vunpack.c.l.b16 %v460
    %v1453 = vunpack.c.h.b16 %v460
    %v1454 = vunpack.c.l.b16 %v461
    %v1455 = vunpack.c.h.b16 %v461
    %v1456 = vunpack.c.l.b16 %v462
    %v1457 = vunpack.c.h.b16 %v462
    %v1458 = vunpack.c.l.b16 %v463
    %v1459 = vunpack.c.h.b16 %v463
    %v1460 = vunpack.c.l.b16 %v464
    %v1461 = vunpack.c.h.b16 %v464
    %v1462 = vunpack.c.l.b16 %v465
    %v1463 = vunpack.c.h.b16 %v465
    %v1464 = vunpack.c.l.b16 %v466
    %v1465 = vunpack.c.h.b16 %v466
    %v1466 = vunpack.c.l.b16 %v467
    %v1467 = vunpack.c.h.b16 %v467
    %v1468 = vunpack.c.l.b16 %v468
    %v1469 = vunpack.c.h.b16 %v468
    %v1470 = vunpack.c.l.b16 %v469
    %v1471 = vunpack.c.h.b16 %v469
    %v1472 = vunpack.c.l.b16 %v470
    %v1473 = vunpack.c.h.b16 %v470
    %v1474 = vunpack.c.l.b16 %v471
    %v1475 = vunpack.c.h.b16 %v471
    %v1476 = vunpack.c.l.b16 %v472
    %v1477 = vunpack.c.h.b16 %v472
    %v1478 = vunpack.c.l.b16 %v473
    %v1479 = vunpack.c.h.b16 %v473
    %v1480 = vunpack.c.l.b16 %v474
    %v1481 = vunpack.c.h.b16 %v474
    %v1482 = vunpack.c.l.b16 %v475
    %v1483 = vunpack.c.h.b16 %v475
    %v1484 = vunpack.c.l.b16 %v476
    %v1485 = vunpack.c.h.b16 %v476
    %v1486 = vunpack.c.l.b16 %v477
    %v1487 = vunpack.c.h.b16 %v477
    %v1488 = vunpack.c.l.b16 %v478
    %v1489 = vunpack.c.h.b16 %v478
    %v1490 = vunpack.c.l.b16 %v479
    %v1491 = vunpack.c.h.b16 %v479
    %v1492 = vunpack.c.l.b16 %v480
    %v1493 = vunpack.c.h.b16 %v480
    %v1494 = vunpack.c.l.b16 %v481
    %v1495 = vunpack.c.h.b16 %v481
    %v1496 = vunpack.c.l.b16 %v482
    %v1497 = vunpack.c.h.b16 %v482
    %v1498 = vunpack.c.l.b16 %v483
    %v1499 = vunpack.c.h.b16 %v483
    %v1500 = vunpack.c.l.b16 %v484
    %v1501 = vunpack.c.h.b16 %v484
    %v1502 = vunpack.c.l.b16 %v485
    %v1503 = vunpack.c.h.b16 %v485
    %v1504 = vunpack.c.l.b16 %v486
    %v1505 = vunpack.c.h.b16 %v486
    %v1506 = vunpack.c.l.b16 %v487
    %v1507 = vunpack.c.h.b16 %v487
    %v1508 = vunpack.c.l.b16 %v488
    %v1509 = vunpack.c.h.b16 %v488
    %v1510 = vunpack.c.l.b16 %v489
    %v1511 = vunpack.c.h.b16 %v489
    %v1512 = vunpack.c.l.b16 %v490
    %v1513 = vunpack.c.h.b16 %v490
    %v1514 = vunpack.c.l.b16 %v491
    %v1515 = vunpack.c.h.b16 %v491
    %v1516 = vunpack.c.l.b16 %v492
    %v1517 = vunpack.c.h.b16 %v492
    %v1518 = vunpack.c.l.b16 %v493
    %v1519 = vunpack.c.h.b16 %v493
    %v1520 = vunpack.c.l.b16 %v494
    %v1521 = vunpack.c.h.b16 %v494
    %v1522 = vunpack.c.l.b16 %v495
    %v1523 = vunpack.c.h.b16 %v495
    %v1524 = vunpack.c.l.b16 %v496
    %v1525 = vunpack.c.h.b16 %v496
    %v1526 = vunpack.c.l.b16 %v497
    %v1527 = vunpack.c.h.b16 %v497
    %v1528 = vunpack.c.l.b16 %v498
    %v1529 = vunpack.c.h.b16 %v498
    %v1530 = vunpack.c.l.b16 %v499
    %v1531 = vunpack.c.h.b16 %v499
    %v1532 = vunpack.c.l.b16 %v500
    %v1533 = vunpack.c.h.b16 %v500
    %v1534 = vunpack.c.l.b16 %v501
    %v1535 = vunpack.c.h.b16 %v501
    %v1536 = vunpack.c.l.b16 %v502
    %v1537 = vunpack.c.h.b16 %v502
    %v1538 = vunpack.c.l.b16 %v503
    %v1539 = vunpack.c.h.b16 %v503
    %v1540 = vunpack.c.l.b16 %v504
    %v1541 = vunpack.c.h.b16 %v504
    %v1542 = vunpack.c.l.b16 %v505
    %v1543 = vunpack.c.h.b16 %v505
    %v1544 = vunpack.c.l.b16 %v506
    %v1545 = vunpack.c.h.b16 %v506
    %v1546 = vunpack.c.l.b16 %v507
    %v1547 = vunpack.c.h.b16 %v507
    %v1548 = vunpack.c.l.b16 %v508
    %v1549 = vunpack.c.h.b16 %v508
    %v1550 = vunpack.c.l.b16 %v509
    %v1551 = vunpack.c.h.b16 %v509
    %v1552 = vunpack.c.l.b16 %v510
    %v1553 = vunpack.c.h.b16 %v510
    %v1554 = vunpack.c.l.b16 %v511
    %v1555 = vunpack.c.h.b16 %v511
    %v1556 = vunpack.c.l.b16 %v512
    %v1557 = vunpack.c.h.b16 %v512
    %v1558 = vunpack.c.l.b16 %v513
    %v1559 = vunpack.c.h.b16 %v513
    %v1560 = vunpack.c.l.b16 %v514
    %v1561 = vunpack.c.h.b16 %v514
    %v1562 = vunpack.c.l.b16 %v515
    %v1563 = vunpack.c.h.b16 %v515
    %v1564 = vunpack.c.l.b16 %v516
    %v1565 = vunpack.c.h.b16 %v516
    %v1566 = vunpack.c.l.b16 %v517
    %v1567 = vunpack.c.h.b16 %v517
    %v1568 = vunpack.c.l.b16 %v518
    %v1569 = vunpack.c.h.b16 %v518
    %v1570 = vunpack.c.l.b16 %v519
    %v1571 = vunpack.c.h.b16 %v519
    %v1572 = vunpack.c.l.b16 %v520
    %v1573 = vunpack.c.h.b16 %v520
    %v1574 = vunpack.c.l.b16 %v521
    %v1575 = vunpack.c.h.b16 %v521
    %v1576 = vunpack.c.l.b16 %v522
    %v1577 = vunpack.c.h.b16 %v522
    %v1578 = vunpack.c.l.b16 %v523
    %v1579 = vunpack.c.h.b16 %v523
    %v1580 = vunpack.c.l.b16 %v524
    %v1581 = vunpack.c.h.b16 %v524
    %v1582 = vunpack.c.l.b16 %v525
    %v1583 = vunpack.c.h.b16 %v525
    %v1584 = vunpack.c.l.b16 %v526
    %v1585 = vunpack.c.h.b16 %v526
    %v1586 = vunpack.c.l.b16 %v527
    %v1587 = vunpack.c.h.b16 %v527
    %v1588 = vunpack.c.l.b16 %v528
    %v1589 = vunpack.c.h.b16 %v528
    %v1590 = vunpack.c.l.b16 %v529
    %v1591 = vunpack.c.h.b16 %v529
    %v1592 = vunpack.c.l.b16 %v530
    %v1593 = vunpack.c.h.b16 %v530
    %v1594 = vunpack.c.l.b16 %v531
    %v1595 = vunpack.c.h.b16 %v531
    %v1596 = vunpack.c.l.b16 %v532
    %v1597 = vunpack.c.h.b16 %v532
    %v1598 = vunpack.c.l.b16 %v533
    %v1599 = vunpack.c.h.b16 %v533
    %v1600 = vunpack.c.l.b16 %v534
    %v1601 = vunpack.c.h.b16 %v534
    %v1602 = vunpack.c.l.b16 %v535
    %v1603 = vunpack.c.h.b16 %v535
    %v1604 = vunpack.c.l.b16 %v536
    %v1605 = vunpack.c.h.b16 %v536
    %v1606 = vunpack.c.l.b16 %v537
    %v1607 = vunpack.c.h.b16 %v537
    %v1608 = vunpack.c.l.b16 %v538
    %v1609 = vunpack.c.h.b16 %v538
    %v1610 = vunpack.c.l.b16 %v539
    %v1611 = vunpack.c.h.b16 %v539
    %v1612 = vunpack.c.l.b16 %v540
    %v1613 = vunpack.c.h.b16 %v540
    %v1614 = vunpack.c.l.b16 %v541
    %v1615 = vunpack.c.h.b16 %v541
    %v1616 = vunpack.c.l.b16 %v542
    %v1617 = vunpack.c.h.b16 %v542
    %v1618 = vunpack.c.l.b16 %v543
    %v1619 = vunpack.c.h.b16 %v543
    %v1620 = vunpack.c.l.b16 %v544
    %v1621 = vunpack.c.h.b16 %v544
    %v1622 = vunpack.c.l.b16 %v545
    %v1623 = vunpack.c.h.b16 %v545
    %v1624 = vunpack.c.l.b16 %v546
    %v1625 = vunpack.c.h.b16 %v546
    %v1626 = vunpack.c.l.b16 %v547
    %v1627 = vunpack.c.h.b16 %v547
    %v1628 = vunpack.c.l.b16 %v548
    %v1629 = vunpack.c.h.b16 %v548
    %v1630 = vunpack.c.l.b16 %v549
    %v1631 = vunpack.c.h.b16 %v549
    %v1632 = vunpack.c.l.b16 %v550
    %v1633 = vunpack.c.h.b16 %v550
    %v1634 = vunpack.c.l.b16 %v551
    %v1635 = vunpack.c.h.b16 %v551
    %v1636 = vunpack.c.l.b16 %v552
    %v1637 = vunpack.c.h.b16 %v552
    %v1638 = vunpack.c.l.b16 %v553
    %v1639 = vunpack.c.h.b16 %v553
    %v1640 = vunpack.c.l.b16 %v554
    %v1641 = vunpack.c.h.b16 %v554
    %v1642 = vunpack.c.l.b16 %v555
    %v1643 = vunpack.c.h.b16 %v555
    %v1644 = vunpack.c.l.b16 %v556
    %v1645 = vunpack.c.h.b16 %v556
    %v1646 = vunpack.c.l.b16 %v557
    %v1647 = vunpack.c.h.b16 %v557
    %v1648 = vunpack.c.l.b16 %v558
    %v1649 = vunpack.c.h.b16 %v558
    %v1650 = vunpack.c.l.b16 %v559
    %v1651 = vunpack.c.h.b16 %v559
    %v1652 = vunpack.c.l.b16 %v560
    %v1653 = vunpack.c.h.b16 %v560
    %v1654 = vunpack.c.l.b16 %v561
    %v1655 = vunpack.c.h.b16 %v561
    %v1656 = vunpack.c.l.b16 %v562
    %v1657 = vunpack.c.h.b16 %v562
    %v1658 = vunpack.c.l.b16 %v563
    %v1659 = vunpack.c.h.b16 %v563
    %v1660 = vunpack.c.l.b16 %v564
    %v1661 = vunpack.c.h.b16 %v564
    %v1662 = vunpack.c.l.b16 %v565
    %v1663 = vunpack.c.h.b16 %v565
    %v1664 = vunpack.c.l.b16 %v566
    %v1665 = vunpack.c.h.b16 %v566
    %v1666 = vunpack.c.l.b16 %v567
    %v1667 = vunpack.c.h.b16 %v567
    %v1668 = vunpack.c.l.b16 %v568
    %v1669 = vunpack.c.h.b16 %v568
    %v1670 = vunpack.c.l.b16 %v569
    %v1671 = vunpack.c.h.b16 %v569
    %v1672 = vunpack.c.l.b16 %v570
    %v1673 = vunpack.c.h.b16 %v570
    %v1674 = vunpack.c.l.b16 %v571
    %v1675 = vunpack.c.h.b16 %v571
    %v1676 = vunpack.c.l.b16 %v572
    %v1677 = vunpack.c.h.b16 %v572
    %v1678 = vunpack.c.l.b16 %v573
    %v1679 = vunpack.c.h.b16 %v573
    %v1680 = vunpack.c.l.b16 %v574
    %v1681 = vunpack.c.h.b16 %v574
    %v1682 = vunpack.c.l.b16 %v575
    %v1683 = vunpack.c.h.b16 %v575
    %v1684 = vunpack.c.l.b16 %v576
    %v1685 = vunpack.c.h.b16 %v576
    %v1686 = vunpack.c.l.b16 %v577
    %v1687 = vunpack.c.h.b16 %v577
    %v1688 = vunpack.c.l.b16 %v578
    %v1689 = vunpack.c.h.b16 %v578
    %v1690 = vunpack.c.l.b16 %v579
    %v1691 = vunpack.c.h.b16 %v579
    %v1692 = vunpack.c.l.b16 %v580
    %v1693 = vunpack.c.h.b16 %v580
    %v1694 = vunpack.c.l.b16 %v581
    %v1695 = vunpack.c.h.b16 %v581
    %v1696 = vunpack.c.l.b16 %v582
    %v1697 = vunpack.c.h.b16 %v582
    %v1698 = vunpack.c.l.b16 %v583
    %v1699 = vunpack.c.h.b16 %v583
    %v1700 = vunpack.c.l.b16 %v584
    %v1701 = vunpack.c.h.b16 %v584
    %v1702 = vunpack.c.l.b16 %v585
    %v1703 = vunpack.c.h.b16 %v585
    %v1704 = vunpack.c.l.b16 %v586
    %v1705 = vunpack.c.h.b16 %v586
    %v1706 = vunpack.c.l.b16 %v587
    %v1707 = vunpack.c.h.b16 %v587
    %v1708 = vunpack.c.l.b16 %v588
    %v1709 = vunpack.c.h.b16 %v588
    %v1710 = vunpack.c.l.b16 %v589
    %v1711 = vunpack.c.h.b16 %v589
    %v1712 = vunpack.c.l.b16 %v590
    %v1713 = vunpack.c.h.b16 %v590
    %v1714 = vunpack.c.l.b16 %v591
    %v1715 = vunpack.c.h.b16 %v591
    %v1716 = vunpack.c.l.b16 %v592
    %v1717 = vunpack.c.h.b16 %v592
    %v1718 = vunpack.c.l.b16 %v593
    %v1719 = vunpack.c.h.b16 %v593
    %v1720 = vunpack.c.l.b16 %v594
    %v1721 = vunpack.c.h.b16 %v594
    %v1722 = vunpack.c.l.b16 %v595
    %v1723 = vunpack.c.h.b16 %v595
    %v1724 = vunpack.c.l.b16 %v596
    %v1725 = vunpack.c.h.b16 %v596
    %v1726 = vunpack.c.l.b16 %v597
    %v1727 = vunpack.c.h.b16 %v597
    %v1728 = vunpack.c.l.b16 %v598
    %v1729 = vunpack.c.h.b16 %v598
    %v1730 = vunpack.c.l.b16 %v599
    %v1731 = vunpack.c.h.b16 %v599
    %v1732 = vunpack.c.l.b16 %v600
    %v1733 = vunpack.c.h.b16 %v600
    %v1734 = vunpack.c.l.b16 %v601
    %v1735 = vunpack.c.h.b16 %v601
    %v1736 = vunpack.c.l.b16 %v602
    %v1737 = vunpack.c.h.b16 %v602
    %v1738 = vunpack.c.l.b16 %v603
    %v1739 = vunpack.c.h.b16 %v603
    %v1740 = vunpack.c.l.b16 %v604
    %v1741 = vunpack.c.h.b16 %v604
    %v1742 = vunpack.c.l.b16 %v605
    %v1743 = vunpack.c.h.b16 %v605
    %v1744 = vunpack.c.l.b16 %v606
    %v1745 = vunpack.c.h.b16 %v606
    %v1746 = vunpack.c.l.b16 %v607
    %v1747 = vunpack.c.h.b16 %v607
    %v1748 = vunpack.c.l.b16 %v608
    %v1749 = vunpack.c.h.b16 %v608
    %v1750 = vunpack.c.l.b16 %v609
    %v1751 = vunpack.c.h.b16 %v609
    %v1752 = vunpack.c.l.b16 %v610
    %v1753 = vunpack.c.h.b16 %v610
    %v1754 = vunpack.c.l.b16 %v611
    %v1755 = vunpack.c.h.b16 %v611
    %v1756 = vunpack.c.l.b16 %v612
    %v1757 = vunpack.c.h.b16 %v612
    %v1758 = vunpack.c.l.b16 %v613
    %v1759 = vunpack.c.h.b16 %v613
    %v1760 = vunpack.c.l.b16 %v614
    %v1761 = vunpack.c.h.b16 %v614
    %v1762 = vunpack.c.l.b16 %v615
    %v1763 = vunpack.c.h.b16 %v615
    %v1764 = vunpack.c.l.b16 %v616
    %v1765 = vunpack.c.h.b16 %v616
    %v1766 = vunpack.c.l.b16 %v617
    %v1767 = vunpack.c.h.b16 %v617
    %v1768 = vunpack.c.l.b16 %v618
    %v1769 = vunpack.c.h.b16 %v618
    %v1770 = vunpack.c.l.b16 %v619
    %v1771 = vunpack.c.h.b16 %v619
    %v1772 = vunpack.c.l.b16 %v620
    %v1773 = vunpack.c.h.b16 %v620
    %v1774 = vunpack.c.l.b16 %v621
    %v1775 = vunpack.c.h.b16 %v621
    %v1776 = vunpack.c.l.b16 %v622
    %v1777 = vunpack.c.h.b16 %v622
    %v1778 = vunpack.c.l.b16 %v623
    %v1779 = vunpack.c.h.b16 %v623
    %v1780 = vunpack.c.l.b16 %v624
    %v1781 = vunpack.c.h.b16 %v624
    %v1782 = vunpack.c.l.b16 %v625
    %v1783 = vunpack.c.h.b16 %v625
    %v1784 = vunpack.c.l.b16 %v626
    %v1785 = vunpack.c.h.b16 %v626
    %v1786 = vunpack.c.l.b16 %v627
    %v1787 = vunpack.c.h.b16 %v627
    %v1788 = vunpack.c.l.b16 %v628
    %v1789 = vunpack.c.h.b16 %v628
    %v1790 = vunpack.c.l.b16 %v629
    %v1791 = vunpack.c.h.b16 %v629
    %v1792 = vunpack.c.l.b16 %v630
    %v1793 = vunpack.c.h.b16 %v630
    %v1794 = vunpack.c.l.b16 %v631
    %v1795 = vunpack.c.h.b16 %v631
    %v1796 = vunpack.c.l.b16 %v632
    %v1797 = vunpack.c.h.b16 %v632
    %v1798 = vunpack.c.l.b16 %v633
    %v1799 = vunpack.c.h.b16 %v633
    %v1800 = vunpack.c.l.b16 %v634
    %v1801 = vunpack.c.h.b16 %v634
    %v1802 = vunpack.c.l.b16 %v635
    %v1803 = vunpack.c.h.b16 %v635
    %v1804 = vunpack.c.l.b16 %v636
    %v1805 = vunpack.c.h.b16 %v636
    %v1806 = vunpack.c.l.b16 %v637
    %v1807 = vunpack.c.h.b16 %v637
    %v1808 = vunpack.c.l.b16 %v638
    %v1809 = vunpack.c.h.b16 %v638
    %v1810 = vunpack.c.l.b16 %v639
    %v1811 = vunpack.c.h.b16 %v639
    %v1812 = vunpack.c.l.b16 %v640
    %v1813 = vunpack.c.h.b16 %v640
    %v1814 = vunpack.c.l.b16 %v641
    %v1815 = vunpack.c.h.b16 %v641
    %v1816 = vunpack.c.l.b16 %v642
    %v1817 = vunpack.c.h.b16 %v642
    %v1818 = vunpack.c.l.b16 %v643
    %v1819 = vunpack.c.h.b16 %v643
    %v1820 = vunpack.c.l.b16 %v644
    %v1821 = vunpack.c.h.b16 %v644
    %v1822 = vunpack.c.l.b16 %v645
    %v1823 = vunpack.c.h.b16 %v645
    %v1824 = vunpack.c.l.b16 %v646
    %v1825 = vunpack.c.h.b16 %v646
    %v1826 = vunpack.c.l.b16 %v647
    %v1827 = vunpack.c.h.b16 %v647
    %v1828 = vunpack.c.l.b16 %v648
    %v1829 = vunpack.c.h.b16 %v648
    %v1830 = vunpack.c.l.b16 %v649
    %v1831 = vunpack.c.h.b16 %v649
    %v1832 = vunpack.c.l.b16 %v650
    %v1833 = vunpack.c.h.b16 %v650
    %v1834 = vunpack.c.l.b16 %v651
    %v1835 = vunpack.c.h.b16 %v651
    %v1836 = vunpack.c.l.b16 %v652
    %v1837 = vunpack.c.h.b16 %v652
    %v1838 = vunpack.c.l.b16 %v653
    %v1839 = vunpack.c.h.b16 %v653
    %v1840 = vunpack.c.l.b16 %v654
    %v1841 = vunpack.c.h.b16 %v654
    %v1842 = vunpack.c.l.b16 %v655
    %v1843 = vunpack.c.h.b16 %v655
    %v1844 = vunpack.c.l.b16 %v656
    %v1845 = vunpack.c.h.b16 %v656
    %v1846 = vunpack.c.l.b16 %v657
    %v1847 = vunpack.c.h.b16 %v657
    %v1848 = vunpack.c.l.b16 %v658
    %v1849 = vunpack.c.h.b16 %v658
    %v1850 = vunpack.c.l.b16 %v659
    %v1851 = vunpack.c.h.b16 %v659
    %v1852 = vunpack.c.l.b16 %v660
    %v1853 = vunpack.c.h.b16 %v660
    %v1854 = vunpack.c.l.b16 %v661
    %v1855 = vunpack.c.h.b16 %v661
    %v1856 = vpack.c.b16 %v1096, %v1088
    %v1857 = vpack.c.b16 %v1097, %v1089
    %v1858 = vpack.c.b16 %v1098, %v1090
    %v1859 = vpack.c.b16 %v1099, %v1091
    %v1860 = vpack.c.b16 %v1100, %v1092
    %v1861 = vpack.c.b16 %v1101, %v1093
    %v1862 = vpack.c.b16 %v1102, %v1094
    %v1863 = vpack.c.b16 %v1103, %v1095
    %v1864 = vpack.c.b16 %v1112, %v1104
    %v1865 = vpack.c.b16 %v1113, %v1105
    %v1866 = vpack.c.b16 %v1114, %v1106
    %v1867 = vpack.c.b16 %v1115, %v1107
    %v1868 = vpack.c.b16 %v1116, %v1108
    %v1869 = vpack.c.b16 %v1117, %v1109
    %v1870 = vpack.c.b16 %v1118, %v1110
    %v1871 = vpack.c.b16 %v1119, %v1111
    %v1872 = vpack.c.b16 %v1128, %v1120
    %v1873 = vpack.c.b16 %v1129, %v1121
    %v1874 = vpack.c.b16 %v1130, %v1122
    %v1875 = vpack.c.b16 %v1131, %v1123
    %v1876 = vpack.c.b16 %v1132, %v1124
    %v1877 = vpack.c.b16 %v1133, %v1125
    %v1878 = vpack.c.b16 %v1134, %v1126
    %v1879 = vpack.c.b16 %v1135, %v1127
    %v1880 = vpack.c.b16 %v1144, %v1136
    %v1881 = vpack.c.b16 %v1145, %v1137
    %v1882 = vpack.c.b16 %v1146, %v1138
    %v1883 = vpack.c.b16 %v1147, %v1139
    %v1884 = vpack.c.b16 %v1148, %v1140
    %v1885 = vpack.c.b16 %v1149, %v1141
    %v1886 = vpack.c.b16 %v1150, %v1142
    %v1887 = vpack.c.b16 %v1151, %v1143
    %v1888 = vpack.c.b16 %v1160, %v1152
    %v1889 = vpack.c.b16 %v1161, %v1153
    %v1890 = vpack.c.b16 %v1162, %v1154
    %v1891 = vpack.c.b16 %v1163, %v1155
    %v1892 = vpack.c.b16 %v1164, %v1156
    %v1893 = vpack.c.b16 %v1165, %v1157
    %v1894 = vpack.c.b16 %v1166, %v1158
    %v1895 = vpack.c.b16 %v1167, %v1159
    %v1896 = vpack.c.b16 %v1176, %v1168
    %v1897 = vpack.c.b16 %v1177, %v1169
    %v1898 = vpack.c.b16 %v1178, %v1170
    %v1899 = vpack.c.b16 %v1179, %v1171
    %v1900 = vpack.c.b16 %v1180, %v1172
    %v1901 = vpack.c.b16 %v1181, %v1173
    %v1902 = vpack.c.b16 %v1182, %v1174
    %v1903 = vpack.c.b16 %v1183, %v1175
    %v1904 = vpack.c.b16 %v1192, %v1184
    %v1905 = vpack.c.b16 %v1193, %v1185
    %v1906 = vpack.c.b16 %v1194, %v1186
    %v1907 = vpack.c.b16 %v1195, %v1187
    %v1908 = vpack.c.b16 %v1196, %v1188
    %v1909 = vpack.c.b16 %v1197, %v1189
    %v1910 = vpack.c.b16 %v1198, %v1190
    %v1911 = vpack.c.b16 %v1199, %v1191
    %v1912 = vpack.c.b16 %v1208, %v1200
    %v1913 = vpack.c.b16 %v1209, %v1201
    %v1914 = vpack.c.b16 %v1210, %v1202
    %v1915 = vpack.c.b16 %v1211, %v1203
    %v1916 = vpack.c.b16 %v1212, %v1204
    %v1917 = vpack.c.b16 %v1213, %v1205
    %v1918 = vpack.c.b16 %v1214, %v1206
    %v1919 = vpack.c.b16 %v1215, %v1207
    %v1920 = vpack.c.b16 %v1224, %v1216
    %v1921 = vpack.c.b16 %v1225, %v1217
    %v1922 = vpack.c.b16 %v1226, %v1218
    %v1923 = vpack.c.b16 %v1227, %v1219
    %v1924 = vpack.c.b16 %v1228, %v1220
    %v1925 = vpack.c.b16 %v1229, %v1221
    %v1926 = vpack.c.b16 %v1230, %v1222
    %v1927 = vpack.c.b16 %v1231, %v1223
    %v1928 = vpack.c.b16 %v1240, %v1232
    %v1929 = vpack.c.b16 %v1241, %v1233
    %v1930 = vpack.c.b16 %v1242, %v1234
    %v1931 = vpack.c.b16 %v1243, %v1235
    %v1932 = vpack.c.b16 %v1244, %v1236
    %v1933 = vpack.c.b16 %v1245, %v1237
    %v1934 = vpack.c.b16 %v1246, %v1238
    %v1935 = vpack.c.b16 %v1247, %v1239
    %v1936 = vpack.c.b16 %v1256, %v1248
    %v1937 = vpack.c.b16 %v1257, %v1249
    %v1938 = vpack.c.b16 %v1258, %v1250
    %v1939 = vpack.c.b16 %v1259, %v1251
    %v1940 = vpack.c.b16 %v1260, %v1252
    %v1941 = vpack.c.b16 %v1261, %v1253
    %v1942 = vpack.c.b16 %v1262, %v1254
    %v1943 = vpack.c.b16 %v1263, %v1255
    %v1944 = vpack.c.b16 %v1272, %v1264
    %v1945 = vpack.c.b16 %v1273, %v1265
    %v1946 = vpack.c.b16 %v1274, %v1266
    %v1947 = vpack.c.b16 %v1275, %v1267
    %v1948 = vpack.c.b16 %v1276, %v1268
    %v1949 = vpack.c.b16 %v1277, %v1269
    %v1950 = vpack.c.b16 %v1278, %v1270
    %v1951 = vpack.c.b16 %v1279, %v1271
    %v1952 = vpack.c.b16 %v1288, %v1280
    %v1953 = vpack.c.b16 %v1289, %v1281
    %v1954 = vpack.c.b16 %v1290, %v1282
    %v1955 = vpack.c.b16 %v1291, %v1283
    %v1956 = vpack.c.b16 %v1292, %v1284
    %v1957 = vpack.c.b16 %v1293, %v1285
    %v1958 = vpack.c.b16 %v1294, %v1286
    %v1959 = vpack.c.b16 %v1295, %v1287
    %v1960 = vpack.c.b16 %v1304, %v1296
    %v1961 = vpack.c.b16 %v1305, %v1297
    %v1962 = vpack.c.b16 %v1306, %v1298
    %v1963 = vpack.c.b16 %v1307, %v1299
    %v1964 = vpack.c.b16 %v1308, %v1300
    %v1965 = vpack.c.b16 %v1309, %v1301
    %v1966 = vpack.c.b16 %v1310, %v1302
    %v1967 = vpack.c.b16 %v1311, %v1303
    %v1968 = vpack.c.b16 %v1320, %v1312
    %v1969 = vpack.c.b16 %v1321, %v1313
    %v1970 = vpack.c.b16 %v1322, %v1314
    %v1971 = vpack.c.b16 %v1323, %v1315
    %v1972 = vpack.c.b16 %v1324, %v1316
    %v1973 = vpack.c.b16 %v1325, %v1317
    %v1974 = vpack.c.b16 %v1326, %v1318
    %v1975 = vpack.c.b16 %v1327, %v1319
    %v1976 = vpack.c.b16 %v1336, %v1328
    %v1977 = vpack.c.b16 %v1337, %v1329
    %v1978 = vpack.c.b16 %v1338, %v1330
    %v1979 = vpack.c.b16 %v1339, %v1331
    %v1980 = vpack.c.b16 %v1340, %v1332
    %v1981 = vpack.c.b16 %v1341, %v1333
    %v1982 = vpack.c.b16 %v1342, %v1334
    %v1983 = vpack.c.b16 %v1343, %v1335
    %v1984 = vpack.c.b16 %v1352, %v1344
    %v1985 = vpack.c.b16 %v1353, %v1345
    %v1986 = vpack.c.b16 %v1354, %v1346
    %v1987 = vpack.c.b16 %v1355, %v1347
    %v1988 = vpack.c.b16 %v1356, %v1348
    %v1989 = vpack.c.b16 %v1357, %v1349
    %v1990 = vpack.c.b16 %v1358, %v1350
    %v1991 = vpack.c.b16 %v1359, %v1351
    %v1992 = vpack.c.b16 %v1368, %v1360
    %v1993 = vpack.c.b16 %v1369, %v1361
    %v1994 = vpack.c.b16 %v1370, %v1362
    %v1995 = vpack.c.b16 %v1371, %v1363
    %v1996 = vpack.c.b16 %v1372, %v1364
    %v1997 = vpack.c.b16 %v1373, %v1365
    %v1998 = vpack.c.b16 %v1374, %v1366
    %v1999 = vpack.c.b16 %v1375, %v1367
    %v2000 = vpack.c.b16 %v1384, %v1376
    %v2001 = vpack.c.b16 %v1385, %v1377
    %v2002 = vpack.c.b16 %v1386, %v1378
    %v2003 = vpack.c.b16 %v1387, %v1379
    %v2004 = vpack.c.b16 %v1388, %v1380
    %v2005 = vpack.c.b16 %v1389, %v1381
    %v2006 = vpack.c.b16 %v1390, %v1382
    %v2007 = vpack.c.b16 %v1391, %v1383
    %v2008 = vpack.c.b16 %v1400, %v1392
    %v2009 = vpack.c.b16 %v1401, %v1393
    %v2010 = vpack.c.b16 %v1402, %v1394
    %v2011 = vpack.c.b16 %v1403, %v1395
    %v2012 = vpack.c.b16 %v1404, %v1396
    %v2013 = vpack.c.b16 %v1405, %v1397
    %v2014 = vpack.c.b16 %v1406, %v1398
    %v2015 = vpack.c.b16 %v1407, %v1399
    %v2016 = vpack.c.b16 %v1416, %v1408
    %v2017 = vpack.c.b16 %v1417, %v1409
    %v2018 = vpack.c.b16 %v1418, %v1410
    %v2019 = vpack.c.b16 %v1419, %v1411
    %v2020 = vpack.c.b16 %v1420, %v1412
    %v2021 = vpack.c.b16 %v1421, %v1413
    %v2022 = vpack.c.b16 %v1422, %v1414
    %v2023 = vpack.c.b16 %v1423, %v1415
    %v2024 = vpack.c.b16 %v1432, %v1424
    %v2025 = vpack.c.b16 %v1433, %v1425
    %v2026 = vpack.c.b16 %v1434, %v1426
    %v2027 = vpack.c.b16 %v1435, %v1427
    %v2028 = vpack.c.b16 %v1436, %v1428
    %v2029 = vpack.c.b16 %v1437, %v1429
    %v2030 = vpack.c.b16 %v1438, %v1430
    %v2031 = vpack.c.b16 %v1439, %v1431
    %v2032 = vpack.c.b16 %v1448, %v1440
    %v2033 = vpack.c.b16 %v1449, %v1441
    %v2034 = vpack.c.b16 %v1450, %v1442
    %v2035 = vpack.c.b16 %v1451, %v1443
    %v2036 = vpack.c.b16 %v1452, %v1444
    %v2037 = vpack.c.b16 %v1453, %v1445
    %v2038 = vpack.c.b16 %v1454, %v1446
    %v2039 = vpack.c.b16 %v1455, %v1447
    %v2040 = vpack.c.b16 %v1464, %v1456
    %v2041 = vpack.c.b16 %v1465, %v1457
    %v2042 = vpack.c.b16 %v1466, %v1458
    %v2043 = vpack.c.b16 %v1467, %v1459
    %v2044 = vpack.c.b16 %v1468, %v1460
    %v2045 = vpack.c.b16 %v1469, %v1461
    %v2046 = vpack.c.b16 %v1470, %v1462
    %v2047 = vpack.c.b16 %v1471, %v1463
    %v2048 = vpack.c.b16 %v1480, %v1472
    %v2049 = vpack.c.b16 %v1481, %v1473
    %v2050 = vpack.c.b16 %v1482, %v1474
    %v2051 = vpack.c.b16 %v1483, %v1475
    %v2052 = vpack.c.b16 %v1484, %v1476
    %v2053 = vpack.c.b16 %v1485, %v1477
    %v2054 = vpack.c.b16 %v1486, %v1478
    %v2055 = vpack.c.b16 %v1487, %v1479
    %v2056 = vpack.c.b16 %v1496, %v1488
    %v2057 = vpack.c.b16 %v1497, %v1489
    %v2058 = vpack.c.b16 %v1498, %v1490
    %v2059 = vpack.c.b16 %v1499, %v1491
    %v2060 = vpack.c.b16 %v1500, %v1492
    %v2061 = vpack.c.b16 %v1501, %v1493
    %v2062 = vpack.c.b16 %v1502, %v1494
    %v2063 = vpack.c.b16 %v1503, %v1495
    %v2064 = vpack.c.b16 %v1512, %v1504
    %v2065 = vpack.c.b16 %v1513, %v1505
    %v2066 = vpack.c.b16 %v1514, %v1506
    %v2067 = vpack.c.b16 %v1515, %v1507
    %v2068 = vpack.c.b16 %v1516, %v1508
    %v2069 = vpack.c.b16 %v1517, %v1509
    %v2070 = vpack.c.b16 %v1518, %v1510
    %v2071 = vpack.c.b16 %v1519, %v1511
    %v2072 = vpack.c.b16 %v1528, %v1520
    %v2073 = vpack.c.b16 %v1529, %v1521
    %v2074 = vpack.c.b16 %v1530, %v1522
    %v2075 = vpack.c.b16 %v1531, %v1523
    %v2076 = vpack.c.b16 %v1532, %v1524
    %v2077 = vpack.c.b16 %v1533, %v1525
    %v2078 = vpack.c.b16 %v1534, %v1526
    %v2079 = vpack.c.b16 %v1535, %v1527
    %v2080 = vpack.c.b16 %v1544, %v1536
    %v2081 = vpack.c.b16 %v1545, %v1537
    %v2082 = vpack.c.b16 %v1546, %v1538
    %v2083 = vpack.c.b16 %v1547, %v1539
    %v2084 = vpack.c.b16 %v1548, %v1540
    %v2085 = vpack.c.b16 %v1549, %v1541
    %v2086 = vpack.c.b16 %v1550, %v1542
    %v2087 = vpack.c.b16 %v1551, %v1543
    %v2088 = vpack.c.b16 %v1560, %v1552
    %v2089 = vpack.c.b16 %v1561, %v1553
    %v2090 = vpack.c.b16 %v1562, %v1554
    %v2091 = vpack.c.b16 %v1563, %v1555
    %v2092 = vpack.c.b16 %v1564, %v1556
    %v2093 = vpack.c.b16 %v1565, %v1557
    %v2094 = vpack.c.b16 %v1566, %v1558
    %v2095 = vpack.c.b16 %v1567, %v1559
    %v2096 = vpack.c.b16 %v1576, %v1568
    %v2097 = vpack.c.b16 %v1577, %v1569
    %v2098 = vpack.c.b16 %v1578, %v1570
    %v2099 = vpack.c.b16 %v1579, %v1571
    %v2100 = vpack.c.b16 %v1580, %v1572
    %v2101 = vpack.c.b16 %v1581, %v1573
    %v2102 = vpack.c.b16 %v1582, %v1574
    %v2103 = vpack.c.b16 %v1583, %v1575
    %v2104 = vpack.c.b16 %v1592, %v1584
    %v2105 = vpack.c.b16 %v1593, %v1585
    %v2106 = vpack.c.b16 %v1594, %v1586
    %v2107 = vpack.c.b16 %v1595, %v1587
    %v2108 = vpack.c.b16 %v1596, %v1588
    %v2109 = vpack.c.b16 %v1597, %v1589
    %v2110 = vpack.c.b16 %v1598, %v1590
    %v2111 = vpack.c.b16 %v1599, %v1591
    %v2112 = vpack.c.b16 %v1608, %v1600
    %v2113 = vpack.c.b16 %v1609, %v1601
    %v2114 = vpack.c.b16 %v1610, %v1602
    %v2115 = vpack.c.b16 %v1611, %v1603
    %v2116 = vpack.c.b16 %v1612, %v1604
    %v2117 = vpack.c.b16 %v1613, %v1605
    %v2118 = vpack.c.b16 %v1614, %v1606
    %v2119 = vpack.c.b16 %v1615, %v1607
    %v2120 = vpack.c.b16 %v1624, %v1616
    %v2121 = vpack.c.b16 %v1625, %v1617
    %v2122 = vpack.c.b16 %v1626, %v1618
    %v2123 = vpack.c.b16 %v1627, %v1619
    %v2124 = vpack.c.b16 %v1628, %v1620
    %v2125 = vpack.c.b16 %v1629, %v1621
    %v2126 = vpack.c.b16 %v1630, %v1622
    %v2127 = vpack.c.b16 %v1631, %v1623
    %v2128 = vpack.c.b16 %v1640, %v1632
    %v2129 = vpack.c.b16 %v1641, %v1633
    %v2130 = vpack.c.b16 %v1642, %v1634
    %v2131 = vpack.c.b16 %v1643, %v1635
    %v2132 = vpack.c.b16 %v1644, %v1636
    %v2133 = vpack.c.b16 %v1645, %v1637
    %v2134 = vpack.c.b16 %v1646, %v1638
    %v2135 = vpack.c.b16 %v1647, %v1639
    %v2136 = vpack.c.b16 %v1656, %v1648
    %v2137 = vpack.c.b16 %v1657, %v1649
    %v2138 = vpack.c.b16 %v1658, %v1650
    %v2139 = vpack.c.b16 %v1659, %v1651
    %v2140 = vpack.c.b16 %v1660, %v1652
    %v2141 = vpack.c.b16 %v1661, %v1653
    %v2142 = vpack.c.b16 %v1662, %v1654
    %v2143 = vpack.c.b16 %v1663, %v1655
    %v2144 = vpack.c.b16 %v1672, %v1664
    %v2145 = vpack.c.b16 %v1673, %v1665
    %v2146 = vpack.c.b16 %v1674, %v1666
    %v2147 = vpack.c.b16 %v1675, %v1667
    %v2148 = vpack.c.b16 %v1676, %v1668
    %v2149 = vpack.c.b16 %v1677, %v1669
    %v2150 = vpack.c.b16 %v1678, %v1670
    %v2151 = vpack.c.b16 %v1679, %v1671
    %v2152 = vpack.c.b16 %v1688, %v1680
    %v2153 = vpack.c.b16 %v1689, %v1681
    %v2154 = vpack.c.b16 %v1690, %v1682
    %v2155 = vpack.c.b16 %v1691, %v1683
    %v2156 = vpack.c.b16 %v1692, %v1684
    %v2157 = vpack.c.b16 %v1693, %v1685
    %v2158 = vpack.c.b16 %v1694, %v1686
    %v2159 = vpack.c.b16 %v1695, %v1687
    %v2160 = vpack.c.b16 %v1704, %v1696
    %v2161 = vpack.c.b16 %v1705, %v1697
    %v2162 = vpack.c.b16 %v1706, %v1698
    %v2163 = vpack.c.b16 %v1707, %v1699
    %v2164 = vpack.c.b16 %v1708, %v1700
    %v2165 = vpack.c.b16 %v1709, %v1701
    %v2166 = vpack.c.b16 %v1710, %v1702
    %v2167 = vpack.c.b16 %v1711, %v1703
    %v2168 = vpack.c.b16 %v1720, %v1712
    %v2169 = vpack.c.b16 %v1721, %v1713
    %v2170 = vpack.c.b16 %v1722, %v1714
    %v2171 = vpack.c.b16 %v1723, %v1715
    %v2172 = vpack.c.b16 %v1724, %v1716
    %v2173 = vpack.c.b16 %v1725, %v1717
    %v2174 = vpack.c.b16 %v1726, %v1718
    %v2175 = vpack.c.b16 %v1727, %v1719
    %v2176 = vpack.c.b16 %v1736, %v1728
    %v2177 = vpack.c.b16 %v1737, %v1729
    %v2178 = vpack.c.b16 %v1738, %v1730
    %v2179 = vpack.c.b16 %v1739, %v1731
    %v2180 = vpack.c.b16 %v1740, %v1732
    %v2181 = vpack.c.b16 %v1741, %v1733
    %v2182 = vpack.c.b16 %v1742, %v1734
    %v2183 = vpack.c.b16 %v1743, %v1735
    %v2184 = vpack.c.b16 %v1752, %v1744
    %v2185 = vpack.c.b16 %v1753, %v1745
    %v2186 = vpack.c.b16 %v1754, %v1746
    %v2187 = vpack.c.b16 %v1755, %v1747
    %v2188 = vpack.c.b16 %v1756, %v1748
    %v2189 = vpack.c.b16 %v1757, %v1749
    %v2190 = vpack.c.b16 %v1758, %v1750
    %v2191 = vpack.c.b16 %v1759, %v1751
    %v2192 = vpack.c.b16 %v1768, %v1760
    %v2193 = vpack.c.b16 %v1769, %v1761
    %v2194 = vpack.c.b16 %v1770, %v1762
    %v2195 = vpack.c.b16 %v1771, %v1763
    %v2196 = vpack.c.b16 %v1772, %v1764
    %v2197 = vpack.c.b16 %v1773, %v1765
    %v2198 = vpack.c.b16 %v1774, %v1766
    %v2199 = vpack.c.b16 %v1775, %v1767
    %v2200 = vpack.c.b16 %v1784, %v1776
    %v2201 = vpack.c.b16 %v1785, %v1777
    %v2202 = vpack.c.b16 %v1786, %v1778
    %v2203 = vpack.c.b16 %v1787, %v1779
    %v2204 = vpack.c.b16 %v1788, %v1780
    %v2205 = vpack.c.b16 %v1789, %v1781
    %v2206 = vpack.c.b16 %v1790, %v1782
    %v2207 = vpack.c.b16 %v1791, %v1783
    %v2208 = vpack.c.b16 %v1800, %v1792
    %v2209 = vpack.c.b16 %v1801, %v1793
    %v2210 = vpack.c.b16 %v1802, %v1794
    %v2211 = vpack.c.b16 %v1803, %v1795
    %v2212 = vpack.c.b16 %v1804, %v1796
    %v2213 = vpack.c.b16 %v1805, %v1797
    %v2214 = vpack.c.b16 %v1806, %v1798
    %v2215 = vpack.c.b16 %v1807, %v1799
    %v2216 = vpack.c.b16 %v1816, %v1808
    %v2217 = vpack.c.b16 %v1817, %v1809
    %v2218 = vpack.c.b16 %v1818, %v1810
    %v2219 = vpack.c.b16 %v1819, %v1811
    %v2220 = vpack.c.b16 %v1820, %v1812
    %v2221 = vpack.c.b16 %v1821, %v1813
    %v2222 = vpack.c.b16 %v1822, %v1814
    %v2223 = vpack.c.b16 %v1823, %v1815
    %v2224 = vpack.c.b16 %v1832, %v1824
    %v2225 = vpack.c.b16 %v1833, %v1825
    %v2226 = vpack.c.b16 %v1834, %v1826
    %v2227 = vpack.c.b16 %v1835, %v1827
    %v2228 = vpack.c.b16 %v1836, %v1828
    %v2229 = vpack.c.b16 %v1837, %v1829
    %v2230 = vpack.c.b16 %v1838, %v1830
    %v2231 = vpack.c.b16 %v1839, %v1831
    %v2232 = vpack.c.b16 %v1848, %v1840
    %v2233 = vpack.c.b16 %v1849, %v1841
    %v2234 = vpack.c.b16 %v1850, %v1842
    %v2235 = vpack.c.b16 %v1851, %v1843
    %v2236 = vpack.c.b16 %v1852, %v1844
    %v2237 = vpack.c.b16 %v1853, %v1845
    %v2238 = vpack.c.b16 %v1854, %v1846
    %v2239 = vpack.c.b16 %v1855, %v1847
    %2624 = vmatprep.subr.bf16.mxu0 %v1857
    %2625 = vmatpush1.bf16.msra.mxu0 %v1856
    %2626 = vmatprep.subr.bf16.mxu0 %v1865
    %2627 = vmatpush1.bf16.msra.mxu0 %v1864
    %2628 = vmatprep.subr.bf16.mxu0 %v1873
    %2629 = vmatpush1.bf16.msra.mxu0 %v1872
    %2630 = vmatprep.subr.bf16.mxu0 %v1881
    %2631 = vmatpush1.bf16.msra.mxu0 %v1880
    %2632 = vmatprep.subr.bf16.mxu0 %v1889
    %2633 = vmatpush1.bf16.msra.mxu0 %v1888
    %2634 = vmatprep.subr.bf16.mxu0 %v1897
    %2635 = vmatpush1.bf16.msra.mxu0 %v1896
    %2636 = vmatprep.subr.bf16.mxu0 %v1905
    %2637 = vmatpush1.bf16.msra.mxu0 %v1904
    %2638 = vmatprep.subr.bf16.mxu0 %v1913
    %2639 = vmatpush1.bf16.msra.mxu0 %v1912
    %2640 = vmatprep.subr.bf16.mxu0 %v1921
    %2641 = vmatpush1.bf16.msra.mxu0 %v1920
    %2642 = vmatprep.subr.bf16.mxu0 %v1929
    %2643 = vmatpush1.bf16.msra.mxu0 %v1928
    %2644 = vmatprep.subr.bf16.mxu0 %v1937
    %2645 = vmatpush1.bf16.msra.mxu0 %v1936
    %2646 = vmatprep.subr.bf16.mxu0 %v1945
    %2647 = vmatpush1.bf16.msra.mxu0 %v1944
    %2648 = vmatprep.subr.bf16.mxu0 %v1953
    %2649 = vmatpush1.bf16.msra.mxu0 %v1952
    %2650 = vmatprep.subr.bf16.mxu0 %v1961
    %2651 = vmatpush1.bf16.msra.mxu0 %v1960
    %2652 = vmatprep.subr.bf16.mxu0 %v1969
    %2653 = vmatpush1.bf16.msra.mxu0 %v1968
    %2654 = vmatprep.subr.bf16.mxu0 %v1977
    %2655 = vmatpush1.bf16.msra.mxu0 %v1976
    %2656 = vmatprep.mubr.bf16.mxu0 %v273
    %2657 = vmatmul.mubr.bf16.gmra.mrb[0].mxu0 %v272
    %v2658 = vpop.f32.mrb[0].mxu0
    %v2659 = vadd.f32 %v667, %v2658
    %v2660 = vpop.f32.mrb[0].mxu0
    %v2661 = vadd.f32 %v671, %v2660
    %v2662 = vpop.f32.mrb[0].mxu0
    %v2663 = vadd.f32 %v667, %v2662
    %v2664 = vpop.f32.mrb[0].mxu0
    %v2665 = vadd.f32 %v671, %v2664
    %2666 = vdwg.mxu0
    %2667 = vmatprep.subr.bf16.mxu0 %v1985
    %2668 = vmatpush1.bf16.msra.mxu0 %v1984
    %2669 = vmatprep.subr.bf16.mxu0 %v1993
    %2670 = vmatpush1.bf16.msra.mxu0 %v1992
    %2671 = vmatprep.subr.bf16.mxu0 %v2001
    %2672 = vmatpush1.bf16.msra.mxu0 %v2000
    %2673 = vmatprep.subr.bf16.mxu0 %v2009
    %2674 = vmatpush1.bf16.msra.mxu0 %v2008
    %2675 = vmatprep.subr.bf16.mxu0 %v2017
    %2676 = vmatpush1.bf16.msra.mxu0 %v2016
    %2677 = vmatprep.subr.bf16.mxu0 %v2025
    %2678 = vmatpush1.bf16.msra.mxu0 %v2024
    %2679 = vmatprep.subr.bf16.mxu0 %v2033
    %2680 = vmatpush1.bf16.msra.mxu0 %v2032
    %2681 = vmatprep.subr.bf16.mxu0 %v2041
    %2682 = vmatpush1.bf16.msra.mxu0 %v2040
    %2683 = vmatprep.subr.bf16.mxu0 %v2049
    %2684 = vmatpush1.bf16.msra.mxu0 %v2048
    %2685 = vmatprep.subr.bf16.mxu0 %v2057
    %2686 = vmatpush1.bf16.msra.mxu0 %v2056
    %2687 = vmatprep.subr.bf16.mxu0 %v2065
    %2688 = vmatpush1.bf16.msra.mxu0 %v2064
    %2689 = vmatprep.subr.bf16.mxu0 %v2073
    %2690 = vmatpush1.bf16.msra.mxu0 %v2072
    %2691 = vmatprep.subr.bf16.mxu0 %v2081
    %2692 = vmatpush1.bf16.msra.mxu0 %v2080
    %2693 = vmatprep.subr.bf16.mxu0 %v2089
    %2694 = vmatpush1.bf16.msra.mxu0 %v2088
    %2695 = vmatprep.subr.bf16.mxu0 %v2097
    %2696 = vmatpush1.bf16.msra.mxu0 %v2096
    %2697 = vmatprep.subr.bf16.mxu0 %v2105
    %2698 = vmatpush1.bf16.msra.mxu0 %v2104
    %2699 = vmatprep.mubr.bf16.mxu0 %v275
    %2700 = vmatmul.mubr.bf16.gmra.mrb[0].mxu0 %v274
    %v2701 = vpop.f32.mrb[0].mxu0
    %v2702 = vadd.f32 %v2659, %v2701
    %v2703 = vpop.f32.mrb[0].mxu0
    %v2704 = vadd.f32 %v2661, %v2703
    %v2705 = vpop.f32.mrb[0].mxu0
    %v2706 = vadd.f32 %v2663, %v2705
    %v2707 = vpop.f32.mrb[0].mxu0
    %v2708 = vadd.f32 %v2665, %v2707
    %2709 = vdwg.mxu0
    %2710 = vmatprep.subr.bf16.mxu0 %v2113
    %2711 = vmatpush1.bf16.msra.mxu0 %v2112
    %2712 = vmatprep.subr.bf16.mxu0 %v2121
    %2713 = vmatpush1.bf16.msra.mxu0 %v2120
    %2714 = vmatprep.subr.bf16.mxu0 %v2129
    %2715 = vmatpush1.bf16.msra.mxu0 %v2128
    %2716 = vmatprep.subr.bf16.mxu0 %v2137
    %2717 = vmatpush1.bf16.msra.mxu0 %v2136
    %2718 = vmatprep.subr.bf16.mxu0 %v2145
    %2719 = vmatpush1.bf16.msra.mxu0 %v2144
    %2720 = vmatprep.subr.bf16.mxu0 %v2153
    %2721 = vmatpush1.bf16.msra.mxu0 %v2152
    %2722 = vmatprep.subr.bf16.mxu0 %v2161
    %2723 = vmatpush1.bf16.msra.mxu0 %v2160
    %2724 = vmatprep.subr.bf16.mxu0 %v2169
    %2725 = vmatpush1.bf16.msra.mxu0 %v2168
    %2726 = vmatprep.subr.bf16.mxu0 %v2177
    %2727 = vmatpush1.bf16.msra.mxu0 %v2176
    %2728 = vmatprep.subr.bf16.mxu0 %v2185
    %2729 = vmatpush1.bf16.msra.mxu0 %v2184
    %2730 = vmatprep.subr.bf16.mxu0 %v2193
    %2731 = vmatpush1.bf16.msra.mxu0 %v2192
    %2732 = vmatprep.subr.bf16.mxu0 %v2201
    %2733 = vmatpush1.bf16.msra.mxu0 %v2200
    %2734 = vmatprep.subr.bf16.mxu0 %v2209
    %2735 = vmatpush1.bf16.msra.mxu0 %v2208
    %2736 = vmatprep.subr.bf16.mxu0 %v2217
    %2737 = vmatpush1.bf16.msra.mxu0 %v2216
    %2738 = vmatprep.subr.bf16.mxu0 %v2225
    %2739 = vmatpush1.bf16.msra.mxu0 %v2224
    %2740 = vmatprep.subr.bf16.mxu0 %v2233
    %2741 = vmatpush1.bf16.msra.mxu0 %v2232
    %2742 = vmatprep.mubr.bf16.mxu0 %v277
    %2743 = vmatmul.mubr.bf16.gmra.mrb[0].mxu0 %v276
    %v2744 = vpop.f32.mrb[0].mxu0
    %v2745 = vadd.f32 %v2702, %v2744
    %v2746 = vpop.f32.mrb[0].mxu0
    %v2747 = vadd.f32 %v2704, %v2746
    %v2748 = vpop.f32.mrb[0].mxu0
    %v2749 = vadd.f32 %v2706, %v2748
    %v2750 = vpop.f32.mrb[0].mxu0
    %v2751 = vadd.f32 %v2708, %v2750
    %2752 = vdwg.mxu0
    %2753 = vmatprep.subr.bf16.mxu0 %v1859
    %2754 = vmatpush1.bf16.msra.mxu0 %v1858
    %2755 = vmatprep.subr.bf16.mxu0 %v1867
    %2756 = vmatpush1.bf16.msra.mxu0 %v1866
    %2757 = vmatprep.subr.bf16.mxu0 %v1875
    %2758 = vmatpush1.bf16.msra.mxu0 %v1874
    %2759 = vmatprep.subr.bf16.mxu0 %v1883
    %2760 = vmatpush1.bf16.msra.mxu0 %v1882
    %2761 = vmatprep.subr.bf16.mxu0 %v1891
    %2762 = vmatpush1.bf16.msra.mxu0 %v1890
    %2763 = vmatprep.subr.bf16.mxu0 %v1899
    %2764 = vmatpush1.bf16.msra.mxu0 %v1898
    %2765 = vmatprep.subr.bf16.mxu0 %v1907
    %2766 = vmatpush1.bf16.msra.mxu0 %v1906
    %2767 = vmatprep.subr.bf16.mxu0 %v1915
    %2768 = vmatpush1.bf16.msra.mxu0 %v1914
    %2769 = vmatprep.subr.bf16.mxu0 %v1923
    %2770 = vmatpush1.bf16.msra.mxu0 %v1922
    %2771 = vmatprep.subr.bf16.mxu0 %v1931
    %2772 = vmatpush1.bf16.msra.mxu0 %v1930
    %2773 = vmatprep.subr.bf16.mxu0 %v1939
    %2774 = vmatpush1.bf16.msra.mxu0 %v1938
    %2775 = vmatprep.subr.bf16.mxu0 %v1947
    %2776 = vmatpush1.bf16.msra.mxu0 %v1946
    %2777 = vmatprep.subr.bf16.mxu0 %v1955
    %2778 = vmatpush1.bf16.msra.mxu0 %v1954
    %2779 = vmatprep.subr.bf16.mxu0 %v1963
    %2780 = vmatpush1.bf16.msra.mxu0 %v1962
    %2781 = vmatprep.subr.bf16.mxu0 %v1971
    %2782 = vmatpush1.bf16.msra.mxu0 %v1970
    %2783 = vmatprep.subr.bf16.mxu0 %v1979
    %2784 = vmatpush1.bf16.msra.mxu0 %v1978
    %2785 = vmatprep.mubr.bf16.mxu0 %v273
    %2786 = vmatmul.mubr.bf16.gmra.mrb[0].mxu0 %v272
    %v2787 = vpop.f32.mrb[0].mxu0
    %v2788 = vadd.f32 %v675, %v2787
    %v2789 = vpop.f32.mrb[0].mxu0
    %v2790 = vadd.f32 %v679, %v2789
    %v2791 = vpop.f32.mrb[0].mxu0
    %v2792 = vadd.f32 %v675, %v2791
    %v2793 = vpop.f32.mrb[0].mxu0
    %v2794 = vadd.f32 %v679, %v2793
    %2795 = vdwg.mxu0
    %2796 = vmatprep.subr.bf16.mxu0 %v1987
    %2797 = vmatpush1.bf16.msra.mxu0 %v1986
    %2798 = vmatprep.subr.bf16.mxu0 %v1995
    %2799 = vmatpush1.bf16.msra.mxu0 %v1994
    %2800 = vmatprep.subr.bf16.mxu0 %v2003
    %2801 = vmatpush1.bf16.msra.mxu0 %v2002
    %2802 = vmatprep.subr.bf16.mxu0 %v2011
    %2803 = vmatpush1.bf16.msra.mxu0 %v2010
    %2804 = vmatprep.subr.bf16.mxu0 %v2019
    %2805 = vmatpush1.bf16.msra.mxu0 %v2018
    %2806 = vmatprep.subr.bf16.mxu0 %v2027
    %2807 = vmatpush1.bf16.msra.mxu0 %v2026
    %2808 = vmatprep.subr.bf16.mxu0 %v2035
    %2809 = vmatpush1.bf16.msra.mxu0 %v2034
    %2810 = vmatprep.subr.bf16.mxu0 %v2043
    %2811 = vmatpush1.bf16.msra.mxu0 %v2042
    %2812 = vmatprep.subr.bf16.mxu0 %v2051
    %2813 = vmatpush1.bf16.msra.mxu0 %v2050
    %2814 = vmatprep.subr.bf16.mxu0 %v2059
    %2815 = vmatpush1.bf16.msra.mxu0 %v2058
    %2816 = vmatprep.subr.bf16.mxu0 %v2067
    %2817 = vmatpush1.bf16.msra.mxu0 %v2066
    %2818 = vmatprep.subr.bf16.mxu0 %v2075
    %2819 = vmatpush1.bf16.msra.mxu0 %v2074
    %2820 = vmatprep.subr.bf16.mxu0 %v2083
    %2821 = vmatpush1.bf16.msra.mxu0 %v2082
    %2822 = vmatprep.subr.bf16.mxu0 %v2091
    %2823 = vmatpush1.bf16.msra.mxu0 %v2090
    %2824 = vmatprep.subr.bf16.mxu0 %v2099
    %2825 = vmatpush1.bf16.msra.mxu0 %v2098
    %2826 = vmatprep.subr.bf16.mxu0 %v2107
    %2827 = vmatpush1.bf16.msra.mxu0 %v2106
    %2828 = vmatprep.mubr.bf16.mxu0 %v275
    %2829 = vmatmul.mubr.bf16.gmra.mrb[0].mxu0 %v274
    %v2830 = vpop.f32.mrb[0].mxu0
    %v2831 = vadd.f32 %v2788, %v2830
    %v2832 = vpop.f32.mrb[0].mxu0
    %v2833 = vadd.f32 %v2790, %v2832
    %v2834 = vpop.f32.mrb[0].mxu0
    %v2835 = vadd.f32 %v2792, %v2834
    %v2836 = vpop.f32.mrb[0].mxu0
    %v2837 = vadd.f32 %v2794, %v2836
    %2838 = vdwg.mxu0
    %2839 = vmatprep.subr.bf16.mxu0 %v2115
    %2840 = vmatpush1.bf16.msra.mxu0 %v2114
    %2841 = vmatprep.subr.bf16.mxu0 %v2123
    %2842 = vmatpush1.bf16.msra.mxu0 %v2122
    %2843 = vmatprep.subr.bf16.mxu0 %v2131
    %2844 = vmatpush1.bf16.msra.mxu0 %v2130
    %2845 = vmatprep.subr.bf16.mxu0 %v2139
    %2846 = vmatpush1.bf16.msra.mxu0 %v2138
    %2847 = vmatprep.subr.bf16.mxu0 %v2147
    %2848 = vmatpush1.bf16.msra.mxu0 %v2146
    %2849 = vmatprep.subr.bf16.mxu0 %v2155
    %2850 = vmatpush1.bf16.msra.mxu0 %v2154
    %2851 = vmatprep.subr.bf16.mxu0 %v2163
    %2852 = vmatpush1.bf16.msra.mxu0 %v2162
    %2853 = vmatprep.subr.bf16.mxu0 %v2171
    %2854 = vmatpush1.bf16.msra.mxu0 %v2170
    %2855 = vmatprep.subr.bf16.mxu0 %v2179
    %2856 = vmatpush1.bf16.msra.mxu0 %v2178
    %2857 = vmatprep.subr.bf16.mxu0 %v2187
    %2858 = vmatpush1.bf16.msra.mxu0 %v2186
    %2859 = vmatprep.subr.bf16.mxu0 %v2195
    %2860 = vmatpush1.bf16.msra.mxu0 %v2194
    %2861 = vmatprep.subr.bf16.mxu0 %v2203
    %2862 = vmatpush1.bf16.msra.mxu0 %v2202
    %2863 = vmatprep.subr.bf16.mxu0 %v2211
    %2864 = vmatpush1.bf16.msra.mxu0 %v2210
    %2865 = vmatprep.subr.bf16.mxu0 %v2219
    %2866 = vmatpush1.bf16.msra.mxu0 %v2218
    %2867 = vmatprep.subr.bf16.mxu0 %v2227
    %2868 = vmatpush1.bf16.msra.mxu0 %v2226
    %2869 = vmatprep.subr.bf16.mxu0 %v2235
    %2870 = vmatpush1.bf16.msra.mxu0 %v2234
    %2871 = vmatprep.mubr.bf16.mxu0 %v277
    %2872 = vmatmul.mubr.bf16.gmra.mrb[0].mxu0 %v276
    %v2873 = vpop.f32.mrb[0].mxu0
    %v2874 = vadd.f32 %v2831, %v2873
    %v2875 = vpop.f32.mrb[0].mxu0
    %v2876 = vadd.f32 %v2833, %v2875
    %v2877 = vpop.f32.mrb[0].mxu0
    %v2878 = vadd.f32 %v2835, %v2877
    %v2879 = vpop.f32.mrb[0].mxu0
    %v2880 = vadd.f32 %v2837, %v2879
    %2881 = vdwg.mxu0
    %2882 = vmatprep.subr.bf16.mxu0 %v1861
    %2883 = vmatpush1.bf16.msra.mxu0 %v1860
    %2884 = vmatprep.subr.bf16.mxu0 %v1869
    %2885 = vmatpush1.bf16.msra.mxu0 %v1868
    %2886 = vmatprep.subr.bf16.mxu0 %v1877
    %2887 = vmatpush1.bf16.msra.mxu0 %v1876
    %2888 = vmatprep.subr.bf16.mxu0 %v1885
    %2889 = vmatpush1.bf16.msra.mxu0 %v1884
    %2890 = vmatprep.subr.bf16.mxu0 %v1893
    %2891 = vmatpush1.bf16.msra.mxu0 %v1892
    %2892 = vmatprep.subr.bf16.mxu0 %v1901
    %2893 = vmatpush1.bf16.msra.mxu0 %v1900
    %2894 = vmatprep.subr.bf16.mxu0 %v1909
    %2895 = vmatpush1.bf16.msra.mxu0 %v1908
    %2896 = vmatprep.subr.bf16.mxu0 %v1917
    %2897 = vmatpush1.bf16.msra.mxu0 %v1916
    %2898 = vmatprep.subr.bf16.mxu0 %v1925
    %2899 = vmatpush1.bf16.msra.mxu0 %v1924
    %2900 = vmatprep.subr.bf16.mxu0 %v1933
    %2901 = vmatpush1.bf16.msra.mxu0 %v1932
    %2902 = vmatprep.subr.bf16.mxu0 %v1941
    %2903 = vmatpush1.bf16.msra.mxu0 %v1940
    %2904 = vmatprep.subr.bf16.mxu0 %v1949
    %2905 = vmatpush1.bf16.msra.mxu0 %v1948
    %2906 = vmatprep.subr.bf16.mxu0 %v1957
    %2907 = vmatpush1.bf16.msra.mxu0 %v1956
    %2908 = vmatprep.subr.bf16.mxu0 %v1965
    %2909 = vmatpush1.bf16.msra.mxu0 %v1964
    %2910 = vmatprep.subr.bf16.mxu0 %v1973
    %2911 = vmatpush1.bf16.msra.mxu0 %v1972
    %2912 = vmatprep.subr.bf16.mxu0 %v1981
    %2913 = vmatpush1.bf16.msra.mxu0 %v1980
    %2914 = vmatprep.mubr.bf16.mxu0 %v273
    %2915 = vmatmul.mubr.bf16.gmra.mrb[0].mxu0 %v272
    %v2916 = vpop.f32.mrb[0].mxu0
    %v2917 = vadd.f32 %v683, %v2916
    %v2918 = vpop.f32.mrb[0].mxu0
    %v2919 = vadd.f32 %v687, %v2918
    %v2920 = vpop.f32.mrb[0].mxu0
    %v2921 = vadd.f32 %v683, %v2920
    %v2922 = vpop.f32.mrb[0].mxu0
    %v2923 = vadd.f32 %v687, %v2922
    %2924 = vdwg.mxu0
    %2925 = vmatprep.subr.bf16.mxu0 %v1989
    %2926 = vmatpush1.bf16.msra.mxu0 %v1988
    %2927 = vmatprep.subr.bf16.mxu0 %v1997
    %2928 = vmatpush1.bf16.msra.mxu0 %v1996
    %2929 = vmatprep.subr.bf16.mxu0 %v2005
    %2930 = vmatpush1.bf16.msra.mxu0 %v2004
    %2931 = vmatprep.subr.bf16.mxu0 %v2013
    %2932 = vmatpush1.bf16.msra.mxu0 %v2012
    %2933 = vmatprep.subr.bf16.mxu0 %v2021
    %2934 = vmatpush1.bf16.msra.mxu0 %v2020
    %2935 = vmatprep.subr.bf16.mxu0 %v2029
    %2936 = vmatpush1.bf16.msra.mxu0 %v2028
    %2937 = vmatprep.subr.bf16.mxu0 %v2037
    %2938 = vmatpush1.bf16.msra.mxu0 %v2036
    %2939 = vmatprep.subr.bf16.mxu0 %v2045
    %2940 = vmatpush1.bf16.msra.mxu0 %v2044
    %2941 = vmatprep.subr.bf16.mxu0 %v2053
    %2942 = vmatpush1.bf16.msra.mxu0 %v2052
    %2943 = vmatprep.subr.bf16.mxu0 %v2061
    %2944 = vmatpush1.bf16.msra.mxu0 %v2060
    %2945 = vmatprep.subr.bf16.mxu0 %v2069
    %2946 = vmatpush1.bf16.msra.mxu0 %v2068
    %2947 = vmatprep.subr.bf16.mxu0 %v2077
    %2948 = vmatpush1.bf16.msra.mxu0 %v2076
    %2949 = vmatprep.subr.bf16.mxu0 %v2085
    %2950 = vmatpush1.bf16.msra.mxu0 %v2084
    %2951 = vmatprep.subr.bf16.mxu0 %v2093
    %2952 = vmatpush1.bf16.msra.mxu0 %v2092
    %2953 = vmatprep.subr.bf16.mxu0 %v2101
    %2954 = vmatpush1.bf16.msra.mxu0 %v2100
    %2955 = vmatprep.subr.bf16.mxu0 %v2109
    %2956 = vmatpush1.bf16.msra.mxu0 %v2108
    %2957 = vmatprep.mubr.bf16.mxu0 %v275
    %2958 = vmatmul.mubr.bf16.gmra.mrb[0].mxu0 %v274
    %v2959 = vpop.f32.mrb[0].mxu0
    %v2960 = vadd.f32 %v2917, %v2959
    %v2961 = vpop.f32.mrb[0].mxu0
    %v2962 = vadd.f32 %v2919, %v2961
    %v2963 = vpop.f32.mrb[0].mxu0
    %v2964 = vadd.f32 %v2921, %v2963
    %v2965 = vpop.f32.mrb[0].mxu0
    %v2966 = vadd.f32 %v2923, %v2965
    %2967 = vdwg.mxu0
    %2968 = vmatprep.subr.bf16.mxu0 %v2117
    %2969 = vmatpush1.bf16.msra.mxu0 %v2116
    %2970 = vmatprep.subr.bf16.mxu0 %v2125
    %2971 = vmatpush1.bf16.msra.mxu0 %v2124
    %2972 = vmatprep.subr.bf16.mxu0 %v2133
    %2973 = vmatpush1.bf16.msra.mxu0 %v2132
    %2974 = vmatprep.subr.bf16.mxu0 %v2141
    %2975 = vmatpush1.bf16.msra.mxu0 %v2140
    %2976 = vmatprep.subr.bf16.mxu0 %v2149
    %2977 = vmatpush1.bf16.msra.mxu0 %v2148
    %2978 = vmatprep.subr.bf16.mxu0 %v2157
    %2979 = vmatpush1.bf16.msra.mxu0 %v2156
    %2980 = vmatprep.subr.bf16.mxu0 %v2165
    %2981 = vmatpush1.bf16.msra.mxu0 %v2164
    %2982 = vmatprep.subr.bf16.mxu0 %v2173
    %2983 = vmatpush1.bf16.msra.mxu0 %v2172
    %2984 = vmatprep.subr.bf16.mxu0 %v2181
    %2985 = vmatpush1.bf16.msra.mxu0 %v2180
    %2986 = vmatprep.subr.bf16.mxu0 %v2189
    %2987 = vmatpush1.bf16.msra.mxu0 %v2188
    %2988 = vmatprep.subr.bf16.mxu0 %v2197
    %2989 = vmatpush1.bf16.msra.mxu0 %v2196
    %2990 = vmatprep.subr.bf16.mxu0 %v2205
    %2991 = vmatpush1.bf16.msra.mxu0 %v2204
    %2992 = vmatprep.subr.bf16.mxu0 %v2213
    %2993 = vmatpush1.bf16.msra.mxu0 %v2212
    %2994 = vmatprep.subr.bf16.mxu0 %v2221
    %2995 = vmatpush1.bf16.msra.mxu0 %v2220
    %2996 = vmatprep.subr.bf16.mxu0 %v2229
    %2997 = vmatpush1.bf16.msra.mxu0 %v2228
    %2998 = vmatprep.subr.bf16.mxu0 %v2237
    %2999 = vmatpush1.bf16.msra.mxu0 %v2236
    %3000 = vmatprep.mubr.bf16.mxu0 %v277
    %3001 = vmatmul.mubr.bf16.gmra.mrb[0].mxu0 %v276
    %v3002 = vpop.f32.mrb[0].mxu0
    %v3003 = vadd.f32 %v2960, %v3002
    %v3004 = vpop.f32.mrb[0].mxu0
    %v3005 = vadd.f32 %v2962, %v3004
    %v3006 = vpop.f32.mrb[0].mxu0
    %v3007 = vadd.f32 %v2964, %v3006
    %v3008 = vpop.f32.mrb[0].mxu0
    %v3009 = vadd.f32 %v2966, %v3008
    %3010 = vdwg.mxu0
    %3011 = vmatprep.subr.bf16.mxu0 %v1863
    %3012 = vmatpush1.bf16.msra.mxu0 %v1862
    %3013 = vmatprep.subr.bf16.mxu0 %v1871
    %3014 = vmatpush1.bf16.msra.mxu0 %v1870
    %3015 = vmatprep.subr.bf16.mxu0 %v1879
    %3016 = vmatpush1.bf16.msra.mxu0 %v1878
    %3017 = vmatprep.subr.bf16.mxu0 %v1887
    %3018 = vmatpush1.bf16.msra.mxu0 %v1886
    %3019 = vmatprep.subr.bf16.mxu0 %v1895
    %3020 = vmatpush1.bf16.msra.mxu0 %v1894
    %3021 = vmatprep.subr.bf16.mxu0 %v1903
    %3022 = vmatpush1.bf16.msra.mxu0 %v1902
    %3023 = vmatprep.subr.bf16.mxu0 %v1911
    %3024 = vmatpush1.bf16.msra.mxu0 %v1910
    %3025 = vmatprep.subr.bf16.mxu0 %v1919
    %3026 = vmatpush1.bf16.msra.mxu0 %v1918
    %3027 = vmatprep.subr.bf16.mxu0 %v1927
    %3028 = vmatpush1.bf16.msra.mxu0 %v1926
    %3029 = vmatprep.subr.bf16.mxu0 %v1935
    %3030 = vmatpush1.bf16.msra.mxu0 %v1934
    %3031 = vmatprep.subr.bf16.mxu0 %v1943
    %3032 = vmatpush1.bf16.msra.mxu0 %v1942
    %3033 = vmatprep.subr.bf16.mxu0 %v1951
    %3034 = vmatpush1.bf16.msra.mxu0 %v1950
    %3035 = vmatprep.subr.bf16.mxu0 %v1959
    %3036 = vmatpush1.bf16.msra.mxu0 %v1958
    %3037 = vmatprep.subr.bf16.mxu0 %v1967
    %3038 = vmatpush1.bf16.msra.mxu0 %v1966
    %3039 = vmatprep.subr.bf16.mxu0 %v1975
    %3040 = vmatpush1.bf16.msra.mxu0 %v1974
    %3041 = vmatprep.subr.bf16.mxu0 %v1983
    %3042 = vmatpush1.bf16.msra.mxu0 %v1982
    %3043 = vmatprep.mubr.bf16.mxu0 %v273
    %3044 = vmatmul.mubr.bf16.gmra.mrb[0].mxu0 %v272
    %v3045 = vpop.f32.mrb[0].mxu0
    %v3046 = vadd.f32 %v691, %v3045
    %v3047 = vpop.f32.mrb[0].mxu0
    %v3048 = vadd.f32 %v695, %v3047
    %v3049 = vpop.f32.mrb[0].mxu0
    %v3050 = vadd.f32 %v691, %v3049
    %v3051 = vpop.f32.mrb[0].mxu0
    %v3052 = vadd.f32 %v695, %v3051
    %3053 = vdwg.mxu0
    %3054 = vmatprep.subr.bf16.mxu0 %v1991
    %3055 = vmatpush1.bf16.msra.mxu0 %v1990
    %3056 = vmatprep.subr.bf16.mxu0 %v1999
    %3057 = vmatpush1.bf16.msra.mxu0 %v1998
    %3058 = vmatprep.subr.bf16.mxu0 %v2007
    %3059 = vmatpush1.bf16.msra.mxu0 %v2006
    %3060 = vmatprep.subr.bf16.mxu0 %v2015
    %3061 = vmatpush1.bf16.msra.mxu0 %v2014
    %3062 = vmatprep.subr.bf16.mxu0 %v2023
    %3063 = vmatpush1.bf16.msra.mxu0 %v2022
    %3064 = vmatprep.subr.bf16.mxu0 %v2031
    %3065 = vmatpush1.bf16.msra.mxu0 %v2030
    %3066 = vmatprep.subr.bf16.mxu0 %v2039
    %3067 = vmatpush1.bf16.msra.mxu0 %v2038
    %3068 = vmatprep.subr.bf16.mxu0 %v2047
    %3069 = vmatpush1.bf16.msra.mxu0 %v2046
    %3070 = vmatprep.subr.bf16.mxu0 %v2055
    %3071 = vmatpush1.bf16.msra.mxu0 %v2054
    %3072 = vmatprep.subr.bf16.mxu0 %v2063
    %3073 = vmatpush1.bf16.msra.mxu0 %v2062
    %3074 = vmatprep.subr.bf16.mxu0 %v2071
    %3075 = vmatpush1.bf16.msra.mxu0 %v2070
    %3076 = vmatprep.subr.bf16.mxu0 %v2079
    %3077 = vmatpush1.bf16.msra.mxu0 %v2078
    %3078 = vmatprep.subr.bf16.mxu0 %v2087
    %3079 = vmatpush1.bf16.msra.mxu0 %v2086
    %3080 = vmatprep.subr.bf16.mxu0 %v2095
    %3081 = vmatpush1.bf16.msra.mxu0 %v2094
    %3082 = vmatprep.subr.bf16.mxu0 %v2103
    %3083 = vmatpush1.bf16.msra.mxu0 %v2102
    %3084 = vmatprep.subr.bf16.mxu0 %v2111
    %3085 = vmatpush1.bf16.msra.mxu0 %v2110
    %3086 = vmatprep.mubr.bf16.mxu0 %v275
    %3087 = vmatmul.mubr.bf16.gmra.mrb[0].mxu0 %v274
    %v3088 = vpop.f32.mrb[0].mxu0
    %v3089 = vadd.f32 %v3046, %v3088
    %v3090 = vpop.f32.mrb[0].mxu0
    %v3091 = vadd.f32 %v3048, %v3090
    %v3092 = vpop.f32.mrb[0].mxu0
    %v3093 = vadd.f32 %v3050, %v3092
    %v3094 = vpop.f32.mrb[0].mxu0
    %v3095 = vadd.f32 %v3052, %v3094
    %3096 = vdwg.mxu0
    %3097 = vmatprep.subr.bf16.mxu0 %v2119
    %3098 = vmatpush1.bf16.msra.mxu0 %v2118
    %3099 = vmatprep.subr.bf16.mxu0 %v2127
    %3100 = vmatpush1.bf16.msra.mxu0 %v2126
    %3101 = vmatprep.subr.bf16.mxu0 %v2135
    %3102 = vmatpush1.bf16.msra.mxu0 %v2134
    %3103 = vmatprep.subr.bf16.mxu0 %v2143
    %3104 = vmatpush1.bf16.msra.mxu0 %v2142
    %3105 = vmatprep.subr.bf16.mxu0 %v2151
    %3106 = vmatpush1.bf16.msra.mxu0 %v2150
    %3107 = vmatprep.subr.bf16.mxu0 %v2159
    %3108 = vmatpush1.bf16.msra.mxu0 %v2158
    %3109 = vmatprep.subr.bf16.mxu0 %v2167
    %3110 = vmatpush1.bf16.msra.mxu0 %v2166
    %3111 = vmatprep.subr.bf16.mxu0 %v2175
    %3112 = vmatpush1.bf16.msra.mxu0 %v2174
    %3113 = vmatprep.subr.bf16.mxu0 %v2183
    %3114 = vmatpush1.bf16.msra.mxu0 %v2182
    %3115 = vmatprep.subr.bf16.mxu0 %v2191
    %3116 = vmatpush1.bf16.msra.mxu0 %v2190
    %3117 = vmatprep.subr.bf16.mxu0 %v2199
    %3118 = vmatpush1.bf16.msra.mxu0 %v2198
    %3119 = vmatprep.subr.bf16.mxu0 %v2207
    %3120 = vmatpush1.bf16.msra.mxu0 %v2206
    %3121 = vmatprep.subr.bf16.mxu0 %v2215
    %3122 = vmatpush1.bf16.msra.mxu0 %v2214
    %3123 = vmatprep.subr.bf16.mxu0 %v2223
    %3124 = vmatpush1.bf16.msra.mxu0 %v2222
    %3125 = vmatprep.subr.bf16.mxu0 %v2231
    %3126 = vmatpush1.bf16.msra.mxu0 %v2230
    %3127 = vmatprep.subr.bf16.mxu0 %v2239
    %3128 = vmatpush1.bf16.msra.mxu0 %v2238
    %3129 = vmatprep.mubr.bf16.mxu0 %v277
    %3130 = vmatmul.mubr.bf16.gmra.mrb[0].mxu0 %v276
    %v3131 = vpop.f32.mrb[0].mxu0
    %v3132 = vadd.f32 %v3089, %v3131
    %v3133 = vpop.f32.mrb[0].mxu0
    %v3134 = vadd.f32 %v3091, %v3133
    %v3135 = vpop.f32.mrb[0].mxu0
    %v3136 = vadd.f32 %v3093, %v3135
    %v3137 = vpop.f32.mrb[0].mxu0
    %v3138 = vadd.f32 %v3095, %v3137
    %3139 = vdwg.mxu0
    %v3140 = vld [vmem:[#allocation10] sm:$0xf]
    %v3141 = vpack.c.bf16 %v2749, %v2745
    %v3142 = vpack.c.bf16 %v2751, %v2747
    %v3143 = vpack.c.bf16 %v2878, %v2874
    %v3144 = vpack.c.bf16 %v2880, %v2876
    %v3145 = vpack.c.bf16 %v3007, %v3003
    %v3146 = vpack.c.bf16 %v3009, %v3005
    %v3147 = vpack.c.bf16 %v3136, %v3132
    %v3148 = vpack.c.bf16 %v3138, %v3134
    %v3149 = vld [vmem:[#allocation8] sm:$0xf]
    %v3150 = vld [vmem:[#allocation8 + $0x4] sm:$0xf]
    %v3151 = vld [vmem:[#allocation8 + $0x8] sm:$0xf]
    %v3152 = vld [vmem:[#allocation8 + $0xc] sm:$0xf]
    %v3153 = vld [vmem:[#allocation8 + $0x10] sm:$0xf]
    %v3154 = vld [vmem:[#allocation8 + $0x14] sm:$0xf]
    %v3155 = vld [vmem:[#allocation8 + $0x18] sm:$0xf]
    %v3156 = vld [vmem:[#allocation8 + $0x1c] sm:$0xf]
    %v3157 = vld [vmem:[#allocation8 + $0x20] sm:$0xf]
    %v3158 = vld [vmem:[#allocation8 + $0x24] sm:$0xf]
    %v3159 = vld [vmem:[#allocation8 + $0x28] sm:$0xf]
    %v3160 = vld [vmem:[#allocation8 + $0x2c] sm:$0xf]
    %v3161 = vld [vmem:[#allocation8 + $0x30] sm:$0xf]
    %v3162 = vld [vmem:[#allocation8 + $0x34] sm:$0xf]
    %v3163 = vld [vmem:[#allocation8 + $0x38] sm:$0xf]
    %v3164 = vld [vmem:[#allocation8 + $0x3c] sm:$0xf]
    %v3165 = vld [vmem:[#allocation8 + $0x40] sm:$0xf]
    %v3166 = vld [vmem:[#allocation8 + $0x44] sm:$0xf]
    %v3167 = vld [vmem:[#allocation8 + $0x48] sm:$0xf]
    %v3168 = vld [vmem:[#allocation8 + $0x4c] sm:$0xf]
    %v3169 = vld [vmem:[#allocation8 + $0x50] sm:$0xf]
    %v3170 = vld [vmem:[#allocation8 + $0x54] sm:$0xf]
    %v3171 = vld [vmem:[#allocation8 + $0x58] sm:$0xf]
    %v3172 = vld [vmem:[#allocation8 + $0x5c] sm:$0xf]
    %v3173 = vld [vmem:[#allocation8 + $0x60] sm:$0xf]
    %v3174 = vld [vmem:[#allocation8 + $0x64] sm:$0xf]
    %v3175 = vld [vmem:[#allocation8 + $0x68] sm:$0xf]
    %v3176 = vld [vmem:[#allocation8 + $0x6c] sm:$0xf]
    %v3177 = vld [vmem:[#allocation8 + $0x70] sm:$0xf]
    %v3178 = vld [vmem:[#allocation8 + $0x74] sm:$0xf]
    %v3179 = vld [vmem:[#allocation8 + $0x78] sm:$0xf]
    %v3180 = vld [vmem:[#allocation8 + $0x7c] sm:$0xf]
    %v3181 = vld [vmem:[#allocation8 + $0x80] sm:$0xf]
    %v3182 = vld [vmem:[#allocation8 + $0x84] sm:$0xf]
    %v3183 = vld [vmem:[#allocation8 + $0x88] sm:$0xf]
    %v3184 = vld [vmem:[#allocation8 + $0x8c] sm:$0xf]
    %v3185 = vld [vmem:[#allocation8 + $0x90] sm:$0xf]
    %v3186 = vld [vmem:[#allocation8 + $0x94] sm:$0xf]
    %v3187 = vld [vmem:[#allocation8 + $0x98] sm:$0xf]
    %v3188 = vld [vmem:[#allocation8 + $0x9c] sm:$0xf]
    %v3189 = vld [vmem:[#allocation8 + $0xa0] sm:$0xf]
    %v3190 = vld [vmem:[#allocation8 + $0xa4] sm:$0xf]
    %v3191 = vld [vmem:[#allocation8 + $0xa8] sm:$0xf]
    %v3192 = vld [vmem:[#allocation8 + $0xac] sm:$0xf]
    %v3193 = vld [vmem:[#allocation8 + $0xb0] sm:$0xf]
    %v3194 = vld [vmem:[#allocation8 + $0xb4] sm:$0xf]
    %v3195 = vld [vmem:[#allocation8 + $0xb8] sm:$0xf]
    %v3196 = vld [vmem:[#allocation8 + $0xbc] sm:$0xf]
    %v3197 = vld [vmem:[#allocation8 + $0xc0] sm:$0xf]
    %v3198 = vld [vmem:[#allocation8 + $0xc4] sm:$0xf]
    %v3199 = vld [vmem:[#allocation8 + $0xc8] sm:$0xf]
    %v3200 = vld [vmem:[#allocation8 + $0xcc] sm:$0xf]
    %v3201 = vld [vmem:[#allocation8 + $0xd0] sm:$0xf]
    %v3202 = vld [vmem:[#allocation8 + $0xd4] sm:$0xf]
    %v3203 = vld [vmem:[#allocation8 + $0xd8] sm:$0xf]
    %v3204 = vld [vmem:[#allocation8 + $0xdc] sm:$0xf]
    %v3205 = vld [vmem:[#allocation8 + $0xe0] sm:$0xf]
    %v3206 = vld [vmem:[#allocation8 + $0xe4] sm:$0xf]
    %v3207 = vld [vmem:[#allocation8 + $0xe8] sm:$0xf]
    %v3208 = vld [vmem:[#allocation8 + $0xec] sm:$0xf]
    %v3209 = vld [vmem:[#allocation8 + $0xf0] sm:$0xf]
    %v3210 = vld [vmem:[#allocation8 + $0xf4] sm:$0xf]
    %v3211 = vld [vmem:[#allocation8 + $0xf8] sm:$0xf]
    %v3212 = vld [vmem:[#allocation8 + $0xfc] sm:$0xf]
    %v3213 = vld [vmem:[#allocation8 + $0x100] sm:$0xf]
    %v3214 = vld [vmem:[#allocation8 + $0x104] sm:$0xf]
    %v3215 = vld [vmem:[#allocation8 + $0x108] sm:$0xf]
    %v3216 = vld [vmem:[#allocation8 + $0x10c] sm:$0xf]
    %v3217 = vld [vmem:[#allocation8 + $0x110] sm:$0xf]
    %v3218 = vld [vmem:[#allocation8 + $0x114] sm:$0xf]
    %v3219 = vld [vmem:[#allocation8 + $0x118] sm:$0xf]
    %v3220 = vld [vmem:[#allocation8 + $0x11c] sm:$0xf]
    %v3221 = vld [vmem:[#allocation8 + $0x120] sm:$0xf]
    %v3222 = vld [vmem:[#allocation8 + $0x124] sm:$0xf]
    %v3223 = vld [vmem:[#allocation8 + $0x128] sm:$0xf]
    %v3224 = vld [vmem:[#allocation8 + $0x12c] sm:$0xf]
    %v3225 = vld [vmem:[#allocation8 + $0x130] sm:$0xf]
    %v3226 = vld [vmem:[#allocation8 + $0x134] sm:$0xf]
    %v3227 = vld [vmem:[#allocation8 + $0x138] sm:$0xf]
    %v3228 = vld [vmem:[#allocation8 + $0x13c] sm:$0xf]
    %v3229 = vld [vmem:[#allocation8 + $0x140] sm:$0xf]
    %v3230 = vld [vmem:[#allocation8 + $0x144] sm:$0xf]
    %v3231 = vld [vmem:[#allocation8 + $0x148] sm:$0xf]
    %v3232 = vld [vmem:[#allocation8 + $0x14c] sm:$0xf]
    %v3233 = vld [vmem:[#allocation8 + $0x150] sm:$0xf]
    %v3234 = vld [vmem:[#allocation8 + $0x154] sm:$0xf]
    %v3235 = vld [vmem:[#allocation8 + $0x158] sm:$0xf]
    %v3236 = vld [vmem:[#allocation8 + $0x15c] sm:$0xf]
    %v3237 = vld [vmem:[#allocation8 + $0x160] sm:$0xf]
    %v3238 = vld [vmem:[#allocation8 + $0x164] sm:$0xf]
    %v3239 = vld [vmem:[#allocation8 + $0x168] sm:$0xf]
    %v3240 = vld [vmem:[#allocation8 + $0x16c] sm:$0xf]
    %v3241 = vld [vmem:[#allocation8 + $0x170] sm:$0xf]
    %v3242 = vld [vmem:[#allocation8 + $0x174] sm:$0xf]
    %v3243 = vld [vmem:[#allocation8 + $0x178] sm:$0xf]
    %v3244 = vld [vmem:[#allocation8 + $0x17c] sm:$0xf]
    %v3245 = vld [vmem:[#allocation8 + $0x180] sm:$0xf]
    %v3246 = vld [vmem:[#allocation8 + $0x184] sm:$0xf]
    %v3247 = vld [vmem:[#allocation8 + $0x188] sm:$0xf]
    %v3248 = vld [vmem:[#allocation8 + $0x18c] sm:$0xf]
    %v3249 = vld [vmem:[#allocation8 + $0x190] sm:$0xf]
    %v3250 = vld [vmem:[#allocation8 + $0x194] sm:$0xf]
    %v3251 = vld [vmem:[#allocation8 + $0x198] sm:$0xf]
    %v3252 = vld [vmem:[#allocation8 + $0x19c] sm:$0xf]
    %v3253 = vld [vmem:[#allocation8 + $0x1a0] sm:$0xf]
    %v3254 = vld [vmem:[#allocation8 + $0x1a4] sm:$0xf]
    %v3255 = vld [vmem:[#allocation8 + $0x1a8] sm:$0xf]
    %v3256 = vld [vmem:[#allocation8 + $0x1ac] sm:$0xf]
    %v3257 = vld [vmem:[#allocation8 + $0x1b0] sm:$0xf]
    %v3258 = vld [vmem:[#allocation8 + $0x1b4] sm:$0xf]
    %v3259 = vld [vmem:[#allocation8 + $0x1b8] sm:$0xf]
    %v3260 = vld [vmem:[#allocation8 + $0x1bc] sm:$0xf]
    %v3261 = vld [vmem:[#allocation8 + $0x1c0] sm:$0xf]
    %v3262 = vld [vmem:[#allocation8 + $0x1c4] sm:$0xf]
    %v3263 = vld [vmem:[#allocation8 + $0x1c8] sm:$0xf]
    %v3264 = vld [vmem:[#allocation8 + $0x1cc] sm:$0xf]
    %v3265 = vld [vmem:[#allocation8 + $0x1d0] sm:$0xf]
    %v3266 = vld [vmem:[#allocation8 + $0x1d4] sm:$0xf]
    %v3267 = vld [vmem:[#allocation8 + $0x1d8] sm:$0xf]
    %v3268 = vld [vmem:[#allocation8 + $0x1dc] sm:$0xf]
    %v3269 = vld [vmem:[#allocation8 + $0x1e0] sm:$0xf]
    %v3270 = vld [vmem:[#allocation8 + $0x1e4] sm:$0xf]
    %v3271 = vld [vmem:[#allocation8 + $0x1e8] sm:$0xf]
    %v3272 = vld [vmem:[#allocation8 + $0x1ec] sm:$0xf]
    %v3273 = vld [vmem:[#allocation8 + $0x1f0] sm:$0xf]
    %v3274 = vld [vmem:[#allocation8 + $0x1f4] sm:$0xf]
    %v3275 = vld [vmem:[#allocation8 + $0x1f8] sm:$0xf]
    %v3276 = vld [vmem:[#allocation8 + $0x1fc] sm:$0xf]
    %v3277 = vlaneseq
    %v3278 = vshrl.u32 %v3277, 7
    %v3279 = vsub.s32 0, %v3278
    %v3280 = vrot.slane %v3140, %v3279
    %v3409 = vunpack.c.l.b16 %v3149
    %v3410 = vunpack.c.l.b16 %v3150
    %v3411 = vunpack.c.l.b16 %v3151
    %v3412 = vunpack.c.l.b16 %v3152
    %v3413 = vunpack.c.l.b16 %v3153
    %v3414 = vunpack.c.l.b16 %v3154
    %v3415 = vunpack.c.l.b16 %v3155
    %v3416 = vunpack.c.l.b16 %v3156
    %v3417 = vunpack.c.l.b16 %v3157
    %v3418 = vunpack.c.l.b16 %v3158
    %v3419 = vunpack.c.l.b16 %v3159
    %v3420 = vunpack.c.l.b16 %v3160
    %v3421 = vunpack.c.l.b16 %v3161
    %v3422 = vunpack.c.l.b16 %v3162
    %v3423 = vunpack.c.l.b16 %v3163
    %v3424 = vunpack.c.l.b16 %v3164
    %v3425 = vunpack.c.l.b16 %v3165
    %v3426 = vunpack.c.l.b16 %v3166
    %v3427 = vunpack.c.l.b16 %v3167
    %v3428 = vunpack.c.l.b16 %v3168
    %v3429 = vunpack.c.l.b16 %v3169
    %v3430 = vunpack.c.l.b16 %v3170
    %v3431 = vunpack.c.l.b16 %v3171
    %v3432 = vunpack.c.l.b16 %v3172
    %v3433 = vunpack.c.l.b16 %v3173
    %v3434 = vunpack.c.l.b16 %v3174
    %v3435 = vunpack.c.l.b16 %v3175
    %v3436 = vunpack.c.l.b16 %v3176
    %v3437 = vunpack.c.l.b16 %v3177
    %v3438 = vunpack.c.l.b16 %v3178
    %v3439 = vunpack.c.l.b16 %v3179
    %v3440 = vunpack.c.l.b16 %v3180
    %v3441 = vunpack.c.l.b16 %v3181
    %v3442 = vunpack.c.l.b16 %v3182
    %v3443 = vunpack.c.l.b16 %v3183
    %v3444 = vunpack.c.l.b16 %v3184
    %v3445 = vunpack.c.l.b16 %v3185
    %v3446 = vunpack.c.l.b16 %v3186
    %v3447 = vunpack.c.l.b16 %v3187
    %v3448 = vunpack.c.l.b16 %v3188
    %v3449 = vunpack.c.l.b16 %v3189
    %v3450 = vunpack.c.l.b16 %v3190
    %v3451 = vunpack.c.l.b16 %v3191
    %v3452 = vunpack.c.l.b16 %v3192
    %v3453 = vunpack.c.l.b16 %v3193
    %v3454 = vunpack.c.l.b16 %v3194
    %v3455 = vunpack.c.l.b16 %v3195
    %v3456 = vunpack.c.l.b16 %v3196
    %v3457 = vunpack.c.l.b16 %v3197
    %v3458 = vunpack.c.l.b16 %v3198
    %v3459 = vunpack.c.l.b16 %v3199
    %v3460 = vunpack.c.l.b16 %v3200
    %v3461 = vunpack.c.l.b16 %v3201
    %v3462 = vunpack.c.l.b16 %v3202
    %v3463 = vunpack.c.l.b16 %v3203
    %v3464 = vunpack.c.l.b16 %v3204
    %v3465 = vunpack.c.l.b16 %v3205
    %v3466 = vunpack.c.l.b16 %v3206
    %v3467 = vunpack.c.l.b16 %v3207
    %v3468 = vunpack.c.l.b16 %v3208
    %v3469 = vunpack.c.l.b16 %v3209
    %v3470 = vunpack.c.l.b16 %v3210
    %v3471 = vunpack.c.l.b16 %v3211
    %v3472 = vunpack.c.l.b16 %v3212
    %v3473 = vunpack.c.l.b16 %v3213
    %v3474 = vunpack.c.l.b16 %v3214
    %v3475 = vunpack.c.l.b16 %v3215
    %v3476 = vunpack.c.l.b16 %v3216
    %v3477 = vunpack.c.l.b16 %v3217
    %v3478 = vunpack.c.l.b16 %v3218
    %v3479 = vunpack.c.l.b16 %v3219
    %v3480 = vunpack.c.l.b16 %v3220
    %v3481 = vunpack.c.l.b16 %v3221
    %v3482 = vunpack.c.l.b16 %v3222
    %v3483 = vunpack.c.l.b16 %v3223
    %v3484 = vunpack.c.l.b16 %v3224
    %v3485 = vunpack.c.l.b16 %v3225
    %v3486 = vunpack.c.l.b16 %v3226
    %v3487 = vunpack.c.l.b16 %v3227
    %v3488 = vunpack.c.l.b16 %v3228
    %v3489 = vunpack.c.l.b16 %v3229
    %v3490 = vunpack.c.l.b16 %v3230
    %v3491 = vunpack.c.l.b16 %v3231
    %v3492 = vunpack.c.l.b16 %v3232
    %v3493 = vunpack.c.l.b16 %v3233
    %v3494 = vunpack.c.l.b16 %v3234
    %v3495 = vunpack.c.l.b16 %v3235
    %v3496 = vunpack.c.l.b16 %v3236
    %v3497 = vunpack.c.l.b16 %v3237
    %v3498 = vunpack.c.l.b16 %v3238
    %v3499 = vunpack.c.l.b16 %v3239
    %v3500 = vunpack.c.l.b16 %v3240
    %v3501 = vunpack.c.l.b16 %v3241
    %v3502 = vunpack.c.l.b16 %v3242
    %v3503 = vunpack.c.l.b16 %v3243
    %v3504 = vunpack.c.l.b16 %v3244
    %v3505 = vunpack.c.l.b16 %v3245
    %v3506 = vunpack.c.l.b16 %v3246
    %v3507 = vunpack.c.l.b16 %v3247
    %v3508 = vunpack.c.l.b16 %v3248
    %v3509 = vunpack.c.l.b16 %v3249
    %v3510 = vunpack.c.l.b16 %v3250
    %v3511 = vunpack.c.l.b16 %v3251
    %v3512 = vunpack.c.l.b16 %v3252
    %v3513 = vunpack.c.l.b16 %v3253
    %v3514 = vunpack.c.l.b16 %v3254
    %v3515 = vunpack.c.l.b16 %v3255
    %v3516 = vunpack.c.l.b16 %v3256
    %v3517 = vunpack.c.l.b16 %v3257
    %v3518 = vunpack.c.l.b16 %v3258
    %v3519 = vunpack.c.l.b16 %v3259
    %v3520 = vunpack.c.l.b16 %v3260
    %v3521 = vunpack.c.l.b16 %v3261
    %v3522 = vunpack.c.l.b16 %v3262
    %v3523 = vunpack.c.l.b16 %v3263
    %v3524 = vunpack.c.l.b16 %v3264
    %v3525 = vunpack.c.l.b16 %v3265
    %v3526 = vunpack.c.l.b16 %v3266
    %v3527 = vunpack.c.l.b16 %v3267
    %v3528 = vunpack.c.l.b16 %v3268
    %v3529 = vunpack.c.l.b16 %v3269
    %v3530 = vunpack.c.l.b16 %v3270
    %v3531 = vunpack.c.l.b16 %v3271
    %v3532 = vunpack.c.l.b16 %v3272
    %v3533 = vunpack.c.l.b16 %v3273
    %v3534 = vunpack.c.l.b16 %v3274
    %v3535 = vunpack.c.l.b16 %v3275
    %v3536 = vunpack.c.l.b16 %v3276
    %v3537 = vpack.c.b16 %v3410, %v3409
    %v3538 = vpack.c.b16 %v3412, %v3411
    %v3539 = vpack.c.b16 %v3414, %v3413
    %v3540 = vpack.c.b16 %v3416, %v3415
    %v3541 = vpack.c.b16 %v3418, %v3417
    %v3542 = vpack.c.b16 %v3420, %v3419
    %v3543 = vpack.c.b16 %v3422, %v3421
    %v3544 = vpack.c.b16 %v3424, %v3423
    %v3545 = vpack.c.b16 %v3426, %v3425
    %v3546 = vpack.c.b16 %v3428, %v3427
    %v3547 = vpack.c.b16 %v3430, %v3429
    %v3548 = vpack.c.b16 %v3432, %v3431
    %v3549 = vpack.c.b16 %v3434, %v3433
    %v3550 = vpack.c.b16 %v3436, %v3435
    %v3551 = vpack.c.b16 %v3438, %v3437
    %v3552 = vpack.c.b16 %v3440, %v3439
    %v3553 = vpack.c.b16 %v3442, %v3441
    %v3554 = vpack.c.b16 %v3444, %v3443
    %v3555 = vpack.c.b16 %v3446, %v3445
    %v3556 = vpack.c.b16 %v3448, %v3447
    %v3557 = vpack.c.b16 %v3450, %v3449
    %v3558 = vpack.c.b16 %v3452, %v3451
    %v3559 = vpack.c.b16 %v3454, %v3453
    %v3560 = vpack.c.b16 %v3456, %v3455
    %v3561 = vpack.c.b16 %v3458, %v3457
    %v3562 = vpack.c.b16 %v3460, %v3459
    %v3563 = vpack.c.b16 %v3462, %v3461
    %v3564 = vpack.c.b16 %v3464, %v3463
    %v3565 = vpack.c.b16 %v3466, %v3465
    %v3566 = vpack.c.b16 %v3468, %v3467
    %v3567 = vpack.c.b16 %v3470, %v3469
    %v3568 = vpack.c.b16 %v3472, %v3471
    %v3569 = vpack.c.b16 %v3474, %v3473
    %v3570 = vpack.c.b16 %v3476, %v3475
    %v3571 = vpack.c.b16 %v3478, %v3477
    %v3572 = vpack.c.b16 %v3480, %v3479
    %v3573 = vpack.c.b16 %v3482, %v3481
    %v3574 = vpack.c.b16 %v3484, %v3483
    %v3575 = vpack.c.b16 %v3486, %v3485
    %v3576 = vpack.c.b16 %v3488, %v3487
    %v3577 = vpack.c.b16 %v3490, %v3489
    %v3578 = vpack.c.b16 %v3492, %v3491
    %v3579 = vpack.c.b16 %v3494, %v3493
    %v3580 = vpack.c.b16 %v3496, %v3495
    %v3581 = vpack.c.b16 %v3498, %v3497
    %v3582 = vpack.c.b16 %v3500, %v3499
    %v3583 = vpack.c.b16 %v3502, %v3501
    %v3584 = vpack.c.b16 %v3504, %v3503
    %v3585 = vpack.c.b16 %v3506, %v3505
    %v3586 = vpack.c.b16 %v3508, %v3507
    %v3587 = vpack.c.b16 %v3510, %v3509
    %v3588 = vpack.c.b16 %v3512, %v3511
    %v3589 = vpack.c.b16 %v3514, %v3513
    %v3590 = vpack.c.b16 %v3516, %v3515
    %v3591 = vpack.c.b16 %v3518, %v3517
    %v3592 = vpack.c.b16 %v3520, %v3519
    %v3593 = vpack.c.b16 %v3522, %v3521
    %v3594 = vpack.c.b16 %v3524, %v3523
    %v3595 = vpack.c.b16 %v3526, %v3525
    %v3596 = vpack.c.b16 %v3528, %v3527
    %v3597 = vpack.c.b16 %v3530, %v3529
    %v3598 = vpack.c.b16 %v3532, %v3531
    %v3599 = vpack.c.b16 %v3534, %v3533
    %v3600 = vpack.c.b16 %v3536, %v3535
    %3665 = vmatprep.subr.bf16.mxu0 0
    %3666 = vmatpush1.bf16.msra.mxu0 %v3537
    %3667 = vmatprep.subr.bf16.mxu0 0
    %3668 = vmatpush1.bf16.msra.mxu0 %v3538
    %3669 = vmatprep.subr.bf16.mxu0 0
    %3670 = vmatpush1.bf16.msra.mxu0 %v3539
    %3671 = vmatprep.subr.bf16.mxu0 0
    %3672 = vmatpush1.bf16.msra.mxu0 %v3540
    %3673 = vmatprep.subr.bf16.mxu0 0
    %3674 = vmatpush1.bf16.msra.mxu0 %v3541
    %3675 = vmatprep.subr.bf16.mxu0 0
    %3676 = vmatpush1.bf16.msra.mxu0 %v3542
    %3677 = vmatprep.subr.bf16.mxu0 0
    %3678 = vmatpush1.bf16.msra.mxu0 %v3543
    %3679 = vmatprep.subr.bf16.mxu0 0
    %3680 = vmatpush1.bf16.msra.mxu0 %v3544
    %3681 = vmatprep.subr.bf16.mxu0 0
    %3682 = vmatpush1.bf16.msra.mxu0 %v3545
    %3683 = vmatprep.subr.bf16.mxu0 0
    %3684 = vmatpush1.bf16.msra.mxu0 %v3546
    %3685 = vmatprep.subr.bf16.mxu0 0
    %3686 = vmatpush1.bf16.msra.mxu0 %v3547
    %3687 = vmatprep.subr.bf16.mxu0 0
    %3688 = vmatpush1.bf16.msra.mxu0 %v3548
    %3689 = vmatprep.subr.bf16.mxu0 0
    %3690 = vmatpush1.bf16.msra.mxu0 %v3549
    %3691 = vmatprep.subr.bf16.mxu0 0
    %3692 = vmatpush1.bf16.msra.mxu0 %v3550
    %3693 = vmatprep.subr.bf16.mxu0 0
    %3694 = vmatpush1.bf16.msra.mxu0 %v3551
    %3695 = vmatprep.subr.bf16.mxu0 0
    %3696 = vmatpush1.bf16.msra.mxu0 %v3552
    %3697 = vmatprep.mubr.bf16.mxu0 %v3142
    %3698 = vmatmul.mubr.bf16.gmra.mrb[0].mxu0 %v3141
    %v3699 = vpop.f32.mrb[0].mxu0
    %v3700 = vadd.f32 %v3280, %v3699
    %v3701 = vpop.f32.mrb[0].mxu0
    %v3702 = vpop.f32.mrb[0].mxu0
    %v3703 = vadd.f32 %v3280, %v3702
    %v3704 = vpop.f32.mrb[0].mxu0
    %3705 = vdwg.mxu0
    %3706 = vmatprep.subr.bf16.mxu0 0
    %3707 = vmatpush1.bf16.msra.mxu0 %v3553
    %3708 = vmatprep.subr.bf16.mxu0 0
    %3709 = vmatpush1.bf16.msra.mxu0 %v3554
    %3710 = vmatprep.subr.bf16.mxu0 0
    %3711 = vmatpush1.bf16.msra.mxu0 %v3555
    %3712 = vmatprep.subr.bf16.mxu0 0
    %3713 = vmatpush1.bf16.msra.mxu0 %v3556
    %3714 = vmatprep.subr.bf16.mxu0 0
    %3715 = vmatpush1.bf16.msra.mxu0 %v3557
    %3716 = vmatprep.subr.bf16.mxu0 0
    %3717 = vmatpush1.bf16.msra.mxu0 %v3558
    %3718 = vmatprep.subr.bf16.mxu0 0
    %3719 = vmatpush1.bf16.msra.mxu0 %v3559
    %3720 = vmatprep.subr.bf16.mxu0 0
    %3721 = vmatpush1.bf16.msra.mxu0 %v3560
    %3722 = vmatprep.subr.bf16.mxu0 0
    %3723 = vmatpush1.bf16.msra.mxu0 %v3561
    %3724 = vmatprep.subr.bf16.mxu0 0
    %3725 = vmatpush1.bf16.msra.mxu0 %v3562
    %3726 = vmatprep.subr.bf16.mxu0 0
    %3727 = vmatpush1.bf16.msra.mxu0 %v3563
    %3728 = vmatprep.subr.bf16.mxu0 0
    %3729 = vmatpush1.bf16.msra.mxu0 %v3564
    %3730 = vmatprep.subr.bf16.mxu0 0
    %3731 = vmatpush1.bf16.msra.mxu0 %v3565
    %3732 = vmatprep.subr.bf16.mxu0 0
    %3733 = vmatpush1.bf16.msra.mxu0 %v3566
    %3734 = vmatprep.subr.bf16.mxu0 0
    %3735 = vmatpush1.bf16.msra.mxu0 %v3567
    %3736 = vmatprep.subr.bf16.mxu0 0
    %3737 = vmatpush1.bf16.msra.mxu0 %v3568
    %3738 = vmatprep.mubr.bf16.mxu0 %v3144
    %3739 = vmatmul.mubr.bf16.gmra.mrb[0].mxu0 %v3143
    %v3740 = vpop.f32.mrb[0].mxu0
    %v3741 = vadd.f32 %v3700, %v3740
    %v3742 = vpop.f32.mrb[0].mxu0
    %v3743 = vpop.f32.mrb[0].mxu0
    %v3744 = vadd.f32 %v3703, %v3743
    %v3745 = vpop.f32.mrb[0].mxu0
    %3746 = vdwg.mxu0
    %3747 = vmatprep.subr.bf16.mxu0 0
    %3748 = vmatpush1.bf16.msra.mxu0 %v3569
    %3749 = vmatprep.subr.bf16.mxu0 0
    %3750 = vmatpush1.bf16.msra.mxu0 %v3570
    %3751 = vmatprep.subr.bf16.mxu0 0
    %3752 = vmatpush1.bf16.msra.mxu0 %v3571
    %3753 = vmatprep.subr.bf16.mxu0 0
    %3754 = vmatpush1.bf16.msra.mxu0 %v3572
    %3755 = vmatprep.subr.bf16.mxu0 0
    %3756 = vmatpush1.bf16.msra.mxu0 %v3573
    %3757 = vmatprep.subr.bf16.mxu0 0
    %3758 = vmatpush1.bf16.msra.mxu0 %v3574
    %3759 = vmatprep.subr.bf16.mxu0 0
    %3760 = vmatpush1.bf16.msra.mxu0 %v3575
    %3761 = vmatprep.subr.bf16.mxu0 0
    %3762 = vmatpush1.bf16.msra.mxu0 %v3576
    %3763 = vmatprep.subr.bf16.mxu0 0
    %3764 = vmatpush1.bf16.msra.mxu0 %v3577
    %3765 = vmatprep.subr.bf16.mxu0 0
    %3766 = vmatpush1.bf16.msra.mxu0 %v3578
    %3767 = vmatprep.subr.bf16.mxu0 0
    %3768 = vmatpush1.bf16.msra.mxu0 %v3579
    %3769 = vmatprep.subr.bf16.mxu0 0
    %3770 = vmatpush1.bf16.msra.mxu0 %v3580
    %3771 = vmatprep.subr.bf16.mxu0 0
    %3772 = vmatpush1.bf16.msra.mxu0 %v3581
    %3773 = vmatprep.subr.bf16.mxu0 0
    %3774 = vmatpush1.bf16.msra.mxu0 %v3582
    %3775 = vmatprep.subr.bf16.mxu0 0
    %3776 = vmatpush1.bf16.msra.mxu0 %v3583
    %3777 = vmatprep.subr.bf16.mxu0 0
    %3778 = vmatpush1.bf16.msra.mxu0 %v3584
    %3779 = vmatprep.mubr.bf16.mxu0 %v3146
    %3780 = vmatmul.mubr.bf16.gmra.mrb[0].mxu0 %v3145
    %v3781 = vpop.f32.mrb[0].mxu0
    %v3782 = vadd.f32 %v3741, %v3781
    %v3783 = vpop.f32.mrb[0].mxu0
    %v3784 = vpop.f32.mrb[0].mxu0
    %v3785 = vadd.f32 %v3744, %v3784
    %v3786 = vpop.f32.mrb[0].mxu0
    %3787 = vdwg.mxu0
    %3788 = vmatprep.subr.bf16.mxu0 0
    %3789 = vmatpush1.bf16.msra.mxu0 %v3585
    %3790 = vmatprep.subr.bf16.mxu0 0
    %3791 = vmatpush1.bf16.msra.mxu0 %v3586
    %3792 = vmatprep.subr.bf16.mxu0 0
    %3793 = vmatpush1.bf16.msra.mxu0 %v3587
    %3794 = vmatprep.subr.bf16.mxu0 0
    %3795 = vmatpush1.bf16.msra.mxu0 %v3588
    %3796 = vmatprep.subr.bf16.mxu0 0
    %3797 = vmatpush1.bf16.msra.mxu0 %v3589
    %3798 = vmatprep.subr.bf16.mxu0 0
    %3799 = vmatpush1.bf16.msra.mxu0 %v3590
    %3800 = vmatprep.subr.bf16.mxu0 0
    %3801 = vmatpush1.bf16.msra.mxu0 %v3591
    %3802 = vmatprep.subr.bf16.mxu0 0
    %3803 = vmatpush1.bf16.msra.mxu0 %v3592
    %3804 = vmatprep.subr.bf16.mxu0 0
    %3805 = vmatpush1.bf16.msra.mxu0 %v3593
    %3806 = vmatprep.subr.bf16.mxu0 0
    %3807 = vmatpush1.bf16.msra.mxu0 %v3594
    %3808 = vmatprep.subr.bf16.mxu0 0
    %3809 = vmatpush1.bf16.msra.mxu0 %v3595
    %3810 = vmatprep.subr.bf16.mxu0 0
    %3811 = vmatpush1.bf16.msra.mxu0 %v3596
    %3812 = vmatprep.subr.bf16.mxu0 0
    %3813 = vmatpush1.bf16.msra.mxu0 %v3597
    %3814 = vmatprep.subr.bf16.mxu0 0
    %3815 = vmatpush1.bf16.msra.mxu0 %v3598
    %3816 = vmatprep.subr.bf16.mxu0 0
    %3817 = vmatpush1.bf16.msra.mxu0 %v3599
    %3818 = vmatprep.subr.bf16.mxu0 0
    %3819 = vmatpush1.bf16.msra.mxu0 %v3600
    %3820 = vmatprep.mubr.bf16.mxu0 %v3148
    %3821 = vmatmul.mubr.bf16.gmra.mrb[0].mxu0 %v3147
    %v3822 = vpop.f32.mrb[0].mxu0
    %v3823 = vadd.f32 %v3782, %v3822
    %v3824 = vpop.f32.mrb[0].mxu0
    %v3825 = vpop.f32.mrb[0].mxu0
    %v3826 = vadd.f32 %v3785, %v3825
    %v3827 = vpop.f32.mrb[0].mxu0
    %3828 = vdwg.mxu0
    %3829 = vadd.xlane.f32.xlu0 %v3823
    %v3830 = vpop.xlane.xlu0 %3829
    %3831 = vadd.xlane.f32.xlu0 %v3826
    %v3832 = vpop.xlane.xlu0 %3831
    %v3833 = vrcp.pop 128.0
    %v3834 = vmul.f32 %v3830, %v3833
    %v3835 = vmul.f32 %v3832, %v3833
    %v3836 = vsub.f32 %v3823, %v3834
    %v3837 = vsub.f32 %v3826, %v3835
    %v3838 = vmul.f32 %v3836, %v3836
    %v3839 = vmul.f32 %v3837, %v3837
    %3840 = vadd.xlane.f32.xlu0 %v3838
    %v3841 = vpop.xlane.xlu0 %3840
    %3842 = vadd.xlane.f32.xlu0 %v3839
    %v3843 = vpop.xlane.xlu0 %3842
    %v3844 = vmul.f32 %v3841, %v3833
    %v3845 = vmul.f32 %v3843, %v3833
    %v3846 = vadd.f32 %v3844, 1e-05
    %v3847 = vadd.f32 %v3845, 1e-05
    %v3848 = vrsqrt.pop %v3846
    %v3849 = vrsqrt.pop %v3847
    %v3850 = vmul.f32 %v3836, %v3848
    %v3851 = vmul.f32 %v3837, %v3849
    %v3852 = vlaneseq
    %v3853 = vshrl.u32 %v3852, 7
    %v3854 = vsub.s32 1, %v3853
    %v3855 = vrot.slane %v3140, %v3854
    %v3856 = vmul.f32 %v3850, %v3855
    %v3857 = vmul.f32 %v3851, %v3855
    %v3858 = vlaneseq
    %v3859 = vshrl.u32 %v3858, 7
    %v3860 = vsub.s32 2, %v3859
    %v3861 = vrot.slane %v3140, %v3860
    %v3862 = vadd.f32 %v3856, %v3861
    %v3863 = vadd.f32 %v3857, %v3861
    %v3864 = vld [vmem:[%s5] sm:$0xff]
    %v3865 = vld [vmem:[%s5 + $0x8] sm:$0xff]
    %v3866 = vld [vmem:[%s5 + $0x10] sm:$0xff]
    %v3867 = vld [vmem:[%s5 + $0x18] sm:$0xff]
    %v3868 = vld [vmem:[%s5 + $0x20] sm:$0xff]
    %v3869 = vld [vmem:[%s5 + $0x28] sm:$0xff]
    %v3870 = vld [vmem:[%s5 + $0x30] sm:$0xff]
    %v3871 = vld [vmem:[%s5 + $0x38] sm:$0xff]
    %v3872 = vld [vmem:[%s5 + $0x40] sm:$0xff]
    %v3873 = vld [vmem:[%s5 + $0x48] sm:$0xff]
    %v3874 = vld [vmem:[%s5 + $0x50] sm:$0xff]
    %v3875 = vld [vmem:[%s5 + $0x58] sm:$0xff]
    %v3876 = vld [vmem:[%s5 + $0x60] sm:$0xff]
    %v3877 = vld [vmem:[%s5 + $0x68] sm:$0xff]
    %v3878 = vld [vmem:[%s5 + $0x70] sm:$0xff]
    %v3879 = vld [vmem:[%s5 + $0x78] sm:$0xff]
    %v3880 = vld [vmem:[#allocation11] sm:$0x1]
    %v3882 = vlaneseq
    %v3883 = vshrl.u32 %v3882, 7
    %v3884 = vsub.s32 0, %v3883
    %v3885 = vrot.slane %v3880, %v3884
    %3887 = vmatprep.subr.mxu0 0.0
    %3888 = vmatpush1.msra.mxu0 %v3864
    %3889 = vmatprep.subr.mxu0 0.0
    %3890 = vmatpush1.msra.mxu0 %v3865
    %3891 = vmatprep.subr.mxu0 0.0
    %3892 = vmatpush1.msra.mxu0 %v3866
    %3893 = vmatprep.subr.mxu0 0.0
    %3894 = vmatpush1.msra.mxu0 %v3867
    %3895 = vmatprep.subr.mxu0 0.0
    %3896 = vmatpush1.msra.mxu0 %v3868
    %3897 = vmatprep.subr.mxu0 0.0
    %3898 = vmatpush1.msra.mxu0 %v3869
    %3899 = vmatprep.subr.mxu0 0.0
    %3900 = vmatpush1.msra.mxu0 %v3870
    %3901 = vmatprep.subr.mxu0 0.0
    %3902 = vmatpush1.msra.mxu0 %v3871
    %3903 = vmatprep.subr.mxu0 0.0
    %3904 = vmatpush1.msra.mxu0 %v3872
    %3905 = vmatprep.subr.mxu0 0.0
    %3906 = vmatpush1.msra.mxu0 %v3873
    %3907 = vmatprep.subr.mxu0 0.0
    %3908 = vmatpush1.msra.mxu0 %v3874
    %3909 = vmatprep.subr.mxu0 0.0
    %3910 = vmatpush1.msra.mxu0 %v3875
    %3911 = vmatprep.subr.mxu0 0.0
    %3912 = vmatpush1.msra.mxu0 %v3876
    %3913 = vmatprep.subr.mxu0 0.0
    %3914 = vmatpush1.msra.mxu0 %v3877
    %3915 = vmatprep.subr.mxu0 0.0
    %3916 = vmatpush1.msra.mxu0 %v3878
    %3917 = vmatprep.subr.mxu0 0.0
    %3918 = vmatpush1.msra.mxu0 %v3879
    %3919 = vmatprep.subr.mxu0 0.0
    %3920 = vmatpush1.msra.mxu0 0.0
    %3921 = vmatprep.subr.mxu0 0.0
    %3922 = vmatpush1.msra.mxu0 0.0
    %3923 = vmatprep.subr.mxu0 0.0
    %3924 = vmatpush1.msra.mxu0 0.0
    %3925 = vmatprep.subr.mxu0 0.0
    %3926 = vmatpush1.msra.mxu0 0.0
    %3927 = vmatprep.subr.mxu0 0.0
    %3928 = vmatpush1.msra.mxu0 0.0
    %3929 = vmatprep.subr.mxu0 0.0
    %3930 = vmatpush1.msra.mxu0 0.0
    %3931 = vmatprep.subr.mxu0 0.0
    %3932 = vmatpush1.msra.mxu0 0.0
    %3933 = vmatprep.subr.mxu0 0.0
    %3934 = vmatpush1.msra.mxu0 0.0
    %3935 = vmatprep.subr.mxu0 0.0
    %3936 = vmatpush1.msra.mxu0 0.0
    %3937 = vmatprep.subr.mxu0 0.0
    %3938 = vmatpush1.msra.mxu0 0.0
    %3939 = vmatprep.subr.mxu0 0.0
    %3940 = vmatpush1.msra.mxu0 0.0
    %3941 = vmatprep.subr.mxu0 0.0
    %3942 = vmatpush1.msra.mxu0 0.0
    %3943 = vmatprep.subr.mxu0 0.0
    %3944 = vmatpush1.msra.mxu0 0.0
    %3945 = vmatprep.subr.mxu0 0.0
    %3946 = vmatpush1.msra.mxu0 0.0
    %3947 = vmatprep.subr.mxu0 0.0
    %3948 = vmatpush1.msra.mxu0 0.0
    %3949 = vmatprep.subr.mxu0 0.0
    %3950 = vmatpush1.msra.mxu0 0.0
    %3951 = vmatprep.mubr.f32.mxu0 0.0
    %3952 = vmatmul.mubr.f32.gmra.mrb[0].mxu0 %v3862
    %v3953 = vpop.f32.mrb[0].mxu0
    %v3954 = vadd.f32 %v3885, %v3953
    %v3955 = vpop.f32.mrb[0].mxu0
    %3956 = vmatprep.mubr.f32.mxu0 0.0
    %3957 = vmatmul.mubr.f32.gmra.mrb[0].mxu0 %v3863
    %v3958 = vpop.f32.mrb[0].mxu0
    %v3959 = vadd.f32 %v3885, %v3958
    %v3960 = vpop.f32.mrb[0].mxu0
    %3961 = vdwg.mxu0
    %v3962 = vmax.f32 %v3954, 0.0
    %v3963 = vmax.f32 %v3959, 0.0
    %v3964 = vld [vmem:[#allocation13] sm:$0xff]
    %v3965 = vld [vmem:[#allocation13 + $0x8] sm:$0xff]
    %v3966 = vld [vmem:[#allocation13 + $0x10] sm:$0xff]
    %v3967 = vld [vmem:[#allocation13 + $0x18] sm:$0xff]
    %v3968 = vld [vmem:[#allocation13 + $0x20] sm:$0xff]
    %v3969 = vld [vmem:[#allocation13 + $0x28] sm:$0xff]
    %v3970 = vld [vmem:[#allocation13 + $0x30] sm:$0xff]
    %v3971 = vld [vmem:[#allocation13 + $0x38] sm:$0xff]
    %v3972 = vlaneseq
    %v3973 = vshrl.u32 %v3972, 7
    %v3974 = vsub.s32 3, %v3973
    %v3975 = vrot.slane %v3140, %v3974
    %vm3976 = vcmask 523264
    %v3978 = vsel %vm3976, %v3962, 0
    %v3981 = vsel %vm3976, %v3963, 0
    %3983 = vmatprep.subr.mxu0 0.0
    %3984 = vmatpush1.msra.mxu0 %v3964
    %3985 = vmatprep.subr.mxu0 0.0
    %3986 = vmatpush1.msra.mxu0 %v3965
    %3987 = vmatprep.subr.mxu0 0.0
    %3988 = vmatpush1.msra.mxu0 %v3966
    %3989 = vmatprep.subr.mxu0 0.0
    %3990 = vmatpush1.msra.mxu0 %v3967
    %3991 = vmatprep.subr.mxu0 0.0
    %3992 = vmatpush1.msra.mxu0 %v3968
    %3993 = vmatprep.subr.mxu0 0.0
    %3994 = vmatpush1.msra.mxu0 %v3969
    %3995 = vmatprep.subr.mxu0 0.0
    %3996 = vmatpush1.msra.mxu0 %v3970
    %3997 = vmatprep.subr.mxu0 0.0
    %3998 = vmatpush1.msra.mxu0 %v3971
    %3999 = vmatprep.subr.mxu0 0.0
    %4000 = vmatpush1.msra.mxu0 0.0
    %4001 = vmatprep.subr.mxu0 0.0
    %4002 = vmatpush1.msra.mxu0 0.0
    %4003 = vmatprep.subr.mxu0 0.0
    %4004 = vmatpush1.msra.mxu0 0.0
    %4005 = vmatprep.subr.mxu0 0.0
    %4006 = vmatpush1.msra.mxu0 0.0
    %4007 = vmatprep.subr.mxu0 0.0
    %4008 = vmatpush1.msra.mxu0 0.0
    %4009 = vmatprep.subr.mxu0 0.0
    %4010 = vmatpush1.msra.mxu0 0.0
    %4011 = vmatprep.subr.mxu0 0.0
    %4012 = vmatpush1.msra.mxu0 0.0
    %4013 = vmatprep.subr.mxu0 0.0
    %4014 = vmatpush1.msra.mxu0 0.0
    %4015 = vmatprep.subr.mxu0 0.0
    %4016 = vmatpush1.msra.mxu0 0.0
    %4017 = vmatprep.subr.mxu0 0.0
    %4018 = vmatpush1.msra.mxu0 0.0
    %4019 = vmatprep.subr.mxu0 0.0
    %4020 = vmatpush1.msra.mxu0 0.0
    %4021 = vmatprep.subr.mxu0 0.0
    %4022 = vmatpush1.msra.mxu0 0.0
    %4023 = vmatprep.subr.mxu0 0.0
    %4024 = vmatpush1.msra.mxu0 0.0
    %4025 = vmatprep.subr.mxu0 0.0
    %4026 = vmatpush1.msra.mxu0 0.0
    %4027 = vmatprep.subr.mxu0 0.0
    %4028 = vmatpush1.msra.mxu0 0.0
    %4029 = vmatprep.subr.mxu0 0.0
    %4030 = vmatpush1.msra.mxu0 0.0
    %4031 = vmatprep.subr.mxu0 0.0
    %4032 = vmatpush1.msra.mxu0 0.0
    %4033 = vmatprep.subr.mxu0 0.0
    %4034 = vmatpush1.msra.mxu0 0.0
    %4035 = vmatprep.subr.mxu0 0.0
    %4036 = vmatpush1.msra.mxu0 0.0
    %4037 = vmatprep.subr.mxu0 0.0
    %4038 = vmatpush1.msra.mxu0 0.0
    %4039 = vmatprep.subr.mxu0 0.0
    %4040 = vmatpush1.msra.mxu0 0.0
    %4041 = vmatprep.subr.mxu0 0.0
    %4042 = vmatpush1.msra.mxu0 0.0
    %4043 = vmatprep.subr.mxu0 0.0
    %4044 = vmatpush1.msra.mxu0 0.0
    %4045 = vmatprep.subr.mxu0 0.0
    %4046 = vmatpush1.msra.mxu0 0.0
    %4047 = vmatprep.mubr.f32.mxu0 0.0
    %4048 = vmatmul.mubr.f32.gmra.mrb[0].mxu0 %v3978
    %v4049 = vpop.f32.mrb[0].mxu0
    %v4050 = vadd.f32 %v3975, %v4049
    %v4051 = vpop.f32.mrb[0].mxu0
    %4052 = vmatprep.mubr.f32.mxu0 0.0
    %4053 = vmatmul.mubr.f32.gmra.mrb[0].mxu0 %v3981
    %v4054 = vpop.f32.mrb[0].mxu0
    %v4055 = vadd.f32 %v3975, %v4054
    %v4056 = vpop.f32.mrb[0].mxu0
    %4057 = vdwg.mxu0
    %v4058 = vpack.c.bf16 %v4055, %v4050
    %v4060 = vcombine.high %v4058, %v4058
    %v4062 = vunpack.c.l.s4 1966171168
    %v4063 = vunpack.c.0.s8 %v4062
    %v4064 = vlaneseq
    %v4065 = vshrl.u32 %v4064, 7
    %v4066 = vsub.s32 %v4063, %v4065
    %v4067 = vrot.slane %v4058, %v4066
    %v4069 = vunpack.c.l.s4 1966171168
    %v4070 = vunpack.c.0.s8 %v4069
    %v4071 = vlaneseq
    %v4072 = vshrl.u32 %v4071, 7
    %v4073 = vsub.s32 %v4070, %v4072
    %v4074 = vrot.slane %v4060, %v4073
    %v4075 = vcombine.high %v4067, %v4067
    %v4076 = vcombine.high %v4074, %v4074
    %v4078 = vunpack.c.l.s4 1966171168
    %v4079 = vunpack.c.0.s8 %v4078
    %v4080 = vlaneseq
    %v4081 = vshrl.u32 %v4080, 7
    %v4082 = vsub.s32 %v4079, %v4081
    %v4083 = vrot.slane %v4067, %v4082
    %v4085 = vunpack.c.l.s4 1966171168
    %v4086 = vunpack.c.0.s8 %v4085
    %v4087 = vlaneseq
    %v4088 = vshrl.u32 %v4087, 7
    %v4089 = vsub.s32 %v4086, %v4088
    %v4090 = vrot.slane %v4074, %v4089
    %v4092 = vunpack.c.l.s4 1966171168
    %v4093 = vunpack.c.0.s8 %v4092
    %v4094 = vlaneseq
    %v4095 = vshrl.u32 %v4094, 7
    %v4096 = vsub.s32 %v4093, %v4095
    %v4097 = vrot.slane %v4075, %v4096
    %v4099 = vunpack.c.l.s4 1966171168
    %v4100 = vunpack.c.0.s8 %v4099
    %v4101 = vlaneseq
    %v4102 = vshrl.u32 %v4101, 7
    %v4103 = vsub.s32 %v4100, %v4102
    %v4104 = vrot.slane %v4076, %v4103
    %v4105 = vcombine.high %v4083, %v4083
    %v4106 = vcombine.high %v4090, %v4090
    %v4107 = vcombine.high %v4097, %v4097
    %v4108 = vcombine.high %v4104, %v4104
    %4117 = vst [vmem:[#allocation14] sm:$0x1] %v4083
    %4118 = vst [vmem:[#allocation14 + $0x1] sm:$0x1] %v4097
    %4119 = vst [vmem:[#allocation14 + $0x2] sm:$0x1] %v4105
    %4120 = vst [vmem:[#allocation14 + $0x3] sm:$0x1] %v4107
    %4121 = vst [vmem:[#allocation14 + $0x4] sm:$0x1] %v4090
    %4122 = vst [vmem:[#allocation14 + $0x5] sm:$0x1] %v4104
    %4123 = vst [vmem:[#allocation14 + $0x6] sm:$0x1] %v4106
    %4124 = vst [vmem:[#allocation14 + $0x7] sm:$0x1] %v4108
    // Predicated region
    $region62: #{tpu_custom_call.1} parent=1 // pred_check
      _
    $region63: #{tpu_custom_call.1} parent=1 // pred_check_branch
      %4126 = sbr.rel (0) target = $region65
    $region64: #{tpu_custom_call.1} parent=1 // pred_region
      %s4128 = ssub.s32 128, 16
      %4129 = vsyncadd [#allocation4], %s4128
      %s4130 = sshll.u32 [#allocation14], 4
      %s4131 = int_to_ptr.vmem [resolvable:$true] %s4130
      %4136 = dma.vmem_to_hbm [thread:$0]  %s4131, 16, %s8, [#allocation4], 16, 16, 1
    $region65: #{tpu_custom_call.1} parent=1 // pred_fallthru
      _
    // Predicated region
    $region66: #{tpu_custom_call.1} parent=1 // pred_check
      _
    $region67: #{tpu_custom_call.1} parent=1 // pred_check_branch
      %4138 = sbr.rel (0) target = $region69
    $region68: #{tpu_custom_call.1} parent=1 // pred_region
      %4139 = dma.done [#allocation4], 128
    $region69: #{tpu_custom_call.1} parent=1 // pred_fallthru
      _
    %4140 = vsyncpa [#allocation3], 1
    %4141 = vsyncpa [#allocation6], 1
    %4142 = vsyncpa [#allocation9], 1
    %4143 = vsyncpa [#allocation12], 1
    %4144 = vsyncpa [#allocation4], 1

</llo_original>
